<compile_context>
chip_gen: v5e
topology: v5e:2x2
jax: 0.10.0
libtpu: 0.0.40
codegen_flags: <defaults>
</compile_context>

<pallas_src>
import jax
import jax.numpy as jnp
from jax import lax
from jax.experimental import pallas as pl
from jax.experimental.pallas import tpu as pltpu

LANE = 128  # TPU lane width; logits padded to a multiple of this for dense stores.


# ----------------------------- Pallas kernel -------------------------------
def _hf_head_kernel(ids_ref, mask_ref, emb_ref, w1_ref, b1_ref, w2_ref, b2_ref,
                    out_ref, cnt_acc, den_acc):
    """One (batch-tile, seq-tile) grid step.

    ids_ref  : (TB, TS)  int32   token ids (this sequence tile)
    mask_ref : (TB, TS)  f32     attention mask
    emb_ref  : (V,  H)   bf16    embedding table (fetched once, stays in VMEM)
    w1_ref   : (H,  H)   bf16    pooler weight
    b1_ref   : (1,  H)   f32     pooler bias
    w2_ref   : (H,  Lp)  bf16    classifier weight (zero-padded to Lp lanes)
    b2_ref   : (1,  Lp)  f32     classifier bias   (zero-padded)
    out_ref  : (TB, Lp)  f32     lane-dense logits slab
    cnt_acc  : (TB, V)   f32     accumulated mask-weighted token counts
    den_acc  : (TB, 1)   f32     accumulated mask sum (pooling denominator)
    """
    s = pl.program_id(1)
    vocab = cnt_acc.shape[-1]

    @pl.when(s == 0)
    def _init():
        cnt_acc[...] = jnp.zeros_like(cnt_acc)
        den_acc[...] = jnp.zeros_like(den_acc)

    ids = ids_ref[...]                                   # (TB, TS) int32
    mask = mask_ref[...]                                 # (TB, TS) f32

    # Fused gather: mask-weighted one-hot token counts.  The heavy O(B*S*H)
    # pooling work is deferred to the MXU contraction counts @ table below.
    vocab_iota = lax.broadcasted_iota(jnp.int32, (1, 1, vocab), 2)
    onehot = (ids[:, :, None] == vocab_iota).astype(jnp.float32)   # (TB, TS, V)
    cnt_acc[...] += jnp.sum(onehot * mask[:, :, None], axis=1)     # (TB, V)
    den_acc[...] += jnp.sum(mask, axis=1, keepdims=True)           # (TB, 1)

    @pl.when(s == pl.num_programs(1) - 1)
    def _finalize():
        # Gather + masked-sum pooling as a single bf16 MXU matmul (f32 acc).
        pooled_sum = jnp.dot(cnt_acc[...].astype(jnp.bfloat16), emb_ref[...],
                             preferred_element_type=jnp.float32)    # (TB, H)
        denom = jnp.maximum(den_acc[...], 1.0)
        pooled = pooled_sum / denom                                 # (TB, H) f32

        # pooler: tanh(pooled @ W1 + b1)   (bias added only at finalize)
        hidden = jnp.tanh(
            jnp.dot(pooled.astype(jnp.bfloat16), w1_ref[...],
                    preferred_element_type=jnp.float32) + b1_ref[...])

        # classifier head: hidden @ W2 + b2  (lane-dense Lp-wide store)
        logits = jnp.dot(hidden.astype(jnp.bfloat16), w2_ref[...],
                         preferred_element_type=jnp.float32) + b2_ref[...]
        out_ref[...] = logits.astype(out_ref.dtype)


def hf_head_pallas(input_ids, attention_mask, emb_table, w1, b1, w2, b2,
                   *, batch_tile=8, seq_tile=128):
    """Fused embed -> masked mean pool -> tanh dense -> classifier head."""
    B, S = input_ids.shape
    V, H = emb_table.shape
    L = w2.shape[1]
    Lp = max(LANE, ((L + LANE - 1) // LANE) * LANE)   # lane-dense output width

    assert B % batch_tile == 0, "batch must be divisible by batch_tile"
    assert S % seq_tile == 0, "sequence must be divisible by seq_tile"

    mask_f32 = attention_mask.astype(jnp.float32)
    emb_bf16 = emb_table.astype(jnp.bfloat16)
    w1_bf16 = w1.astype(jnp.bfloat16)
    b1_2d = b1.astype(jnp.float32).reshape(1, H)
    # Zero-pad the classifier to Lp lanes; padded lanes are sliced away below,
    # so no garbage can leak into the returned logits.
    w2_pad = jnp.zeros((H, Lp), jnp.bfloat16).at[:, :L].set(w2.astype(jnp.bfloat16))
    b2_pad = jnp.zeros((1, Lp), jnp.float32).at[:, :L].set(
        b2.astype(jnp.float32).reshape(1, L))

    grid = (B // batch_tile, S // seq_tile)   # (parallel batch, seq reduction)

    logits_padded = pl.pallas_call(
        _hf_head_kernel,
        out_shape=jax.ShapeDtypeStruct((B, Lp), jnp.float32),
        grid_spec=pltpu.PrefetchScalarGridSpec(
            num_scalar_prefetch=0,
            grid=grid,
            in_specs=[
                pl.BlockSpec((batch_tile, seq_tile), lambda b, s: (b, s)),  # ids
                pl.BlockSpec((batch_tile, seq_tile), lambda b, s: (b, s)),  # mask
                pl.BlockSpec((V, H), lambda b, s: (0, 0)),                  # emb table
                pl.BlockSpec((H, H), lambda b, s: (0, 0)),                  # W1
                pl.BlockSpec((1, H), lambda b, s: (0, 0)),                  # b1
                pl.BlockSpec((H, Lp), lambda b, s: (0, 0)),                 # W2 (padded)
                pl.BlockSpec((1, Lp), lambda b, s: (0, 0)),                 # b2 (padded)
            ],
            out_specs=pl.BlockSpec((batch_tile, Lp), lambda b, s: (b, 0)),
            scratch_shapes=[
                pltpu.VMEM((batch_tile, V), jnp.float32),   # token-count accumulator
                pltpu.VMEM((batch_tile, 1), jnp.float32),   # mask-sum accumulator
            ],
        ),
        compiler_params=pltpu.CompilerParams(
            dimension_semantics=("parallel", "arbitrary"),
        ),
    )(input_ids, mask_f32, emb_bf16, w1_bf16, b1_2d, w2_pad, b2_pad)

    return logits_padded[:, :L]


# ------------------------- Tiny HF-style model ------------------------------
class TinyHFSequenceClassifier:
    """Minimal HuggingFace-style model: __call__(input_ids=..., attention_mask=...)."""

    def __init__(self, key, vocab_size=256, hidden=128, num_labels=4):
        k_emb, k_w1, k_w2 = jax.random.split(key, 3)
        self.embedding = jax.random.normal(k_emb, (vocab_size, hidden), jnp.float32)
        self.w1 = jax.random.normal(k_w1, (hidden, hidden), jnp.float32) * 0.5
        self.b1 = jnp.zeros((hidden,), jnp.float32)
        self.w2 = jax.random.normal(k_w2, (hidden, num_labels), jnp.float32) * 0.5
        self.b2 = jnp.zeros((num_labels,), jnp.float32)

    def __call__(self, input_ids, attention_mask):
        # Entire forward (gather + pooling + head) runs inside the Pallas kernel.
        return hf_head_pallas(input_ids, attention_mask, self.embedding,
                              self.w1, self.b1, self.w2, self.b2)


class HuggingfaceWrapperModel:
    """Exact semantics of the PyTorch wrapper: forward(features) = model(**features)."""

    def __init__(self, model):
        self.model = model

    def __call__(self, features):
        return self.model(**features)


# --------------------------- pure-JAX reference ------------------------------
def _reference_forward(model, input_ids, attention_mask):
    """Same math as the kernel (identical bf16 casts) for a correctness check."""
    emb = jnp.take(model.embedding.astype(jnp.bfloat16), input_ids,
                   axis=0).astype(jnp.float32)                       # (B, S, H)
    mask = attention_mask.astype(jnp.float32)
    summed = jnp.sum(emb * mask[..., None], axis=1)
    denom = jnp.maximum(jnp.sum(mask, axis=1, keepdims=True), 1.0)
    pooled = summed / denom
    hidden = jnp.tanh(
        jnp.dot(pooled.astype(jnp.bfloat16), model.w1.astype(jnp.bfloat16),
                preferred_element_type=jnp.float32) + model.b1[None, :])
    return jnp.dot(hidden.astype(jnp.bfloat16), model.w2.astype(jnp.bfloat16),
                   preferred_element_type=jnp.float32) + model.b2[None, :]


# --------------------------------- main -------------------------------------
if __name__ == "__main__":
    key = jax.random.PRNGKey(0)
    k_model, k_ids, k_len = jax.random.split(key, 3)

    B, S, VOCAB, HIDDEN, LABELS = 16, 512, 256, 128, 4

    model = TinyHFSequenceClassifier(k_model, vocab_size=VOCAB,
                                     hidden=HIDDEN, num_labels=LABELS)
    wrapped = HuggingfaceWrapperModel(model)

    input_ids = jax.random.randint(k_ids, (B, S), 0, VOCAB, dtype=jnp.int32)
    lengths = jax.random.randint(k_len, (B,), S // 4, S + 1, dtype=jnp.int32)
    attention_mask = (jnp.arange(S)[None, :] < lengths[:, None]).astype(jnp.int32)

    features = {"input_ids": input_ids, "attention_mask": attention_mask}
    logits = wrapped(features)
    logits = jax.block_until_ready(logits)

    assert logits.shape == (B, LABELS)
    assert logits.dtype == jnp.float32

    ref = jax.block_until_ready(_reference_forward(model, input_ids, attention_mask))
    assert jnp.allclose(logits, ref, atol=5e-3, rtol=5e-3), (
        f"max abs err {jnp.max(jnp.abs(logits - ref))}")

    print("KERNEL_OK")
</pallas_src>

<mosaic_0001>
module attributes {stable_mosaic.version = 11 : i64} {
  func.func @_hf_head_kernel(%arg0: i32, %arg1: i32, %arg2: memref<8x128xi32, #tpu.memory_space<vmem>>, %arg3: memref<8x128xf32, #tpu.memory_space<vmem>>, %arg4: memref<256x128xbf16, #tpu.memory_space<vmem>>, %arg5: memref<128x128xbf16, #tpu.memory_space<vmem>>, %arg6: memref<1x128xf32, #tpu.memory_space<vmem>>, %arg7: memref<128x128xbf16, #tpu.memory_space<vmem>>, %arg8: memref<1x128xf32, #tpu.memory_space<vmem>>, %arg9: memref<8x128xf32, #tpu.memory_space<vmem>>, %arg10: memref<8x256xf32, #tpu.memory_space<vmem>>, %arg11: memref<8x1xf32, #tpu.memory_space<vmem>>) attributes {dimension_semantics = [#tpu.dimension_semantics<parallel>, #tpu.dimension_semantics<arbitrary>], iteration_bounds = array<i64: 2, 4>, scalar_prefetch = 0 : i64, scratch_operands = 2 : i64, tpu.core_type = #tpu.core_type<tc>, window_params = [{transform_indices = @transform_0, window_bounds = array<i64: 8, 128>}, {transform_indices = @transform_1, window_bounds = array<i64: 8, 128>}, {pipeline_mode = #tpu.pipeline_mode<synchronous>, transform_indices = @transform_2, window_bounds = array<i64: 256, 128>}, {pipeline_mode = #tpu.pipeline_mode<synchronous>, transform_indices = @transform_3, window_bounds = array<i64: 128, 128>}, {pipeline_mode = #tpu.pipeline_mode<synchronous>, transform_indices = @transform_4, window_bounds = array<i64: 1, 128>}, {pipeline_mode = #tpu.pipeline_mode<synchronous>, transform_indices = @transform_5, window_bounds = array<i64: 128, 128>}, {pipeline_mode = #tpu.pipeline_mode<synchronous>, transform_indices = @transform_6, window_bounds = array<i64: 1, 128>}, {transform_indices = @transform_7, window_bounds = array<i64: 8, 128>}]} {
    %c0_i32 = arith.constant 0 : i32
    %0 = arith.cmpi eq, %arg1, %c0_i32 : i32
    %1 = arith.extui %0 : i1 to i32
    %c0_i32_0 = arith.constant 0 : i32
    %2 = arith.cmpi ne, %1, %c0_i32_0 : i32
    scf.if %2 {
      %cst_14 = arith.constant 0.000000e+00 : f32
      %27 = vector.broadcast %cst_14 : f32 to vector<8x256xf32>
      %c0_15 = arith.constant 0 : index
      %c0_16 = arith.constant 0 : index
      %28 = vector.load %arg10[%c0_15, %c0_16] : memref<8x256xf32, #tpu.memory_space<vmem>>, vector<8x256xf32>
      tpu.vector_store %arg10[%c0_15, %c0_16], %27 {strides = array<i32>} : memref<8x256xf32, #tpu.memory_space<vmem>>, vector<8x256xf32>,
      %cst_17 = arith.constant 0.000000e+00 : f32
      %29 = vector.broadcast %cst_17 : f32 to vector<8x1xf32>
      %c0_18 = arith.constant 0 : index
      %c0_19 = arith.constant 0 : index
      %30 = vector.load %arg11[%c0_18, %c0_19] : memref<8x1xf32, #tpu.memory_space<vmem>>, vector<8x1xf32>
      tpu.vector_store %arg11[%c0_18, %c0_19], %29 {strides = array<i32>} : memref<8x1xf32, #tpu.memory_space<vmem>>, vector<8x1xf32>,
    } else {
    }
    %c0 = arith.constant 0 : index
    %c0_1 = arith.constant 0 : index
    %3 = vector.load %arg2[%c0, %c0_1] : memref<8x128xi32, #tpu.memory_space<vmem>>, vector<8x128xi32>
    %c0_2 = arith.constant 0 : index
    %c0_3 = arith.constant 0 : index
    %4 = vector.load %arg3[%c0_2, %c0_3] : memref<8x128xf32, #tpu.memory_space<vmem>>, vector<8x128xf32>
    %5 = tpu.iota {dimensions = array<i32: 2>} : vector<1x1x256xi32>
    %6 = vector.shape_cast %3 : vector<8x128xi32> to vector<8x128x1xi32>
    %7 = vector.broadcast %6 : vector<8x128x1xi32> to vector<8x128x256xi32>
    %8 = vector.broadcast %5 : vector<1x1x256xi32> to vector<8x128x256xi32>
    %9 = arith.cmpi eq, %7, %8 : vector<8x128x256xi32>
    %10 = arith.extui %9 : vector<8x128x256xi1> to vector<8x128x256xi32>
    %11 = arith.sitofp %10 : vector<8x128x256xi32> to vector<8x128x256xf32>
    %c0_4 = arith.constant 0 : index
    %c0_5 = arith.constant 0 : index
    %12 = vector.load %arg10[%c0_4, %c0_5] : memref<8x256xf32, #tpu.memory_space<vmem>>, vector<8x256xf32>
    %13 = vector.shape_cast %4 : vector<8x128xf32> to vector<8x128x1xf32>
    %14 = vector.broadcast %13 : vector<8x128x1xf32> to vector<8x128x256xf32>
    %15 = arith.mulf %11, %14 : vector<8x128x256xf32>
    %cst = arith.constant dense<0.000000e+00> : vector<8x256xf32>
    %16 = vector.multi_reduction <add>, %15, %cst [1] : vector<8x128x256xf32> to vector<8x256xf32>
    %17 = arith.addf %12, %16 : vector<8x256xf32>
    %c0_6 = arith.constant 0 : index
    %c0_7 = arith.constant 0 : index
    %18 = vector.load %arg10[%c0_6, %c0_7] : memref<8x256xf32, #tpu.memory_space<vmem>>, vector<8x256xf32>
    tpu.vector_store %arg10[%c0_6, %c0_7], %17 {strides = array<i32>} : memref<8x256xf32, #tpu.memory_space<vmem>>, vector<8x256xf32>,
    %c0_8 = arith.constant 0 : index
    %c0_9 = arith.constant 0 : index
    %19 = vector.load %arg11[%c0_8, %c0_9] : memref<8x1xf32, #tpu.memory_space<vmem>>, vector<8x1xf32>
    %cst_10 = arith.constant dense<0.000000e+00> : vector<8xf32>
    %20 = vector.multi_reduction <add>, %4, %cst_10 [1] : vector<8x128xf32> to vector<8xf32>
    %21 = vector.shape_cast %20 : vector<8xf32> to vector<8x1xf32>
    %22 = arith.addf %19, %21 : vector<8x1xf32>
    %c0_11 = arith.constant 0 : index
    %c0_12 = arith.constant 0 : index
    %23 = vector.load %arg11[%c0_11, %c0_12] : memref<8x1xf32, #tpu.memory_space<vmem>>, vector<8x1xf32>
    tpu.vector_store %arg11[%c0_11, %c0_12], %22 {strides = array<i32>} : memref<8x1xf32, #tpu.memory_space<vmem>>, vector<8x1xf32>,
    %c3_i32 = arith.constant 3 : i32
    %24 = arith.cmpi eq, %arg1, %c3_i32 : i32
    %25 = arith.extui %24 : i1 to i32
    %c0_i32_13 = arith.constant 0 : i32
    %26 = arith.cmpi ne, %25, %c0_i32_13 : i32
    scf.if %26 {
      %c0_14 = arith.constant 0 : index
      %c0_15 = arith.constant 0 : index
      %27 = vector.load %arg10[%c0_14, %c0_15] : memref<8x256xf32, #tpu.memory_space<vmem>>, vector<8x256xf32>
      %28 = arith.truncf %27 : vector<8x256xf32> to vector<8x256xbf16>
      %c0_16 = arith.constant 0 : index
      %c0_17 = arith.constant 0 : index
      %29 = vector.load %arg4[%c0_16, %c0_17] : memref<256x128xbf16, #tpu.memory_space<vmem>>, vector<256x128xbf16>
      %cst_18 = arith.constant dense<0.000000e+00> : vector<8x128xf32>
      %30 = tpu.matmul %28, %29, %cst_18 {dimension_numbers = #tpu.dot_dimension_numbers<[1], [0], [0], [1], [0, 0, 1, 1], [], []>} : vector<8x256xbf16>, vector<256x128xbf16>, vector<8x128xf32> -> vector<8x128xf32>
      %c0_19 = arith.constant 0 : index
      %c0_20 = arith.constant 0 : index
      %31 = vector.load %arg11[%c0_19, %c0_20] : memref<8x1xf32, #tpu.memory_space<vmem>>, vector<8x1xf32>
      %cst_21 = arith.constant 1.000000e+00 : f32
      %32 = vector.broadcast %cst_21 : f32 to vector<8x1xf32>
      %33 = arith.maximumf %31, %32 : vector<8x1xf32>
      %34 = vector.broadcast %33 : vector<8x1xf32> to vector<8x128xf32>
      %35 = arith.divf %30, %34 : vector<8x128xf32>
      %36 = arith.truncf %35 : vector<8x128xf32> to vector<8x128xbf16>
      %c0_22 = arith.constant 0 : index
      %c0_23 = arith.constant 0 : index
      %37 = vector.load %arg5[%c0_22, %c0_23] : memref<128x128xbf16, #tpu.memory_space<vmem>>, vector<128x128xbf16>
      %cst_24 = arith.constant dense<0.000000e+00> : vector<8x128xf32>
      %38 = tpu.matmul %36, %37, %cst_24 {dimension_numbers = #tpu.dot_dimension_numbers<[1], [0], [0], [1], [0, 0, 1, 1], [], []>} : vector<8x128xbf16>, vector<128x128xbf16>, vector<8x128xf32> -> vector<8x128xf32>
      %c0_25 = arith.constant 0 : index
      %c0_26 = arith.constant 0 : index
      %39 = vector.load %arg6[%c0_25, %c0_26] : memref<1x128xf32, #tpu.memory_space<vmem>>, vector<1x128xf32>
      %40 = vector.broadcast %39 : vector<1x128xf32> to vector<8x128xf32>
      %41 = arith.addf %38, %40 : vector<8x128xf32>
      %42 = math.tanh %41 : vector<8x128xf32>
      %43 = arith.truncf %42 : vector<8x128xf32> to vector<8x128xbf16>
      %c0_27 = arith.constant 0 : index
      %c0_28 = arith.constant 0 : index
      %44 = vector.load %arg7[%c0_27, %c0_28] : memref<128x128xbf16, #tpu.memory_space<vmem>>, vector<128x128xbf16>
      %cst_29 = arith.constant dense<0.000000e+00> : vector<8x128xf32>
      %45 = tpu.matmul %43, %44, %cst_29 {dimension_numbers = #tpu.dot_dimension_numbers<[1], [0], [0], [1], [0, 0, 1, 1], [], []>} : vector<8x128xbf16>, vector<128x128xbf16>, vector<8x128xf32> -> vector<8x128xf32>
      %c0_30 = arith.constant 0 : index
      %c0_31 = arith.constant 0 : index
      %46 = vector.load %arg8[%c0_30, %c0_31] : memref<1x128xf32, #tpu.memory_space<vmem>>, vector<1x128xf32>
      %47 = vector.broadcast %46 : vector<1x128xf32> to vector<8x128xf32>
      %48 = arith.addf %45, %47 : vector<8x128xf32>
      %c0_32 = arith.constant 0 : index
      %c0_33 = arith.constant 0 : index
      %49 = vector.load %arg9[%c0_32, %c0_33] : memref<8x128xf32, #tpu.memory_space<vmem>>, vector<8x128xf32>
      tpu.vector_store %arg9[%c0_32, %c0_33], %48 {strides = array<i32>} : memref<8x128xf32, #tpu.memory_space<vmem>>, vector<8x128xf32>,
    } else {
    }
    return
  }
  func.func @transform_0(%arg0: i32, %arg1: i32) -> (i32, i32) {
    %c0_i32 = arith.constant 0 : i32
    return %arg0, %arg1 : i32, i32
  }
  func.func @transform_1(%arg0: i32, %arg1: i32) -> (i32, i32) {
    %c0_i32 = arith.constant 0 : i32
    return %arg0, %arg1 : i32, i32
  }
  func.func @transform_2(%arg0: i32, %arg1: i32) -> (i32, i32) {
    %c0_i32 = arith.constant 0 : i32
    %c0_i32_0 = arith.constant 0 : i32
    %c0_i32_1 = arith.constant 0 : i32
    return %c0_i32, %c0_i32_0 : i32, i32
  }
  func.func @transform_3(%arg0: i32, %arg1: i32) -> (i32, i32) {
    %c0_i32 = arith.constant 0 : i32
    %c0_i32_0 = arith.constant 0 : i32
    %c0_i32_1 = arith.constant 0 : i32
    return %c0_i32, %c0_i32_0 : i32, i32
  }
  func.func @transform_4(%arg0: i32, %arg1: i32) -> (i32, i32) {
    %c0_i32 = arith.constant 0 : i32
    %c0_i32_0 = arith.constant 0 : i32
    %c0_i32_1 = arith.constant 0 : i32
    return %c0_i32, %c0_i32_0 : i32, i32
  }
  func.func @transform_5(%arg0: i32, %arg1: i32) -> (i32, i32) {
    %c0_i32 = arith.constant 0 : i32
    %c0_i32_0 = arith.constant 0 : i32
    %c0_i32_1 = arith.constant 0 : i32
    return %c0_i32, %c0_i32_0 : i32, i32
  }
  func.func @transform_6(%arg0: i32, %arg1: i32) -> (i32, i32) {
    %c0_i32 = arith.constant 0 : i32
    %c0_i32_0 = arith.constant 0 : i32
    %c0_i32_1 = arith.constant 0 : i32
    return %c0_i32, %c0_i32_0 : i32, i32
  }
  func.func @transform_7(%arg0: i32, %arg1: i32) -> (i32, i32) {
    %c0_i32 = arith.constant 0 : i32
    %c0_i32_0 = arith.constant 0 : i32
    return %arg0, %c0_i32 : i32, i32
  }
}

</mosaic_0001>

<llo_original>
// kernel: tpu_custom_call.1
$region0: #{tpu_custom_call.1}
  #allocation0 [shape = 'u32[]', space=smem, size = 0x4, offset = 0x4, fixed_abs, tag = 'smem constant byte address 0x4 - core index']
  #allocation1 [shape = 'u32[72,128]{1,0:T(1,128)}', space=vmem, size = 0x9000, scoped, tag = 'internal scratch']
  #allocation2 [shape = 'f32[8,256]{1,0:T(8,128)}', space=vmem, size = 0x2000, scoped, tag = 'scratch operand']
  #allocation3 [shape = 'f32[8,1]{1,0:T(8,128)}', space=vmem, size = 0x1000, scoped, tag = 'scratch operand']
  %s0 = inlined_call_operand.hbm [shape: s32[16,512], index: 0, kind: input, shape index: {}]
  %s1 = inlined_call_operand.hbm [shape: f32[16,512], index: 1, kind: input, shape index: {}]
  %s2 = inlined_call_operand.hbm [shape: bf16[256,128], index: 2, kind: input, shape index: {}]
  %s3 = inlined_call_operand.hbm [shape: bf16[128,128], index: 3, kind: input, shape index: {}]
  %s4 = inlined_call_operand.vmem [shape: f32[1,128], index: 4, kind: input, shape index: {}]
  %s5 = inlined_call_operand.hbm [shape: bf16[128,128], index: 5, kind: input, shape index: {}]
  %s6 = inlined_call_operand.vmem [shape: f32[1,128], index: 6, kind: input, shape index: {}]
  %s7 = inlined_call_operand.hbm [shape: f32[16,128], index: 7, kind: output, shape index: {}]
  %s8 = sld [smem:[#allocation0]]
  $region89: #{tpu_custom_call.1} parent=0
    _
  %s10 = ssub.s32 1, %s8
  %s11 = scalar_select 0, %s10, %s8
  $region1: #{tpu_custom_call.1} parent=0
    #allocation4 [shape = 'u8[8192]{0}', space=vmem, size = 0x2000, scoped, tag = 'input window, operand 0']
    #allocation5 [shape = 's32[2]{0}', space=sflag, size = 0x8, scoped, tag = 'scoped memory for tpu_custom_call.1']
    #allocation6 [shape = 's32[2]{0}', space=sflag, size = 0x8, scoped, tag = 'scoped memory for tpu_custom_call.1']
    #allocation7 [shape = 'u8[8192]{0}', space=vmem, size = 0x2000, scoped, tag = 'input window, operand 1']
    #allocation8 [shape = 's32[2]{0}', space=sflag, size = 0x8, scoped, tag = 'scoped memory for tpu_custom_call.1']
    #allocation9 [shape = 'u8[65536]{0}', space=vmem, size = 0x10000, scoped, tag = 'input window, operand 2, single buffered']
    #allocation10 [shape = 'u8[32768]{0}', space=vmem, size = 0x8000, scoped, tag = 'input window, operand 3, single buffered']
    #allocation11 [shape = 's32[1]{0}', space=sflag, size = 0x4, scoped, tag = 'scoped memory for tpu_custom_call.1']
    #allocation12 [shape = 'u8[32768]{0}', space=vmem, size = 0x8000, scoped, tag = 'input window, operand 5, single buffered']
    #allocation13 [shape = 'u8[8192]{0}', space=vmem, size = 0x2000, scoped, tag = 'output window, operand 0']
    %12 = vsyncpa [#allocation5], 0
    %s13 = scalar_lea.sflag [#allocation5], 1
    %14 = vsyncpa %s13, 0
    %15 = vsyncpa [#allocation8], 0
    %s16 = scalar_lea.sflag [#allocation8], 1
    %17 = vsyncpa %s16, 0
    %18 = vsyncpa [#allocation11], 0
    %19 = vsyncpa [#allocation6], 0
    %s20 = scalar_lea.sflag [#allocation6], 1
    %21 = vsyncpa %s20, 0
    loop: start=0, step=1, limit=10
    $region2: #{tpu_custom_call.1} parent=1 // loop_pre_header
      _
    $region3: #{tpu_custom_call.1} parent=1 // loop_header
      %s23 = sphi 0, %s27
      %p24 = scmp.ge.s32.totalorder %s23, 10
      %s30 = sphi 0, %s42
      %s31 = sphi 0, %s38
      %s32 = sphi 0, %s30
      %s33 = sphi 0, %s31
      %s34 = sphi 0, %s32
      %s35 = sphi 0, %s33
      %s47 = sphi 0, %s49
      %s50 = sphi 0, %s47
      %s51 = sphi 0, %s50
      %s67 = sphi 0, %s51
      %s75 = sphi 0, %s77
      %s78 = sphi 0, %s75
      %s79 = sphi 0, %s78
      %s95 = sphi 0, %s79
      %s99 = sphi 0, %s99
      %s101 = sphi 0, %s99
      %s102 = sphi 0, %s101
      %s116 = sphi 0, %s102
      %s120 = sphi 0, %s120
      %s122 = sphi 0, %s120
      %s123 = sphi 0, %s122
      %s137 = sphi 0, %s123
      %s141 = sphi 0, %s141
      %s143 = sphi 0, %s141
      %s144 = sphi 0, %s143
      %s158 = sphi 0, %s144
      %s162 = sphi 0, %s162
      %s164 = sphi 0, %s162
      %s165 = sphi 0, %s164
      %s179 = sphi 0, %s165
      %s183 = sphi 0, %s183
      %s185 = sphi 0, %s183
      %s186 = sphi 0, %s185
      %s200 = sphi 0, %s186
      %s206 = sphi 0, %s208
      %s209 = sphi 0, %s206
      %s210 = sphi 0, %s209
      %s226 = sphi 0, %s210
    $region4: #{tpu_custom_call.1} parent=1 // loop_header_branch
      %26 = sbr.rel (%p24) target = $region8
    $region5: #{tpu_custom_call.1} parent=1 // loop_body
      %s28 = ssub.s32 %s23, 1
      %s29 = ssub.s32 %s23, 2
      %s36 = sadd.s32 1, %s31
      %p37 = scmp.ge.s32.totalorder %s36, 4
      %s38 = scalar_select %p37, 0, %s36
      %s39 = sadd.s32 1, %s30
      %s40 = scalar_select %p37, %s39, %s30
      %p41 = scmp.ge.s32.totalorder %s40, 2
      %s42 = scalar_select %p41, 0, %s40
      %s43 = ssub.s32 %s30, %s42
      %s44 = ssub.s32 %s31, %s38
      %s45 = sor.u32 %s43, %s44
      %p46 = scmp.eq.s32.totalorder %s45, 0
      %s48 = sadd.s32 %s47, 1
      %s49 = scalar_select %p46, %s47, %s48
      %p52 = pneg %p46
      %p53 = scmp.eq.s32.totalorder %s23, 7
      %p54 = por %p52, %p53
      %p55 = scmp.ne.s32.totalorder %s47, %s50
      %p56 = scmp.eq.s32.totalorder %s23, 0
      %p57 = por %p55, %p56
      %p58 = scmp.ne.s32.totalorder %s47, %s50
      %p59 = scmp.eq.s32.totalorder %s28, 7
      %p60 = por %p58, %p59
      %p61 = scmp.ne.s32.totalorder %s50, %s51
      %p62 = scmp.eq.s32.totalorder %s28, 0
      %p63 = por %p61, %p62
      %p64 = scmp.ne.s32.totalorder %s50, %s51
      %p65 = scmp.eq.s32.totalorder %s29, 7
      %p66 = por %p64, %p65
      %p68 = scmp.ne.s32.totalorder %s51, %s67
      %p69 = scmp.eq.s32.totalorder %s29, 0
      %p70 = por %p68, %p69
      %s71 = ssub.s32 %s30, %s42
      %s72 = ssub.s32 %s31, %s38
      %s73 = sor.u32 %s71, %s72
      %p74 = scmp.eq.s32.totalorder %s73, 0
      %s76 = sadd.s32 %s75, 1
      %s77 = scalar_select %p74, %s75, %s76
      %p80 = pneg %p74
      %p81 = scmp.eq.s32.totalorder %s23, 7
      %p82 = por %p80, %p81
      %p83 = scmp.ne.s32.totalorder %s75, %s78
      %p84 = scmp.eq.s32.totalorder %s23, 0
      %p85 = por %p83, %p84
      %p86 = scmp.ne.s32.totalorder %s75, %s78
      %p87 = scmp.eq.s32.totalorder %s28, 7
      %p88 = por %p86, %p87
      %p89 = scmp.ne.s32.totalorder %s78, %s79
      %p90 = scmp.eq.s32.totalorder %s28, 0
      %p91 = por %p89, %p90
      %p92 = scmp.ne.s32.totalorder %s78, %s79
      %p93 = scmp.eq.s32.totalorder %s29, 7
      %p94 = por %p92, %p93
      %p96 = scmp.ne.s32.totalorder %s79, %s95
      %p97 = scmp.eq.s32.totalorder %s29, 0
      %p98 = por %p96, %p97
      %s100 = sadd.s32 %s99, 1
      %p103 = scmp.eq.s32.totalorder %s23, 7
      %p104 = scmp.ne.s32.totalorder %s99, %s101
      %p105 = scmp.eq.s32.totalorder %s23, 0
      %p106 = por %p104, %p105
      %p107 = scmp.ne.s32.totalorder %s99, %s101
      %p108 = scmp.eq.s32.totalorder %s28, 7
      %p109 = por %p107, %p108
      %p110 = scmp.ne.s32.totalorder %s101, %s102
      %p111 = scmp.eq.s32.totalorder %s28, 0
      %p112 = por %p110, %p111
      %p113 = scmp.ne.s32.totalorder %s101, %s102
      %p114 = scmp.eq.s32.totalorder %s29, 7
      %p115 = por %p113, %p114
      %p117 = scmp.ne.s32.totalorder %s102, %s116
      %p118 = scmp.eq.s32.totalorder %s29, 0
      %p119 = por %p117, %p118
      %s121 = sadd.s32 %s120, 1
      %p124 = scmp.eq.s32.totalorder %s23, 7
      %p125 = scmp.ne.s32.totalorder %s120, %s122
      %p126 = scmp.eq.s32.totalorder %s23, 0
      %p127 = por %p125, %p126
      %p128 = scmp.ne.s32.totalorder %s120, %s122
      %p129 = scmp.eq.s32.totalorder %s28, 7
      %p130 = por %p128, %p129
      %p131 = scmp.ne.s32.totalorder %s122, %s123
      %p132 = scmp.eq.s32.totalorder %s28, 0
      %p133 = por %p131, %p132
      %p134 = scmp.ne.s32.totalorder %s122, %s123
      %p135 = scmp.eq.s32.totalorder %s29, 7
      %p136 = por %p134, %p135
      %p138 = scmp.ne.s32.totalorder %s123, %s137
      %p139 = scmp.eq.s32.totalorder %s29, 0
      %p140 = por %p138, %p139
      %s142 = sadd.s32 %s141, 1
      %p145 = scmp.eq.s32.totalorder %s23, 7
      %p146 = scmp.ne.s32.totalorder %s141, %s143
      %p147 = scmp.eq.s32.totalorder %s23, 0
      %p148 = por %p146, %p147
      %p149 = scmp.ne.s32.totalorder %s141, %s143
      %p150 = scmp.eq.s32.totalorder %s28, 7
      %p151 = por %p149, %p150
      %p152 = scmp.ne.s32.totalorder %s143, %s144
      %p153 = scmp.eq.s32.totalorder %s28, 0
      %p154 = por %p152, %p153
      %p155 = scmp.ne.s32.totalorder %s143, %s144
      %p156 = scmp.eq.s32.totalorder %s29, 7
      %p157 = por %p155, %p156
      %p159 = scmp.ne.s32.totalorder %s144, %s158
      %p160 = scmp.eq.s32.totalorder %s29, 0
      %p161 = por %p159, %p160
      %s163 = sadd.s32 %s162, 1
      %p166 = scmp.eq.s32.totalorder %s23, 7
      %p167 = scmp.ne.s32.totalorder %s162, %s164
      %p168 = scmp.eq.s32.totalorder %s23, 0
      %p169 = por %p167, %p168
      %p170 = scmp.ne.s32.totalorder %s162, %s164
      %p171 = scmp.eq.s32.totalorder %s28, 7
      %p172 = por %p170, %p171
      %p173 = scmp.ne.s32.totalorder %s164, %s165
      %p174 = scmp.eq.s32.totalorder %s28, 0
      %p175 = por %p173, %p174
      %p176 = scmp.ne.s32.totalorder %s164, %s165
      %p177 = scmp.eq.s32.totalorder %s29, 7
      %p178 = por %p176, %p177
      %p180 = scmp.ne.s32.totalorder %s165, %s179
      %p181 = scmp.eq.s32.totalorder %s29, 0
      %p182 = por %p180, %p181
      %s184 = sadd.s32 %s183, 1
      %p187 = scmp.eq.s32.totalorder %s23, 7
      %p188 = scmp.ne.s32.totalorder %s183, %s185
      %p189 = scmp.eq.s32.totalorder %s23, 0
      %p190 = por %p188, %p189
      %p191 = scmp.ne.s32.totalorder %s183, %s185
      %p192 = scmp.eq.s32.totalorder %s28, 7
      %p193 = por %p191, %p192
      %p194 = scmp.ne.s32.totalorder %s185, %s186
      %p195 = scmp.eq.s32.totalorder %s28, 0
      %p196 = por %p194, %p195
      %p197 = scmp.ne.s32.totalorder %s185, %s186
      %p198 = scmp.eq.s32.totalorder %s29, 7
      %p199 = por %p197, %p198
      %p201 = scmp.ne.s32.totalorder %s186, %s200
      %p202 = scmp.eq.s32.totalorder %s29, 0
      %p203 = por %p201, %p202
      %s204 = ssub.s32 %s30, %s42
      %p205 = scmp.eq.s32.totalorder %s204, 0
      %s207 = sadd.s32 %s206, 1
      %s208 = scalar_select %p205, %s206, %s207
      %p211 = pneg %p205
      %p212 = scmp.eq.s32.totalorder %s23, 7
      %p213 = por %p211, %p212
      %p214 = scmp.ne.s32.totalorder %s206, %s209
      %p215 = scmp.eq.s32.totalorder %s23, 0
      %p216 = por %p214, %p215
      %p217 = scmp.ne.s32.totalorder %s206, %s209
      %p218 = scmp.eq.s32.totalorder %s28, 7
      %p219 = por %p217, %p218
      %p220 = scmp.ne.s32.totalorder %s209, %s210
      %p221 = scmp.eq.s32.totalorder %s28, 0
      %p222 = por %p220, %p221
      %p223 = scmp.ne.s32.totalorder %s209, %s210
      %p224 = scmp.eq.s32.totalorder %s29, 7
      %p225 = por %p223, %p224
      %p227 = scmp.ne.s32.totalorder %s210, %s226
      %p228 = scmp.eq.s32.totalorder %s29, 0
      %p229 = por %p227, %p228
      %p230 = scmp.le.s32.totalorder 1, %s23
      %p231 = scmp.lt.s32.totalorder %s23, 9
      %p232 = pnand %p230, %p231
      %p233 = pneg %p232
      // Predicated region
      $region9: #{tpu_custom_call.1} parent=5 // pred_check
        _
      $region10: #{tpu_custom_call.1} parent=5 // pred_check_branch
        %235 = sbr.rel (%p232) target = $region12
      $region11: #{tpu_custom_call.1} parent=5 // pred_region
        %s236 = ssub.s32 %s23, 1
        // Predicated region
        $region13: #{tpu_custom_call.1} parent=11 // pred_check
          %p237 = pneg %p112
        $region14: #{tpu_custom_call.1} parent=11 // pred_check_branch
          %239 = sbr.rel (%p237) target = $region16
        $region15: #{tpu_custom_call.1} parent=11 // pred_region
          %241 = vsyncadd [#allocation8], 0
          %s242 = sshll.u32 %s2, 4
          %s243 = int_to_ptr.hbm [resolvable:$true] %s242
          %s244 = sshll.u32 [#allocation9], 4
          %s245 = int_to_ptr.vmem [resolvable:$true] %s244
          %250 = dma.hbm_to_vmem [thread:$0]  %s243, 2048, %s245, [#allocation8], 64, 64, 4
        $region16: #{tpu_custom_call.1} parent=11 // pred_fallthru
          _
        // Predicated region
        $region17: #{tpu_custom_call.1} parent=11 // pred_check
          %p251 = pneg %p133
        $region18: #{tpu_custom_call.1} parent=11 // pred_check_branch
          %253 = sbr.rel (%p251) target = $region20
        $region19: #{tpu_custom_call.1} parent=11 // pred_region
          %255 = vsyncadd [#allocation11], 0
          %s256 = sshll.u32 %s3, 4
          %s257 = int_to_ptr.hbm [resolvable:$true] %s256
          %s258 = sshll.u32 [#allocation10], 4
          %s259 = int_to_ptr.vmem [resolvable:$true] %s258
          %264 = dma.hbm_to_vmem [thread:$0]  %s257, 1024, %s259, [#allocation11], 64, 64, 4
        $region20: #{tpu_custom_call.1} parent=11 // pred_fallthru
          _
        // Predicated region
        $region21: #{tpu_custom_call.1} parent=11 // pred_check
          %p265 = pneg %p154
        $region22: #{tpu_custom_call.1} parent=11 // pred_check_branch
          %267 = sbr.rel (%p265) target = $region24
        $region23: #{tpu_custom_call.1} parent=11 // pred_region
          _
        $region24: #{tpu_custom_call.1} parent=11 // pred_fallthru
          _
        // Predicated region
        $region25: #{tpu_custom_call.1} parent=11 // pred_check
          %p268 = pneg %p175
        $region26: #{tpu_custom_call.1} parent=11 // pred_check_branch
          %270 = sbr.rel (%p268) target = $region28
        $region27: #{tpu_custom_call.1} parent=11 // pred_region
          %272 = vsyncadd [#allocation11], 0
          %s273 = sshll.u32 %s5, 4
          %s274 = int_to_ptr.hbm [resolvable:$true] %s273
          %s275 = sshll.u32 [#allocation12], 4
          %s276 = int_to_ptr.vmem [resolvable:$true] %s275
          %281 = dma.hbm_to_vmem [thread:$0]  %s274, 1024, %s276, [#allocation11], 64, 64, 4
        $region28: #{tpu_custom_call.1} parent=11 // pred_fallthru
          _
        // Predicated region
        $region29: #{tpu_custom_call.1} parent=11 // pred_check
          %p282 = pneg %p196
        $region30: #{tpu_custom_call.1} parent=11 // pred_check_branch
          %284 = sbr.rel (%p282) target = $region32
        $region31: #{tpu_custom_call.1} parent=11 // pred_region
          _
        $region32: #{tpu_custom_call.1} parent=11 // pred_fallthru
          _
      $region12: #{tpu_custom_call.1} parent=5 // pred_fallthru
        _
      %p285 = scmp.lt.s32.totalorder %s23, 8
      // Predicated region
      $region33: #{tpu_custom_call.1} parent=5 // pred_check
        %p286 = pneg %p285
      $region34: #{tpu_custom_call.1} parent=5 // pred_check_branch
        %288 = sbr.rel (%p286) target = $region36
      $region35: #{tpu_custom_call.1} parent=5 // pred_region
        // Predicated region
        $region37: #{tpu_custom_call.1} parent=35 // pred_check
          %p289 = pneg %p57
        $region38: #{tpu_custom_call.1} parent=35 // pred_check_branch
          %291 = sbr.rel (%p289) target = $region40
        $region39: #{tpu_custom_call.1} parent=35 // pred_region
          %s292 = sand.u32 %s47, 1
          %s293 = scalar_lea.sflag [#allocation5], %s292
          %s294 = sand.u32 %s47, 1
          %s295 = smul.addr %s294, 8
          %s296 = scalar_lea.vmem [#allocation4], %s295
          %298 = vsyncadd %s293, 0
          %s299 = smul.addr %s30, 4
          %s300 = sadd.s32 %s31, %s299
          %s301 = smul.addr %s300, 8
          %s302 = scalar_lea.hbm %s0, %s301
          %s304 = sshll.u32 %s302, 4
          %s305 = int_to_ptr.hbm [resolvable:$true] %s304
          %s306 = sshll.u32 %s296, 4
          %s307 = int_to_ptr.vmem [resolvable:$true] %s306
          %309 = dma.hbm_to_vmem [thread:$0]  %s305, 128, %s307, %s293
        $region40: #{tpu_custom_call.1} parent=35 // pred_fallthru
          _
        // Predicated region
        $region41: #{tpu_custom_call.1} parent=35 // pred_check
          %p310 = pneg %p85
        $region42: #{tpu_custom_call.1} parent=35 // pred_check_branch
          %312 = sbr.rel (%p310) target = $region44
        $region43: #{tpu_custom_call.1} parent=35 // pred_region
          %s313 = sand.u32 %s23, 1
          %s314 = scalar_lea.sflag [#allocation8], %s313
          %s315 = sand.u32 %s75, 1
          %s316 = smul.addr %s315, 8
          %s317 = scalar_lea.vmem [#allocation7], %s316
          %319 = vsyncadd %s314, 0
          %s320 = smul.addr %s30, 4
          %s321 = sadd.s32 %s31, %s320
          %s322 = smul.addr %s321, 8
          %s323 = scalar_lea.hbm %s1, %s322
          %s325 = sshll.u32 %s323, 4
          %s326 = int_to_ptr.hbm [resolvable:$true] %s325
          %s327 = sshll.u32 %s317, 4
          %s328 = int_to_ptr.vmem [resolvable:$true] %s327
          %330 = dma.hbm_to_vmem [thread:$0]  %s326, 128, %s328, %s314
        $region44: #{tpu_custom_call.1} parent=35 // pred_fallthru
          _
      $region36: #{tpu_custom_call.1} parent=5 // pred_fallthru
        _
      %p331 = scmp.le.s32.totalorder 1, %s23
      %p332 = scmp.lt.s32.totalorder %s23, 9
      %p333 = pnand %p331, %p332
      %p334 = pneg %p333
      // Predicated region
      $region45: #{tpu_custom_call.1} parent=5 // pred_check
        _
      $region46: #{tpu_custom_call.1} parent=5 // pred_check_branch
        %336 = sbr.rel (%p333) target = $region48
      $region47: #{tpu_custom_call.1} parent=5 // pred_region
        %s337 = ssub.s32 %s23, 1
        %s338 = sand.u32 %s50, 1
        %s339 = scalar_lea.sflag [#allocation5], %s338
        %s340 = sand.u32 %s50, 1
        %s341 = smul.addr %s340, 8
        %s342 = scalar_lea.vmem [#allocation4], %s341
        // Predicated region
        $region49: #{tpu_custom_call.1} parent=47 // pred_check
          %p343 = pneg %p63
        $region50: #{tpu_custom_call.1} parent=47 // pred_check_branch
          %345 = sbr.rel (%p343) target = $region52
        $region51: #{tpu_custom_call.1} parent=47 // pred_region
          %347 = dma.done %s339, 128
        $region52: #{tpu_custom_call.1} parent=47 // pred_fallthru
          _
        %s348 = sand.u32 %s28, 1
        %s349 = scalar_lea.sflag [#allocation8], %s348
        %s350 = sand.u32 %s78, 1
        %s351 = smul.addr %s350, 8
        %s352 = scalar_lea.vmem [#allocation7], %s351
        // Predicated region
        $region53: #{tpu_custom_call.1} parent=47 // pred_check
          %p353 = pneg %p91
        $region54: #{tpu_custom_call.1} parent=47 // pred_check_branch
          %355 = sbr.rel (%p353) target = $region56
        $region55: #{tpu_custom_call.1} parent=47 // pred_region
          %357 = dma.done %s349, 128
        $region56: #{tpu_custom_call.1} parent=47 // pred_fallthru
          _
        // Predicated region
        $region57: #{tpu_custom_call.1} parent=47 // pred_check
          %p358 = pneg %p112
        $region58: #{tpu_custom_call.1} parent=47 // pred_check_branch
          %360 = sbr.rel (%p358) target = $region60
        $region59: #{tpu_custom_call.1} parent=47 // pred_region
          %362 = dma.done [#allocation8], 2048
        $region60: #{tpu_custom_call.1} parent=47 // pred_fallthru
          _
        // Predicated region
        $region61: #{tpu_custom_call.1} parent=47 // pred_check
          %p363 = pneg %p133
        $region62: #{tpu_custom_call.1} parent=47 // pred_check_branch
          %365 = sbr.rel (%p363) target = $region64
        $region63: #{tpu_custom_call.1} parent=47 // pred_region
          %367 = dma.done [#allocation11], 1024
        $region64: #{tpu_custom_call.1} parent=47 // pred_fallthru
          _
        // Predicated region
        $region65: #{tpu_custom_call.1} parent=47 // pred_check
          %p368 = pneg %p175
        $region66: #{tpu_custom_call.1} parent=47 // pred_check_branch
          %370 = sbr.rel (%p368) target = $region68
        $region67: #{tpu_custom_call.1} parent=47 // pred_region
          %372 = dma.done [#allocation11], 1024
        $region68: #{tpu_custom_call.1} parent=47 // pred_fallthru
          _
        %s373 = sand.u32 %s50, 1
        %s374 = scalar_lea.sflag [#allocation5], %s373
        %s375 = sand.u32 %s50, 1
        %s376 = smul.addr %s375, 8
        %s377 = scalar_lea.vmem [#allocation4], %s376
        %p378 = pneg %p63
        %p379 = pneg %p60
        %s380 = sand.u32 %s28, 1
        %s381 = scalar_lea.sflag [#allocation8], %s380
        %s382 = sand.u32 %s78, 1
        %s383 = smul.addr %s382, 8
        %s384 = scalar_lea.vmem [#allocation7], %s383
        %p385 = pneg %p91
        %p386 = pneg %p88
        %p387 = pneg %p112
        %p388 = pneg %p109
        %p389 = pneg %p133
        %p390 = pneg %p130
        %p391 = pneg %p154
        %p392 = pneg %p151
        %p393 = pneg %p175
        %p394 = pneg %p172
        %p395 = pneg %p196
        %p396 = pneg %p193
        %p397 = pneg %p222
        %p398 = pneg %p219
        %s399 = sand.u32 %s209, 1
        %s400 = scalar_lea.sflag [#allocation6], %s399
        %s401 = sand.u32 %s209, 1
        %s402 = smul.addr %s401, 8
        %s403 = scalar_lea.vmem [#allocation13], %s402
        %p404 = scmp.eq.s32.totalorder %s33, 0
        // Predicated region
        $region69: #{tpu_custom_call.1} parent=47 // pred_check
          %p405 = pneg %p404
        $region70: #{tpu_custom_call.1} parent=47 // pred_check_branch
          %407 = sbr.rel (%p405) target = $region72
        $region71: #{tpu_custom_call.1} parent=47 // pred_region
          %408 = vst [vmem:[#allocation2] sm:$0xff] 0.0
          %409 = vst [vmem:[#allocation2 + $0x8] sm:$0xff] 0.0
          %vm410 = vcmask 7168
          %411 = vst.msk [vmem:[#allocation3] sm:$0xff] %vm410, 0.0
        $region72: #{tpu_custom_call.1} parent=47 // pred_fallthru
          _
        %v412 = vld [vmem:[%s342] sm:$0xff]
        %v413 = vld [vmem:[%s352] sm:$0xff]
        %v414 = vlaneseq
        %v415 = vand.u32 %v414, 127
        %v416 = vadd.s32 %v415, 128
        %v417 = vperm.slane %v412, 0
        %v418 = vlaneseq
        %v419 = vshrl.u32 %v418, 7
        %421 = vset.pattern.permute.xlu0 %v419
        %422 = vperm.xlu0 %421, %v417
        %v423 = vpop.permute.xlu0 %422
        %v424 = vlaneseq
        %v425 = vshrl.u32 %v424, 7
        %v426 = vadd.s32 %v425, 8
        %427 = vset.pattern.permute.xlu0 %v426
        %428 = vperm.xlu0 %427, %v417
        %v429 = vpop.permute.xlu0 %428
        %v430 = vlaneseq
        %v431 = vshrl.u32 %v430, 7
        %v432 = vadd.s32 %v431, 16
        %433 = vset.pattern.permute.xlu0 %v432
        %434 = vperm.xlu0 %433, %v417
        %v435 = vpop.permute.xlu0 %434
        %v436 = vlaneseq
        %v437 = vshrl.u32 %v436, 7
        %v438 = vadd.s32 %v437, 24
        %439 = vset.pattern.permute.xlu0 %v438
        %440 = vperm.xlu0 %439, %v417
        %v441 = vpop.permute.xlu0 %440
        %v442 = vlaneseq
        %v443 = vshrl.u32 %v442, 7
        %v444 = vadd.s32 %v443, 32
        %445 = vset.pattern.permute.xlu0 %v444
        %446 = vperm.xlu0 %445, %v417
        %v447 = vpop.permute.xlu0 %446
        %v448 = vlaneseq
        %v449 = vshrl.u32 %v448, 7
        %v450 = vadd.s32 %v449, 40
        %451 = vset.pattern.permute.xlu0 %v450
        %452 = vperm.xlu0 %451, %v417
        %v453 = vpop.permute.xlu0 %452
        %v454 = vlaneseq
        %v455 = vshrl.u32 %v454, 7
        %v456 = vadd.s32 %v455, 48
        %457 = vset.pattern.permute.xlu0 %v456
        %458 = vperm.xlu0 %457, %v417
        %v459 = vpop.permute.xlu0 %458
        %v460 = vlaneseq
        %v461 = vshrl.u32 %v460, 7
        %v462 = vadd.s32 %v461, 56
        %463 = vset.pattern.permute.xlu0 %v462
        %464 = vperm.xlu0 %463, %v417
        %v465 = vpop.permute.xlu0 %464
        %v466 = vlaneseq
        %v467 = vshrl.u32 %v466, 7
        %v468 = vadd.s32 %v467, 64
        %469 = vset.pattern.permute.xlu0 %v468
        %470 = vperm.xlu0 %469, %v417
        %v471 = vpop.permute.xlu0 %470
        %v472 = vlaneseq
        %v473 = vshrl.u32 %v472, 7
        %v474 = vadd.s32 %v473, 72
        %475 = vset.pattern.permute.xlu0 %v474
        %476 = vperm.xlu0 %475, %v417
        %v477 = vpop.permute.xlu0 %476
        %v478 = vlaneseq
        %v479 = vshrl.u32 %v478, 7
        %v480 = vadd.s32 %v479, 80
        %481 = vset.pattern.permute.xlu0 %v480
        %482 = vperm.xlu0 %481, %v417
        %v483 = vpop.permute.xlu0 %482
        %v484 = vlaneseq
        %v485 = vshrl.u32 %v484, 7
        %v486 = vadd.s32 %v485, 88
        %487 = vset.pattern.permute.xlu0 %v486
        %488 = vperm.xlu0 %487, %v417
        %v489 = vpop.permute.xlu0 %488
        %v490 = vlaneseq
        %v491 = vshrl.u32 %v490, 7
        %v492 = vadd.s32 %v491, 96
        %493 = vset.pattern.permute.xlu0 %v492
        %494 = vperm.xlu0 %493, %v417
        %v495 = vpop.permute.xlu0 %494
        %v496 = vlaneseq
        %v497 = vshrl.u32 %v496, 7
        %v498 = vadd.s32 %v497, 104
        %499 = vset.pattern.permute.xlu0 %v498
        %500 = vperm.xlu0 %499, %v417
        %v501 = vpop.permute.xlu0 %500
        %v502 = vlaneseq
        %v503 = vshrl.u32 %v502, 7
        %v504 = vadd.s32 %v503, 112
        %505 = vset.pattern.permute.xlu0 %v504
        %506 = vperm.xlu0 %505, %v417
        %v507 = vpop.permute.xlu0 %506
        %v508 = vlaneseq
        %v509 = vshrl.u32 %v508, 7
        %v510 = vadd.s32 %v509, 120
        %511 = vset.pattern.permute.xlu0 %v510
        %512 = vperm.xlu0 %511, %v417
        %v513 = vpop.permute.xlu0 %512
        %v514 = vperm.slane %v412, 1
        %v515 = vlaneseq
        %v516 = vshrl.u32 %v515, 7
        %518 = vset.pattern.permute.xlu0 %v516
        %519 = vperm.xlu0 %518, %v514
        %v520 = vpop.permute.xlu0 %519
        %v521 = vlaneseq
        %v522 = vshrl.u32 %v521, 7
        %v523 = vadd.s32 %v522, 8
        %524 = vset.pattern.permute.xlu0 %v523
        %525 = vperm.xlu0 %524, %v514
        %v526 = vpop.permute.xlu0 %525
        %v527 = vlaneseq
        %v528 = vshrl.u32 %v527, 7
        %v529 = vadd.s32 %v528, 16
        %530 = vset.pattern.permute.xlu0 %v529
        %531 = vperm.xlu0 %530, %v514
        %v532 = vpop.permute.xlu0 %531
        %v533 = vlaneseq
        %v534 = vshrl.u32 %v533, 7
        %v535 = vadd.s32 %v534, 24
        %536 = vset.pattern.permute.xlu0 %v535
        %537 = vperm.xlu0 %536, %v514
        %v538 = vpop.permute.xlu0 %537
        %v539 = vlaneseq
        %v540 = vshrl.u32 %v539, 7
        %v541 = vadd.s32 %v540, 32
        %542 = vset.pattern.permute.xlu0 %v541
        %543 = vperm.xlu0 %542, %v514
        %v544 = vpop.permute.xlu0 %543
        %v545 = vlaneseq
        %v546 = vshrl.u32 %v545, 7
        %v547 = vadd.s32 %v546, 40
        %548 = vset.pattern.permute.xlu0 %v547
        %549 = vperm.xlu0 %548, %v514
        %v550 = vpop.permute.xlu0 %549
        %v551 = vlaneseq
        %v552 = vshrl.u32 %v551, 7
        %v553 = vadd.s32 %v552, 48
        %554 = vset.pattern.permute.xlu0 %v553
        %555 = vperm.xlu0 %554, %v514
        %v556 = vpop.permute.xlu0 %555
        %v557 = vlaneseq
        %v558 = vshrl.u32 %v557, 7
        %v559 = vadd.s32 %v558, 56
        %560 = vset.pattern.permute.xlu0 %v559
        %561 = vperm.xlu0 %560, %v514
        %v562 = vpop.permute.xlu0 %561
        %v563 = vlaneseq
        %v564 = vshrl.u32 %v563, 7
        %v565 = vadd.s32 %v564, 64
        %566 = vset.pattern.permute.xlu0 %v565
        %567 = vperm.xlu0 %566, %v514
        %v568 = vpop.permute.xlu0 %567
        %v569 = vlaneseq
        %v570 = vshrl.u32 %v569, 7
        %v571 = vadd.s32 %v570, 72
        %572 = vset.pattern.permute.xlu0 %v571
        %573 = vperm.xlu0 %572, %v514
        %v574 = vpop.permute.xlu0 %573
        %v575 = vlaneseq
        %v576 = vshrl.u32 %v575, 7
        %v577 = vadd.s32 %v576, 80
        %578 = vset.pattern.permute.xlu0 %v577
        %579 = vperm.xlu0 %578, %v514
        %v580 = vpop.permute.xlu0 %579
        %v581 = vlaneseq
        %v582 = vshrl.u32 %v581, 7
        %v583 = vadd.s32 %v582, 88
        %584 = vset.pattern.permute.xlu0 %v583
        %585 = vperm.xlu0 %584, %v514
        %v586 = vpop.permute.xlu0 %585
        %v587 = vlaneseq
        %v588 = vshrl.u32 %v587, 7
        %v589 = vadd.s32 %v588, 96
        %590 = vset.pattern.permute.xlu0 %v589
        %591 = vperm.xlu0 %590, %v514
        %v592 = vpop.permute.xlu0 %591
        %v593 = vlaneseq
        %v594 = vshrl.u32 %v593, 7
        %v595 = vadd.s32 %v594, 104
        %596 = vset.pattern.permute.xlu0 %v595
        %597 = vperm.xlu0 %596, %v514
        %v598 = vpop.permute.xlu0 %597
        %v599 = vlaneseq
        %v600 = vshrl.u32 %v599, 7
        %v601 = vadd.s32 %v600, 112
        %602 = vset.pattern.permute.xlu0 %v601
        %603 = vperm.xlu0 %602, %v514
        %v604 = vpop.permute.xlu0 %603
        %v605 = vlaneseq
        %v606 = vshrl.u32 %v605, 7
        %v607 = vadd.s32 %v606, 120
        %608 = vset.pattern.permute.xlu0 %v607
        %609 = vperm.xlu0 %608, %v514
        %v610 = vpop.permute.xlu0 %609
        %v611 = vperm.slane %v412, 2
        %v612 = vlaneseq
        %v613 = vshrl.u32 %v612, 7
        %615 = vset.pattern.permute.xlu0 %v613
        %616 = vperm.xlu0 %615, %v611
        %v617 = vpop.permute.xlu0 %616
        %v618 = vlaneseq
        %v619 = vshrl.u32 %v618, 7
        %v620 = vadd.s32 %v619, 8
        %621 = vset.pattern.permute.xlu0 %v620
        %622 = vperm.xlu0 %621, %v611
        %v623 = vpop.permute.xlu0 %622
        %v624 = vlaneseq
        %v625 = vshrl.u32 %v624, 7
        %v626 = vadd.s32 %v625, 16
        %627 = vset.pattern.permute.xlu0 %v626
        %628 = vperm.xlu0 %627, %v611
        %v629 = vpop.permute.xlu0 %628
        %v630 = vlaneseq
        %v631 = vshrl.u32 %v630, 7
        %v632 = vadd.s32 %v631, 24
        %633 = vset.pattern.permute.xlu0 %v632
        %634 = vperm.xlu0 %633, %v611
        %v635 = vpop.permute.xlu0 %634
        %v636 = vlaneseq
        %v637 = vshrl.u32 %v636, 7
        %v638 = vadd.s32 %v637, 32
        %639 = vset.pattern.permute.xlu0 %v638
        %640 = vperm.xlu0 %639, %v611
        %v641 = vpop.permute.xlu0 %640
        %v642 = vlaneseq
        %v643 = vshrl.u32 %v642, 7
        %v644 = vadd.s32 %v643, 40
        %645 = vset.pattern.permute.xlu0 %v644
        %646 = vperm.xlu0 %645, %v611
        %v647 = vpop.permute.xlu0 %646
        %v648 = vlaneseq
        %v649 = vshrl.u32 %v648, 7
        %v650 = vadd.s32 %v649, 48
        %651 = vset.pattern.permute.xlu0 %v650
        %652 = vperm.xlu0 %651, %v611
        %v653 = vpop.permute.xlu0 %652
        %v654 = vlaneseq
        %v655 = vshrl.u32 %v654, 7
        %v656 = vadd.s32 %v655, 56
        %657 = vset.pattern.permute.xlu0 %v656
        %658 = vperm.xlu0 %657, %v611
        %v659 = vpop.permute.xlu0 %658
        %v660 = vlaneseq
        %v661 = vshrl.u32 %v660, 7
        %v662 = vadd.s32 %v661, 64
        %663 = vset.pattern.permute.xlu0 %v662
        %664 = vperm.xlu0 %663, %v611
        %v665 = vpop.permute.xlu0 %664
        %v666 = vlaneseq
        %v667 = vshrl.u32 %v666, 7
        %v668 = vadd.s32 %v667, 72
        %669 = vset.pattern.permute.xlu0 %v668
        %670 = vperm.xlu0 %669, %v611
        %v671 = vpop.permute.xlu0 %670
        %v672 = vlaneseq
        %v673 = vshrl.u32 %v672, 7
        %v674 = vadd.s32 %v673, 80
        %675 = vset.pattern.permute.xlu0 %v674
        %676 = vperm.xlu0 %675, %v611
        %v677 = vpop.permute.xlu0 %676
        %v678 = vlaneseq
        %v679 = vshrl.u32 %v678, 7
        %v680 = vadd.s32 %v679, 88
        %681 = vset.pattern.permute.xlu0 %v680
        %682 = vperm.xlu0 %681, %v611
        %v683 = vpop.permute.xlu0 %682
        %v684 = vlaneseq
        %v685 = vshrl.u32 %v684, 7
        %v686 = vadd.s32 %v685, 96
        %687 = vset.pattern.permute.xlu0 %v686
        %688 = vperm.xlu0 %687, %v611
        %v689 = vpop.permute.xlu0 %688
        %v690 = vlaneseq
        %v691 = vshrl.u32 %v690, 7
        %v692 = vadd.s32 %v691, 104
        %693 = vset.pattern.permute.xlu0 %v692
        %694 = vperm.xlu0 %693, %v611
        %v695 = vpop.permute.xlu0 %694
        %v696 = vlaneseq
        %v697 = vshrl.u32 %v696, 7
        %v698 = vadd.s32 %v697, 112
        %699 = vset.pattern.permute.xlu0 %v698
        %700 = vperm.xlu0 %699, %v611
        %v701 = vpop.permute.xlu0 %700
        %v702 = vlaneseq
        %v703 = vshrl.u32 %v702, 7
        %v704 = vadd.s32 %v703, 120
        %705 = vset.pattern.permute.xlu0 %v704
        %706 = vperm.xlu0 %705, %v611
        %v707 = vpop.permute.xlu0 %706
        %v708 = vperm.slane %v412, 3
        %v709 = vlaneseq
        %v710 = vshrl.u32 %v709, 7
        %712 = vset.pattern.permute.xlu0 %v710
        %713 = vperm.xlu0 %712, %v708
        %v714 = vpop.permute.xlu0 %713
        %v715 = vlaneseq
        %v716 = vshrl.u32 %v715, 7
        %v717 = vadd.s32 %v716, 8
        %718 = vset.pattern.permute.xlu0 %v717
        %719 = vperm.xlu0 %718, %v708
        %v720 = vpop.permute.xlu0 %719
        %v721 = vlaneseq
        %v722 = vshrl.u32 %v721, 7
        %v723 = vadd.s32 %v722, 16
        %724 = vset.pattern.permute.xlu0 %v723
        %725 = vperm.xlu0 %724, %v708
        %v726 = vpop.permute.xlu0 %725
        %v727 = vlaneseq
        %v728 = vshrl.u32 %v727, 7
        %v729 = vadd.s32 %v728, 24
        %730 = vset.pattern.permute.xlu0 %v729
        %731 = vperm.xlu0 %730, %v708
        %v732 = vpop.permute.xlu0 %731
        %v733 = vlaneseq
        %v734 = vshrl.u32 %v733, 7
        %v735 = vadd.s32 %v734, 32
        %736 = vset.pattern.permute.xlu0 %v735
        %737 = vperm.xlu0 %736, %v708
        %v738 = vpop.permute.xlu0 %737
        %v739 = vlaneseq
        %v740 = vshrl.u32 %v739, 7
        %v741 = vadd.s32 %v740, 40
        %742 = vset.pattern.permute.xlu0 %v741
        %743 = vperm.xlu0 %742, %v708
        %v744 = vpop.permute.xlu0 %743
        %v745 = vlaneseq
        %v746 = vshrl.u32 %v745, 7
        %v747 = vadd.s32 %v746, 48
        %748 = vset.pattern.permute.xlu0 %v747
        %749 = vperm.xlu0 %748, %v708
        %v750 = vpop.permute.xlu0 %749
        %v751 = vlaneseq
        %v752 = vshrl.u32 %v751, 7
        %v753 = vadd.s32 %v752, 56
        %754 = vset.pattern.permute.xlu0 %v753
        %755 = vperm.xlu0 %754, %v708
        %v756 = vpop.permute.xlu0 %755
        %v757 = vlaneseq
        %v758 = vshrl.u32 %v757, 7
        %v759 = vadd.s32 %v758, 64
        %760 = vset.pattern.permute.xlu0 %v759
        %761 = vperm.xlu0 %760, %v708
        %v762 = vpop.permute.xlu0 %761
        %v763 = vlaneseq
        %v764 = vshrl.u32 %v763, 7
        %v765 = vadd.s32 %v764, 72
        %766 = vset.pattern.permute.xlu0 %v765
        %767 = vperm.xlu0 %766, %v708
        %v768 = vpop.permute.xlu0 %767
        %v769 = vlaneseq
        %v770 = vshrl.u32 %v769, 7
        %v771 = vadd.s32 %v770, 80
        %772 = vset.pattern.permute.xlu0 %v771
        %773 = vperm.xlu0 %772, %v708
        %v774 = vpop.permute.xlu0 %773
        %v775 = vlaneseq
        %v776 = vshrl.u32 %v775, 7
        %v777 = vadd.s32 %v776, 88
        %778 = vset.pattern.permute.xlu0 %v777
        %779 = vperm.xlu0 %778, %v708
        %v780 = vpop.permute.xlu0 %779
        %v781 = vlaneseq
        %v782 = vshrl.u32 %v781, 7
        %v783 = vadd.s32 %v782, 96
        %784 = vset.pattern.permute.xlu0 %v783
        %785 = vperm.xlu0 %784, %v708
        %v786 = vpop.permute.xlu0 %785
        %v787 = vlaneseq
        %v788 = vshrl.u32 %v787, 7
        %v789 = vadd.s32 %v788, 104
        %790 = vset.pattern.permute.xlu0 %v789
        %791 = vperm.xlu0 %790, %v708
        %v792 = vpop.permute.xlu0 %791
        %v793 = vlaneseq
        %v794 = vshrl.u32 %v793, 7
        %v795 = vadd.s32 %v794, 112
        %796 = vset.pattern.permute.xlu0 %v795
        %797 = vperm.xlu0 %796, %v708
        %v798 = vpop.permute.xlu0 %797
        %v799 = vlaneseq
        %v800 = vshrl.u32 %v799, 7
        %v801 = vadd.s32 %v800, 120
        %802 = vset.pattern.permute.xlu0 %v801
        %803 = vperm.xlu0 %802, %v708
        %v804 = vpop.permute.xlu0 %803
        %v805 = vperm.slane %v412, 4
        %v806 = vlaneseq
        %v807 = vshrl.u32 %v806, 7
        %809 = vset.pattern.permute.xlu0 %v807
        %810 = vperm.xlu0 %809, %v805
        %v811 = vpop.permute.xlu0 %810
        %v812 = vlaneseq
        %v813 = vshrl.u32 %v812, 7
        %v814 = vadd.s32 %v813, 8
        %815 = vset.pattern.permute.xlu0 %v814
        %816 = vperm.xlu0 %815, %v805
        %v817 = vpop.permute.xlu0 %816
        %v818 = vlaneseq
        %v819 = vshrl.u32 %v818, 7
        %v820 = vadd.s32 %v819, 16
        %821 = vset.pattern.permute.xlu0 %v820
        %822 = vperm.xlu0 %821, %v805
        %v823 = vpop.permute.xlu0 %822
        %v824 = vlaneseq
        %v825 = vshrl.u32 %v824, 7
        %v826 = vadd.s32 %v825, 24
        %827 = vset.pattern.permute.xlu0 %v826
        %828 = vperm.xlu0 %827, %v805
        %v829 = vpop.permute.xlu0 %828
        %v830 = vlaneseq
        %v831 = vshrl.u32 %v830, 7
        %v832 = vadd.s32 %v831, 32
        %833 = vset.pattern.permute.xlu0 %v832
        %834 = vperm.xlu0 %833, %v805
        %v835 = vpop.permute.xlu0 %834
        %v836 = vlaneseq
        %v837 = vshrl.u32 %v836, 7
        %v838 = vadd.s32 %v837, 40
        %839 = vset.pattern.permute.xlu0 %v838
        %840 = vperm.xlu0 %839, %v805
        %v841 = vpop.permute.xlu0 %840
        %v842 = vlaneseq
        %v843 = vshrl.u32 %v842, 7
        %v844 = vadd.s32 %v843, 48
        %845 = vset.pattern.permute.xlu0 %v844
        %846 = vperm.xlu0 %845, %v805
        %v847 = vpop.permute.xlu0 %846
        %v848 = vlaneseq
        %v849 = vshrl.u32 %v848, 7
        %v850 = vadd.s32 %v849, 56
        %851 = vset.pattern.permute.xlu0 %v850
        %852 = vperm.xlu0 %851, %v805
        %v853 = vpop.permute.xlu0 %852
        %v854 = vlaneseq
        %v855 = vshrl.u32 %v854, 7
        %v856 = vadd.s32 %v855, 64
        %857 = vset.pattern.permute.xlu0 %v856
        %858 = vperm.xlu0 %857, %v805
        %v859 = vpop.permute.xlu0 %858
        %v860 = vlaneseq
        %v861 = vshrl.u32 %v860, 7
        %v862 = vadd.s32 %v861, 72
        %863 = vset.pattern.permute.xlu0 %v862
        %864 = vperm.xlu0 %863, %v805
        %v865 = vpop.permute.xlu0 %864
        %v866 = vlaneseq
        %v867 = vshrl.u32 %v866, 7
        %v868 = vadd.s32 %v867, 80
        %869 = vset.pattern.permute.xlu0 %v868
        %870 = vperm.xlu0 %869, %v805
        %v871 = vpop.permute.xlu0 %870
        %v872 = vlaneseq
        %v873 = vshrl.u32 %v872, 7
        %v874 = vadd.s32 %v873, 88
        %875 = vset.pattern.permute.xlu0 %v874
        %876 = vperm.xlu0 %875, %v805
        %v877 = vpop.permute.xlu0 %876
        %v878 = vlaneseq
        %v879 = vshrl.u32 %v878, 7
        %v880 = vadd.s32 %v879, 96
        %881 = vset.pattern.permute.xlu0 %v880
        %882 = vperm.xlu0 %881, %v805
        %v883 = vpop.permute.xlu0 %882
        %v884 = vlaneseq
        %v885 = vshrl.u32 %v884, 7
        %v886 = vadd.s32 %v885, 104
        %887 = vset.pattern.permute.xlu0 %v886
        %888 = vperm.xlu0 %887, %v805
        %v889 = vpop.permute.xlu0 %888
        %v890 = vlaneseq
        %v891 = vshrl.u32 %v890, 7
        %v892 = vadd.s32 %v891, 112
        %893 = vset.pattern.permute.xlu0 %v892
        %894 = vperm.xlu0 %893, %v805
        %v895 = vpop.permute.xlu0 %894
        %v896 = vlaneseq
        %v897 = vshrl.u32 %v896, 7
        %v898 = vadd.s32 %v897, 120
        %899 = vset.pattern.permute.xlu0 %v898
        %900 = vperm.xlu0 %899, %v805
        %v901 = vpop.permute.xlu0 %900
        %v902 = vperm.slane %v412, 5
        %v903 = vlaneseq
        %v904 = vshrl.u32 %v903, 7
        %906 = vset.pattern.permute.xlu0 %v904
        %907 = vperm.xlu0 %906, %v902
        %v908 = vpop.permute.xlu0 %907
        %v909 = vlaneseq
        %v910 = vshrl.u32 %v909, 7
        %v911 = vadd.s32 %v910, 8
        %912 = vset.pattern.permute.xlu0 %v911
        %913 = vperm.xlu0 %912, %v902
        %v914 = vpop.permute.xlu0 %913
        %v915 = vlaneseq
        %v916 = vshrl.u32 %v915, 7
        %v917 = vadd.s32 %v916, 16
        %918 = vset.pattern.permute.xlu0 %v917
        %919 = vperm.xlu0 %918, %v902
        %v920 = vpop.permute.xlu0 %919
        %v921 = vlaneseq
        %v922 = vshrl.u32 %v921, 7
        %v923 = vadd.s32 %v922, 24
        %924 = vset.pattern.permute.xlu0 %v923
        %925 = vperm.xlu0 %924, %v902
        %v926 = vpop.permute.xlu0 %925
        %v927 = vlaneseq
        %v928 = vshrl.u32 %v927, 7
        %v929 = vadd.s32 %v928, 32
        %930 = vset.pattern.permute.xlu0 %v929
        %931 = vperm.xlu0 %930, %v902
        %v932 = vpop.permute.xlu0 %931
        %v933 = vlaneseq
        %v934 = vshrl.u32 %v933, 7
        %v935 = vadd.s32 %v934, 40
        %936 = vset.pattern.permute.xlu0 %v935
        %937 = vperm.xlu0 %936, %v902
        %v938 = vpop.permute.xlu0 %937
        %v939 = vlaneseq
        %v940 = vshrl.u32 %v939, 7
        %v941 = vadd.s32 %v940, 48
        %942 = vset.pattern.permute.xlu0 %v941
        %943 = vperm.xlu0 %942, %v902
        %v944 = vpop.permute.xlu0 %943
        %v945 = vlaneseq
        %v946 = vshrl.u32 %v945, 7
        %v947 = vadd.s32 %v946, 56
        %948 = vset.pattern.permute.xlu0 %v947
        %949 = vperm.xlu0 %948, %v902
        %v950 = vpop.permute.xlu0 %949
        %v951 = vlaneseq
        %v952 = vshrl.u32 %v951, 7
        %v953 = vadd.s32 %v952, 64
        %954 = vset.pattern.permute.xlu0 %v953
        %955 = vperm.xlu0 %954, %v902
        %v956 = vpop.permute.xlu0 %955
        %v957 = vlaneseq
        %v958 = vshrl.u32 %v957, 7
        %v959 = vadd.s32 %v958, 72
        %960 = vset.pattern.permute.xlu0 %v959
        %961 = vperm.xlu0 %960, %v902
        %v962 = vpop.permute.xlu0 %961
        %v963 = vlaneseq
        %v964 = vshrl.u32 %v963, 7
        %v965 = vadd.s32 %v964, 80
        %966 = vset.pattern.permute.xlu0 %v965
        %967 = vperm.xlu0 %966, %v902
        %v968 = vpop.permute.xlu0 %967
        %v969 = vlaneseq
        %v970 = vshrl.u32 %v969, 7
        %v971 = vadd.s32 %v970, 88
        %972 = vset.pattern.permute.xlu0 %v971
        %973 = vperm.xlu0 %972, %v902
        %v974 = vpop.permute.xlu0 %973
        %v975 = vlaneseq
        %v976 = vshrl.u32 %v975, 7
        %v977 = vadd.s32 %v976, 96
        %978 = vset.pattern.permute.xlu0 %v977
        %979 = vperm.xlu0 %978, %v902
        %v980 = vpop.permute.xlu0 %979
        %v981 = vlaneseq
        %v982 = vshrl.u32 %v981, 7
        %v983 = vadd.s32 %v982, 104
        %984 = vset.pattern.permute.xlu0 %v983
        %985 = vperm.xlu0 %984, %v902
        %v986 = vpop.permute.xlu0 %985
        %v987 = vlaneseq
        %v988 = vshrl.u32 %v987, 7
        %v989 = vadd.s32 %v988, 112
        %990 = vset.pattern.permute.xlu0 %v989
        %991 = vperm.xlu0 %990, %v902
        %v992 = vpop.permute.xlu0 %991
        %v993 = vlaneseq
        %v994 = vshrl.u32 %v993, 7
        %v995 = vadd.s32 %v994, 120
        %996 = vset.pattern.permute.xlu0 %v995
        %997 = vperm.xlu0 %996, %v902
        %v998 = vpop.permute.xlu0 %997
        %v999 = vperm.slane %v412, 6
        %v1000 = vlaneseq
        %v1001 = vshrl.u32 %v1000, 7
        %1003 = vset.pattern.permute.xlu0 %v1001
        %1004 = vperm.xlu0 %1003, %v999
        %v1005 = vpop.permute.xlu0 %1004
        %v1006 = vlaneseq
        %v1007 = vshrl.u32 %v1006, 7
        %v1008 = vadd.s32 %v1007, 8
        %1009 = vset.pattern.permute.xlu0 %v1008
        %1010 = vperm.xlu0 %1009, %v999
        %v1011 = vpop.permute.xlu0 %1010
        %v1012 = vlaneseq
        %v1013 = vshrl.u32 %v1012, 7
        %v1014 = vadd.s32 %v1013, 16
        %1015 = vset.pattern.permute.xlu0 %v1014
        %1016 = vperm.xlu0 %1015, %v999
        %v1017 = vpop.permute.xlu0 %1016
        %v1018 = vlaneseq
        %v1019 = vshrl.u32 %v1018, 7
        %v1020 = vadd.s32 %v1019, 24
        %1021 = vset.pattern.permute.xlu0 %v1020
        %1022 = vperm.xlu0 %1021, %v999
        %v1023 = vpop.permute.xlu0 %1022
        %v1024 = vlaneseq
        %v1025 = vshrl.u32 %v1024, 7
        %v1026 = vadd.s32 %v1025, 32
        %1027 = vset.pattern.permute.xlu0 %v1026
        %1028 = vperm.xlu0 %1027, %v999
        %v1029 = vpop.permute.xlu0 %1028
        %v1030 = vlaneseq
        %v1031 = vshrl.u32 %v1030, 7
        %v1032 = vadd.s32 %v1031, 40
        %1033 = vset.pattern.permute.xlu0 %v1032
        %1034 = vperm.xlu0 %1033, %v999
        %v1035 = vpop.permute.xlu0 %1034
        %v1036 = vlaneseq
        %v1037 = vshrl.u32 %v1036, 7
        %v1038 = vadd.s32 %v1037, 48
        %1039 = vset.pattern.permute.xlu0 %v1038
        %1040 = vperm.xlu0 %1039, %v999
        %v1041 = vpop.permute.xlu0 %1040
        %v1042 = vlaneseq
        %v1043 = vshrl.u32 %v1042, 7
        %v1044 = vadd.s32 %v1043, 56
        %1045 = vset.pattern.permute.xlu0 %v1044
        %1046 = vperm.xlu0 %1045, %v999
        %v1047 = vpop.permute.xlu0 %1046
        %v1048 = vlaneseq
        %v1049 = vshrl.u32 %v1048, 7
        %v1050 = vadd.s32 %v1049, 64
        %1051 = vset.pattern.permute.xlu0 %v1050
        %1052 = vperm.xlu0 %1051, %v999
        %v1053 = vpop.permute.xlu0 %1052
        %v1054 = vlaneseq
        %v1055 = vshrl.u32 %v1054, 7
        %v1056 = vadd.s32 %v1055, 72
        %1057 = vset.pattern.permute.xlu0 %v1056
        %1058 = vperm.xlu0 %1057, %v999
        %v1059 = vpop.permute.xlu0 %1058
        %v1060 = vlaneseq
        %v1061 = vshrl.u32 %v1060, 7
        %v1062 = vadd.s32 %v1061, 80
        %1063 = vset.pattern.permute.xlu0 %v1062
        %1064 = vperm.xlu0 %1063, %v999
        %v1065 = vpop.permute.xlu0 %1064
        %v1066 = vlaneseq
        %v1067 = vshrl.u32 %v1066, 7
        %v1068 = vadd.s32 %v1067, 88
        %1069 = vset.pattern.permute.xlu0 %v1068
        %1070 = vperm.xlu0 %1069, %v999
        %v1071 = vpop.permute.xlu0 %1070
        %v1072 = vlaneseq
        %v1073 = vshrl.u32 %v1072, 7
        %v1074 = vadd.s32 %v1073, 96
        %1075 = vset.pattern.permute.xlu0 %v1074
        %1076 = vperm.xlu0 %1075, %v999
        %v1077 = vpop.permute.xlu0 %1076
        %v1078 = vlaneseq
        %v1079 = vshrl.u32 %v1078, 7
        %v1080 = vadd.s32 %v1079, 104
        %1081 = vset.pattern.permute.xlu0 %v1080
        %1082 = vperm.xlu0 %1081, %v999
        %v1083 = vpop.permute.xlu0 %1082
        %v1084 = vlaneseq
        %v1085 = vshrl.u32 %v1084, 7
        %v1086 = vadd.s32 %v1085, 112
        %1087 = vset.pattern.permute.xlu0 %v1086
        %1088 = vperm.xlu0 %1087, %v999
        %v1089 = vpop.permute.xlu0 %1088
        %v1090 = vlaneseq
        %v1091 = vshrl.u32 %v1090, 7
        %v1092 = vadd.s32 %v1091, 120
        %1093 = vset.pattern.permute.xlu0 %v1092
        %1094 = vperm.xlu0 %1093, %v999
        %v1095 = vpop.permute.xlu0 %1094
        %v1096 = vperm.slane %v412, 7
        %v1097 = vlaneseq
        %v1098 = vshrl.u32 %v1097, 7
        %1100 = vset.pattern.permute.xlu0 %v1098
        %1101 = vperm.xlu0 %1100, %v1096
        %v1102 = vpop.permute.xlu0 %1101
        %v1103 = vlaneseq
        %v1104 = vshrl.u32 %v1103, 7
        %v1105 = vadd.s32 %v1104, 8
        %1106 = vset.pattern.permute.xlu0 %v1105
        %1107 = vperm.xlu0 %1106, %v1096
        %v1108 = vpop.permute.xlu0 %1107
        %v1109 = vlaneseq
        %v1110 = vshrl.u32 %v1109, 7
        %v1111 = vadd.s32 %v1110, 16
        %1112 = vset.pattern.permute.xlu0 %v1111
        %1113 = vperm.xlu0 %1112, %v1096
        %v1114 = vpop.permute.xlu0 %1113
        %v1115 = vlaneseq
        %v1116 = vshrl.u32 %v1115, 7
        %v1117 = vadd.s32 %v1116, 24
        %1118 = vset.pattern.permute.xlu0 %v1117
        %1119 = vperm.xlu0 %1118, %v1096
        %v1120 = vpop.permute.xlu0 %1119
        %v1121 = vlaneseq
        %v1122 = vshrl.u32 %v1121, 7
        %v1123 = vadd.s32 %v1122, 32
        %1124 = vset.pattern.permute.xlu0 %v1123
        %1125 = vperm.xlu0 %1124, %v1096
        %v1126 = vpop.permute.xlu0 %1125
        %v1127 = vlaneseq
        %v1128 = vshrl.u32 %v1127, 7
        %v1129 = vadd.s32 %v1128, 40
        %1130 = vset.pattern.permute.xlu0 %v1129
        %1131 = vperm.xlu0 %1130, %v1096
        %v1132 = vpop.permute.xlu0 %1131
        %v1133 = vlaneseq
        %v1134 = vshrl.u32 %v1133, 7
        %v1135 = vadd.s32 %v1134, 48
        %1136 = vset.pattern.permute.xlu0 %v1135
        %1137 = vperm.xlu0 %1136, %v1096
        %v1138 = vpop.permute.xlu0 %1137
        %v1139 = vlaneseq
        %v1140 = vshrl.u32 %v1139, 7
        %v1141 = vadd.s32 %v1140, 56
        %1142 = vset.pattern.permute.xlu0 %v1141
        %1143 = vperm.xlu0 %1142, %v1096
        %v1144 = vpop.permute.xlu0 %1143
        %v1145 = vlaneseq
        %v1146 = vshrl.u32 %v1145, 7
        %v1147 = vadd.s32 %v1146, 64
        %1148 = vset.pattern.permute.xlu0 %v1147
        %1149 = vperm.xlu0 %1148, %v1096
        %v1150 = vpop.permute.xlu0 %1149
        %v1151 = vlaneseq
        %v1152 = vshrl.u32 %v1151, 7
        %v1153 = vadd.s32 %v1152, 72
        %1154 = vset.pattern.permute.xlu0 %v1153
        %1155 = vperm.xlu0 %1154, %v1096
        %v1156 = vpop.permute.xlu0 %1155
        %v1157 = vlaneseq
        %v1158 = vshrl.u32 %v1157, 7
        %v1159 = vadd.s32 %v1158, 80
        %1160 = vset.pattern.permute.xlu0 %v1159
        %1161 = vperm.xlu0 %1160, %v1096
        %v1162 = vpop.permute.xlu0 %1161
        %v1163 = vlaneseq
        %v1164 = vshrl.u32 %v1163, 7
        %v1165 = vadd.s32 %v1164, 88
        %1166 = vset.pattern.permute.xlu0 %v1165
        %1167 = vperm.xlu0 %1166, %v1096
        %v1168 = vpop.permute.xlu0 %1167
        %v1169 = vlaneseq
        %v1170 = vshrl.u32 %v1169, 7
        %v1171 = vadd.s32 %v1170, 96
        %1172 = vset.pattern.permute.xlu0 %v1171
        %1173 = vperm.xlu0 %1172, %v1096
        %v1174 = vpop.permute.xlu0 %1173
        %v1175 = vlaneseq
        %v1176 = vshrl.u32 %v1175, 7
        %v1177 = vadd.s32 %v1176, 104
        %1178 = vset.pattern.permute.xlu0 %v1177
        %1179 = vperm.xlu0 %1178, %v1096
        %v1180 = vpop.permute.xlu0 %1179
        %v1181 = vlaneseq
        %v1182 = vshrl.u32 %v1181, 7
        %v1183 = vadd.s32 %v1182, 112
        %1184 = vset.pattern.permute.xlu0 %v1183
        %1185 = vperm.xlu0 %1184, %v1096
        %v1186 = vpop.permute.xlu0 %1185
        %v1187 = vlaneseq
        %v1188 = vshrl.u32 %v1187, 7
        %v1189 = vadd.s32 %v1188, 120
        %1190 = vset.pattern.permute.xlu0 %v1189
        %1191 = vperm.xlu0 %1190, %v1096
        %v1192 = vpop.permute.xlu0 %1191
        %vm1193 = vcmp.eq.s32.totalorder %v423, %v415
        %vm1194 = vcmp.eq.s32.totalorder %v423, %v416
        %vm1195 = vcmp.eq.s32.totalorder %v429, %v415
        %vm1196 = vcmp.eq.s32.totalorder %v429, %v416
        %vm1197 = vcmp.eq.s32.totalorder %v435, %v415
        %vm1198 = vcmp.eq.s32.totalorder %v435, %v416
        %vm1199 = vcmp.eq.s32.totalorder %v441, %v415
        %vm1200 = vcmp.eq.s32.totalorder %v441, %v416
        %vm1201 = vcmp.eq.s32.totalorder %v447, %v415
        %vm1202 = vcmp.eq.s32.totalorder %v447, %v416
        %vm1203 = vcmp.eq.s32.totalorder %v453, %v415
        %vm1204 = vcmp.eq.s32.totalorder %v453, %v416
        %vm1205 = vcmp.eq.s32.totalorder %v459, %v415
        %vm1206 = vcmp.eq.s32.totalorder %v459, %v416
        %vm1207 = vcmp.eq.s32.totalorder %v465, %v415
        %vm1208 = vcmp.eq.s32.totalorder %v465, %v416
        %vm1209 = vcmp.eq.s32.totalorder %v471, %v415
        %vm1210 = vcmp.eq.s32.totalorder %v471, %v416
        %vm1211 = vcmp.eq.s32.totalorder %v477, %v415
        %vm1212 = vcmp.eq.s32.totalorder %v477, %v416
        %vm1213 = vcmp.eq.s32.totalorder %v483, %v415
        %vm1214 = vcmp.eq.s32.totalorder %v483, %v416
        %vm1215 = vcmp.eq.s32.totalorder %v489, %v415
        %vm1216 = vcmp.eq.s32.totalorder %v489, %v416
        %vm1217 = vcmp.eq.s32.totalorder %v495, %v415
        %vm1218 = vcmp.eq.s32.totalorder %v495, %v416
        %vm1219 = vcmp.eq.s32.totalorder %v501, %v415
        %vm1220 = vcmp.eq.s32.totalorder %v501, %v416
        %vm1221 = vcmp.eq.s32.totalorder %v507, %v415
        %vm1222 = vcmp.eq.s32.totalorder %v507, %v416
        %vm1223 = vcmp.eq.s32.totalorder %v513, %v415
        %vm1224 = vcmp.eq.s32.totalorder %v513, %v416
        %vm1225 = vcmp.eq.s32.totalorder %v520, %v415
        %vm1226 = vcmp.eq.s32.totalorder %v520, %v416
        %vm1227 = vcmp.eq.s32.totalorder %v526, %v415
        %vm1228 = vcmp.eq.s32.totalorder %v526, %v416
        %vm1229 = vcmp.eq.s32.totalorder %v532, %v415
        %vm1230 = vcmp.eq.s32.totalorder %v532, %v416
        %vm1231 = vcmp.eq.s32.totalorder %v538, %v415
        %vm1232 = vcmp.eq.s32.totalorder %v538, %v416
        %vm1233 = vcmp.eq.s32.totalorder %v544, %v415
        %vm1234 = vcmp.eq.s32.totalorder %v544, %v416
        %vm1235 = vcmp.eq.s32.totalorder %v550, %v415
        %vm1236 = vcmp.eq.s32.totalorder %v550, %v416
        %vm1237 = vcmp.eq.s32.totalorder %v556, %v415
        %vm1238 = vcmp.eq.s32.totalorder %v556, %v416
        %vm1239 = vcmp.eq.s32.totalorder %v562, %v415
        %vm1240 = vcmp.eq.s32.totalorder %v562, %v416
        %vm1241 = vcmp.eq.s32.totalorder %v568, %v415
        %vm1242 = vcmp.eq.s32.totalorder %v568, %v416
        %vm1243 = vcmp.eq.s32.totalorder %v574, %v415
        %vm1244 = vcmp.eq.s32.totalorder %v574, %v416
        %vm1245 = vcmp.eq.s32.totalorder %v580, %v415
        %vm1246 = vcmp.eq.s32.totalorder %v580, %v416
        %vm1247 = vcmp.eq.s32.totalorder %v586, %v415
        %vm1248 = vcmp.eq.s32.totalorder %v586, %v416
        %vm1249 = vcmp.eq.s32.totalorder %v592, %v415
        %vm1250 = vcmp.eq.s32.totalorder %v592, %v416
        %vm1251 = vcmp.eq.s32.totalorder %v598, %v415
        %vm1252 = vcmp.eq.s32.totalorder %v598, %v416
        %vm1253 = vcmp.eq.s32.totalorder %v604, %v415
        %vm1254 = vcmp.eq.s32.totalorder %v604, %v416
        %vm1255 = vcmp.eq.s32.totalorder %v610, %v415
        %vm1256 = vcmp.eq.s32.totalorder %v610, %v416
        %vm1257 = vcmp.eq.s32.totalorder %v617, %v415
        %vm1258 = vcmp.eq.s32.totalorder %v617, %v416
        %vm1259 = vcmp.eq.s32.totalorder %v623, %v415
        %vm1260 = vcmp.eq.s32.totalorder %v623, %v416
        %vm1261 = vcmp.eq.s32.totalorder %v629, %v415
        %vm1262 = vcmp.eq.s32.totalorder %v629, %v416
        %vm1263 = vcmp.eq.s32.totalorder %v635, %v415
        %vm1264 = vcmp.eq.s32.totalorder %v635, %v416
        %vm1265 = vcmp.eq.s32.totalorder %v641, %v415
        %vm1266 = vcmp.eq.s32.totalorder %v641, %v416
        %vm1267 = vcmp.eq.s32.totalorder %v647, %v415
        %vm1268 = vcmp.eq.s32.totalorder %v647, %v416
        %vm1269 = vcmp.eq.s32.totalorder %v653, %v415
        %vm1270 = vcmp.eq.s32.totalorder %v653, %v416
        %vm1271 = vcmp.eq.s32.totalorder %v659, %v415
        %vm1272 = vcmp.eq.s32.totalorder %v659, %v416
        %vm1273 = vcmp.eq.s32.totalorder %v665, %v415
        %vm1274 = vcmp.eq.s32.totalorder %v665, %v416
        %vm1275 = vcmp.eq.s32.totalorder %v671, %v415
        %vm1276 = vcmp.eq.s32.totalorder %v671, %v416
        %vm1277 = vcmp.eq.s32.totalorder %v677, %v415
        %vm1278 = vcmp.eq.s32.totalorder %v677, %v416
        %vm1279 = vcmp.eq.s32.totalorder %v683, %v415
        %vm1280 = vcmp.eq.s32.totalorder %v683, %v416
        %vm1281 = vcmp.eq.s32.totalorder %v689, %v415
        %vm1282 = vcmp.eq.s32.totalorder %v689, %v416
        %vm1283 = vcmp.eq.s32.totalorder %v695, %v415
        %vm1284 = vcmp.eq.s32.totalorder %v695, %v416
        %vm1285 = vcmp.eq.s32.totalorder %v701, %v415
        %vm1286 = vcmp.eq.s32.totalorder %v701, %v416
        %vm1287 = vcmp.eq.s32.totalorder %v707, %v415
        %vm1288 = vcmp.eq.s32.totalorder %v707, %v416
        %vm1289 = vcmp.eq.s32.totalorder %v714, %v415
        %vm1290 = vcmp.eq.s32.totalorder %v714, %v416
        %vm1291 = vcmp.eq.s32.totalorder %v720, %v415
        %vm1292 = vcmp.eq.s32.totalorder %v720, %v416
        %vm1293 = vcmp.eq.s32.totalorder %v726, %v415
        %vm1294 = vcmp.eq.s32.totalorder %v726, %v416
        %vm1295 = vcmp.eq.s32.totalorder %v732, %v415
        %vm1296 = vcmp.eq.s32.totalorder %v732, %v416
        %vm1297 = vcmp.eq.s32.totalorder %v738, %v415
        %vm1298 = vcmp.eq.s32.totalorder %v738, %v416
        %vm1299 = vcmp.eq.s32.totalorder %v744, %v415
        %vm1300 = vcmp.eq.s32.totalorder %v744, %v416
        %vm1301 = vcmp.eq.s32.totalorder %v750, %v415
        %vm1302 = vcmp.eq.s32.totalorder %v750, %v416
        %vm1303 = vcmp.eq.s32.totalorder %v756, %v415
        %vm1304 = vcmp.eq.s32.totalorder %v756, %v416
        %vm1305 = vcmp.eq.s32.totalorder %v762, %v415
        %vm1306 = vcmp.eq.s32.totalorder %v762, %v416
        %vm1307 = vcmp.eq.s32.totalorder %v768, %v415
        %vm1308 = vcmp.eq.s32.totalorder %v768, %v416
        %vm1309 = vcmp.eq.s32.totalorder %v774, %v415
        %vm1310 = vcmp.eq.s32.totalorder %v774, %v416
        %vm1311 = vcmp.eq.s32.totalorder %v780, %v415
        %vm1312 = vcmp.eq.s32.totalorder %v780, %v416
        %vm1313 = vcmp.eq.s32.totalorder %v786, %v415
        %vm1314 = vcmp.eq.s32.totalorder %v786, %v416
        %vm1315 = vcmp.eq.s32.totalorder %v792, %v415
        %vm1316 = vcmp.eq.s32.totalorder %v792, %v416
        %vm1317 = vcmp.eq.s32.totalorder %v798, %v415
        %vm1318 = vcmp.eq.s32.totalorder %v798, %v416
        %vm1319 = vcmp.eq.s32.totalorder %v804, %v415
        %vm1320 = vcmp.eq.s32.totalorder %v804, %v416
        %vm1321 = vcmp.eq.s32.totalorder %v811, %v415
        %vm1322 = vcmp.eq.s32.totalorder %v811, %v416
        %vm1323 = vcmp.eq.s32.totalorder %v817, %v415
        %vm1324 = vcmp.eq.s32.totalorder %v817, %v416
        %vm1325 = vcmp.eq.s32.totalorder %v823, %v415
        %vm1326 = vcmp.eq.s32.totalorder %v823, %v416
        %vm1327 = vcmp.eq.s32.totalorder %v829, %v415
        %vm1328 = vcmp.eq.s32.totalorder %v829, %v416
        %vm1329 = vcmp.eq.s32.totalorder %v835, %v415
        %vm1330 = vcmp.eq.s32.totalorder %v835, %v416
        %vm1331 = vcmp.eq.s32.totalorder %v841, %v415
        %vm1332 = vcmp.eq.s32.totalorder %v841, %v416
        %vm1333 = vcmp.eq.s32.totalorder %v847, %v415
        %vm1334 = vcmp.eq.s32.totalorder %v847, %v416
        %vm1335 = vcmp.eq.s32.totalorder %v853, %v415
        %vm1336 = vcmp.eq.s32.totalorder %v853, %v416
        %vm1337 = vcmp.eq.s32.totalorder %v859, %v415
        %vm1338 = vcmp.eq.s32.totalorder %v859, %v416
        %vm1339 = vcmp.eq.s32.totalorder %v865, %v415
        %vm1340 = vcmp.eq.s32.totalorder %v865, %v416
        %vm1341 = vcmp.eq.s32.totalorder %v871, %v415
        %vm1342 = vcmp.eq.s32.totalorder %v871, %v416
        %vm1343 = vcmp.eq.s32.totalorder %v877, %v415
        %vm1344 = vcmp.eq.s32.totalorder %v877, %v416
        %vm1345 = vcmp.eq.s32.totalorder %v883, %v415
        %vm1346 = vcmp.eq.s32.totalorder %v883, %v416
        %vm1347 = vcmp.eq.s32.totalorder %v889, %v415
        %vm1348 = vcmp.eq.s32.totalorder %v889, %v416
        %vm1349 = vcmp.eq.s32.totalorder %v895, %v415
        %vm1350 = vcmp.eq.s32.totalorder %v895, %v416
        %vm1351 = vcmp.eq.s32.totalorder %v901, %v415
        %vm1352 = vcmp.eq.s32.totalorder %v901, %v416
        %vm1353 = vcmp.eq.s32.totalorder %v908, %v415
        %vm1354 = vcmp.eq.s32.totalorder %v908, %v416
        %vm1355 = vcmp.eq.s32.totalorder %v914, %v415
        %vm1356 = vcmp.eq.s32.totalorder %v914, %v416
        %vm1357 = vcmp.eq.s32.totalorder %v920, %v415
        %vm1358 = vcmp.eq.s32.totalorder %v920, %v416
        %vm1359 = vcmp.eq.s32.totalorder %v926, %v415
        %vm1360 = vcmp.eq.s32.totalorder %v926, %v416
        %vm1361 = vcmp.eq.s32.totalorder %v932, %v415
        %vm1362 = vcmp.eq.s32.totalorder %v932, %v416
        %vm1363 = vcmp.eq.s32.totalorder %v938, %v415
        %vm1364 = vcmp.eq.s32.totalorder %v938, %v416
        %vm1365 = vcmp.eq.s32.totalorder %v944, %v415
        %vm1366 = vcmp.eq.s32.totalorder %v944, %v416
        %vm1367 = vcmp.eq.s32.totalorder %v950, %v415
        %vm1368 = vcmp.eq.s32.totalorder %v950, %v416
        %vm1369 = vcmp.eq.s32.totalorder %v956, %v415
        %vm1370 = vcmp.eq.s32.totalorder %v956, %v416
        %vm1371 = vcmp.eq.s32.totalorder %v962, %v415
        %vm1372 = vcmp.eq.s32.totalorder %v962, %v416
        %vm1373 = vcmp.eq.s32.totalorder %v968, %v415
        %vm1374 = vcmp.eq.s32.totalorder %v968, %v416
        %vm1375 = vcmp.eq.s32.totalorder %v974, %v415
        %vm1376 = vcmp.eq.s32.totalorder %v974, %v416
        %vm1377 = vcmp.eq.s32.totalorder %v980, %v415
        %vm1378 = vcmp.eq.s32.totalorder %v980, %v416
        %vm1379 = vcmp.eq.s32.totalorder %v986, %v415
        %vm1380 = vcmp.eq.s32.totalorder %v986, %v416
        %vm1381 = vcmp.eq.s32.totalorder %v992, %v415
        %vm1382 = vcmp.eq.s32.totalorder %v992, %v416
        %vm1383 = vcmp.eq.s32.totalorder %v998, %v415
        %vm1384 = vcmp.eq.s32.totalorder %v998, %v416
        %vm1385 = vcmp.eq.s32.totalorder %v1005, %v415
        %vm1386 = vcmp.eq.s32.totalorder %v1005, %v416
        %vm1387 = vcmp.eq.s32.totalorder %v1011, %v415
        %vm1388 = vcmp.eq.s32.totalorder %v1011, %v416
        %vm1389 = vcmp.eq.s32.totalorder %v1017, %v415
        %vm1390 = vcmp.eq.s32.totalorder %v1017, %v416
        %vm1391 = vcmp.eq.s32.totalorder %v1023, %v415
        %vm1392 = vcmp.eq.s32.totalorder %v1023, %v416
        %vm1393 = vcmp.eq.s32.totalorder %v1029, %v415
        %vm1394 = vcmp.eq.s32.totalorder %v1029, %v416
        %vm1395 = vcmp.eq.s32.totalorder %v1035, %v415
        %vm1396 = vcmp.eq.s32.totalorder %v1035, %v416
        %vm1397 = vcmp.eq.s32.totalorder %v1041, %v415
        %vm1398 = vcmp.eq.s32.totalorder %v1041, %v416
        %vm1399 = vcmp.eq.s32.totalorder %v1047, %v415
        %vm1400 = vcmp.eq.s32.totalorder %v1047, %v416
        %vm1401 = vcmp.eq.s32.totalorder %v1053, %v415
        %vm1402 = vcmp.eq.s32.totalorder %v1053, %v416
        %vm1403 = vcmp.eq.s32.totalorder %v1059, %v415
        %vm1404 = vcmp.eq.s32.totalorder %v1059, %v416
        %vm1405 = vcmp.eq.s32.totalorder %v1065, %v415
        %vm1406 = vcmp.eq.s32.totalorder %v1065, %v416
        %vm1407 = vcmp.eq.s32.totalorder %v1071, %v415
        %vm1408 = vcmp.eq.s32.totalorder %v1071, %v416
        %vm1409 = vcmp.eq.s32.totalorder %v1077, %v415
        %vm1410 = vcmp.eq.s32.totalorder %v1077, %v416
        %vm1411 = vcmp.eq.s32.totalorder %v1083, %v415
        %vm1412 = vcmp.eq.s32.totalorder %v1083, %v416
        %vm1413 = vcmp.eq.s32.totalorder %v1089, %v415
        %vm1414 = vcmp.eq.s32.totalorder %v1089, %v416
        %vm1415 = vcmp.eq.s32.totalorder %v1095, %v415
        %vm1416 = vcmp.eq.s32.totalorder %v1095, %v416
        %vm1417 = vcmp.eq.s32.totalorder %v1102, %v415
        %vm1418 = vcmp.eq.s32.totalorder %v1102, %v416
        %vm1419 = vcmp.eq.s32.totalorder %v1108, %v415
        %vm1420 = vcmp.eq.s32.totalorder %v1108, %v416
        %vm1421 = vcmp.eq.s32.totalorder %v1114, %v415
        %vm1422 = vcmp.eq.s32.totalorder %v1114, %v416
        %vm1423 = vcmp.eq.s32.totalorder %v1120, %v415
        %vm1424 = vcmp.eq.s32.totalorder %v1120, %v416
        %vm1425 = vcmp.eq.s32.totalorder %v1126, %v415
        %vm1426 = vcmp.eq.s32.totalorder %v1126, %v416
        %vm1427 = vcmp.eq.s32.totalorder %v1132, %v415
        %vm1428 = vcmp.eq.s32.totalorder %v1132, %v416
        %vm1429 = vcmp.eq.s32.totalorder %v1138, %v415
        %vm1430 = vcmp.eq.s32.totalorder %v1138, %v416
        %vm1431 = vcmp.eq.s32.totalorder %v1144, %v415
        %vm1432 = vcmp.eq.s32.totalorder %v1144, %v416
        %vm1433 = vcmp.eq.s32.totalorder %v1150, %v415
        %vm1434 = vcmp.eq.s32.totalorder %v1150, %v416
        %vm1435 = vcmp.eq.s32.totalorder %v1156, %v415
        %vm1436 = vcmp.eq.s32.totalorder %v1156, %v416
        %vm1437 = vcmp.eq.s32.totalorder %v1162, %v415
        %vm1438 = vcmp.eq.s32.totalorder %v1162, %v416
        %vm1439 = vcmp.eq.s32.totalorder %v1168, %v415
        %vm1440 = vcmp.eq.s32.totalorder %v1168, %v416
        %vm1441 = vcmp.eq.s32.totalorder %v1174, %v415
        %vm1442 = vcmp.eq.s32.totalorder %v1174, %v416
        %vm1443 = vcmp.eq.s32.totalorder %v1180, %v415
        %vm1444 = vcmp.eq.s32.totalorder %v1180, %v416
        %vm1445 = vcmp.eq.s32.totalorder %v1186, %v415
        %vm1446 = vcmp.eq.s32.totalorder %v1186, %v416
        %vm1447 = vcmp.eq.s32.totalorder %v1192, %v415
        %vm1448 = vcmp.eq.s32.totalorder %v1192, %v416
        %v1449 = vsel %vm1193, 1, 0
        %v1450 = vsel %vm1194, 1, 0
        %v1451 = vsel %vm1195, 1, 0
        %v1452 = vsel %vm1196, 1, 0
        %v1453 = vsel %vm1197, 1, 0
        %v1454 = vsel %vm1198, 1, 0
        %v1455 = vsel %vm1199, 1, 0
        %v1456 = vsel %vm1200, 1, 0
        %v1457 = vsel %vm1201, 1, 0
        %v1458 = vsel %vm1202, 1, 0
        %v1459 = vsel %vm1203, 1, 0
        %v1460 = vsel %vm1204, 1, 0
        %v1461 = vsel %vm1205, 1, 0
        %v1462 = vsel %vm1206, 1, 0
        %v1463 = vsel %vm1207, 1, 0
        %v1464 = vsel %vm1208, 1, 0
        %v1465 = vsel %vm1209, 1, 0
        %v1466 = vsel %vm1210, 1, 0
        %v1467 = vsel %vm1211, 1, 0
        %v1468 = vsel %vm1212, 1, 0
        %v1469 = vsel %vm1213, 1, 0
        %v1470 = vsel %vm1214, 1, 0
        %v1471 = vsel %vm1215, 1, 0
        %v1472 = vsel %vm1216, 1, 0
        %v1473 = vsel %vm1217, 1, 0
        %v1474 = vsel %vm1218, 1, 0
        %v1475 = vsel %vm1219, 1, 0
        %v1476 = vsel %vm1220, 1, 0
        %v1477 = vsel %vm1221, 1, 0
        %v1478 = vsel %vm1222, 1, 0
        %v1479 = vsel %vm1223, 1, 0
        %v1480 = vsel %vm1224, 1, 0
        %v1481 = vsel %vm1225, 1, 0
        %v1482 = vsel %vm1226, 1, 0
        %v1483 = vsel %vm1227, 1, 0
        %v1484 = vsel %vm1228, 1, 0
        %v1485 = vsel %vm1229, 1, 0
        %v1486 = vsel %vm1230, 1, 0
        %v1487 = vsel %vm1231, 1, 0
        %v1488 = vsel %vm1232, 1, 0
        %v1489 = vsel %vm1233, 1, 0
        %v1490 = vsel %vm1234, 1, 0
        %v1491 = vsel %vm1235, 1, 0
        %v1492 = vsel %vm1236, 1, 0
        %v1493 = vsel %vm1237, 1, 0
        %v1494 = vsel %vm1238, 1, 0
        %v1495 = vsel %vm1239, 1, 0
        %v1496 = vsel %vm1240, 1, 0
        %v1497 = vsel %vm1241, 1, 0
        %v1498 = vsel %vm1242, 1, 0
        %v1499 = vsel %vm1243, 1, 0
        %v1500 = vsel %vm1244, 1, 0
        %v1501 = vsel %vm1245, 1, 0
        %v1502 = vsel %vm1246, 1, 0
        %v1503 = vsel %vm1247, 1, 0
        %v1504 = vsel %vm1248, 1, 0
        %v1505 = vsel %vm1249, 1, 0
        %v1506 = vsel %vm1250, 1, 0
        %v1507 = vsel %vm1251, 1, 0
        %v1508 = vsel %vm1252, 1, 0
        %v1509 = vsel %vm1253, 1, 0
        %v1510 = vsel %vm1254, 1, 0
        %v1511 = vsel %vm1255, 1, 0
        %v1512 = vsel %vm1256, 1, 0
        %v1513 = vsel %vm1257, 1, 0
        %v1514 = vsel %vm1258, 1, 0
        %v1515 = vsel %vm1259, 1, 0
        %v1516 = vsel %vm1260, 1, 0
        %v1517 = vsel %vm1261, 1, 0
        %v1518 = vsel %vm1262, 1, 0
        %v1519 = vsel %vm1263, 1, 0
        %v1520 = vsel %vm1264, 1, 0
        %v1521 = vsel %vm1265, 1, 0
        %v1522 = vsel %vm1266, 1, 0
        %v1523 = vsel %vm1267, 1, 0
        %v1524 = vsel %vm1268, 1, 0
        %v1525 = vsel %vm1269, 1, 0
        %v1526 = vsel %vm1270, 1, 0
        %v1527 = vsel %vm1271, 1, 0
        %v1528 = vsel %vm1272, 1, 0
        %v1529 = vsel %vm1273, 1, 0
        %v1530 = vsel %vm1274, 1, 0
        %v1531 = vsel %vm1275, 1, 0
        %v1532 = vsel %vm1276, 1, 0
        %v1533 = vsel %vm1277, 1, 0
        %v1534 = vsel %vm1278, 1, 0
        %v1535 = vsel %vm1279, 1, 0
        %v1536 = vsel %vm1280, 1, 0
        %v1537 = vsel %vm1281, 1, 0
        %v1538 = vsel %vm1282, 1, 0
        %v1539 = vsel %vm1283, 1, 0
        %v1540 = vsel %vm1284, 1, 0
        %v1541 = vsel %vm1285, 1, 0
        %v1542 = vsel %vm1286, 1, 0
        %v1543 = vsel %vm1287, 1, 0
        %v1544 = vsel %vm1288, 1, 0
        %v1545 = vsel %vm1289, 1, 0
        %v1546 = vsel %vm1290, 1, 0
        %v1547 = vsel %vm1291, 1, 0
        %v1548 = vsel %vm1292, 1, 0
        %v1549 = vsel %vm1293, 1, 0
        %v1550 = vsel %vm1294, 1, 0
        %v1551 = vsel %vm1295, 1, 0
        %v1552 = vsel %vm1296, 1, 0
        %v1553 = vsel %vm1297, 1, 0
        %v1554 = vsel %vm1298, 1, 0
        %v1555 = vsel %vm1299, 1, 0
        %v1556 = vsel %vm1300, 1, 0
        %v1557 = vsel %vm1301, 1, 0
        %v1558 = vsel %vm1302, 1, 0
        %v1559 = vsel %vm1303, 1, 0
        %v1560 = vsel %vm1304, 1, 0
        %v1561 = vsel %vm1305, 1, 0
        %v1562 = vsel %vm1306, 1, 0
        %v1563 = vsel %vm1307, 1, 0
        %v1564 = vsel %vm1308, 1, 0
        %v1565 = vsel %vm1309, 1, 0
        %v1566 = vsel %vm1310, 1, 0
        %v1567 = vsel %vm1311, 1, 0
        %v1568 = vsel %vm1312, 1, 0
        %v1569 = vsel %vm1313, 1, 0
        %v1570 = vsel %vm1314, 1, 0
        %v1571 = vsel %vm1315, 1, 0
        %v1572 = vsel %vm1316, 1, 0
        %v1573 = vsel %vm1317, 1, 0
        %v1574 = vsel %vm1318, 1, 0
        %v1575 = vsel %vm1319, 1, 0
        %v1576 = vsel %vm1320, 1, 0
        %v1577 = vsel %vm1321, 1, 0
        %v1578 = vsel %vm1322, 1, 0
        %v1579 = vsel %vm1323, 1, 0
        %v1580 = vsel %vm1324, 1, 0
        %v1581 = vsel %vm1325, 1, 0
        %v1582 = vsel %vm1326, 1, 0
        %v1583 = vsel %vm1327, 1, 0
        %v1584 = vsel %vm1328, 1, 0
        %v1585 = vsel %vm1329, 1, 0
        %v1586 = vsel %vm1330, 1, 0
        %v1587 = vsel %vm1331, 1, 0
        %v1588 = vsel %vm1332, 1, 0
        %v1589 = vsel %vm1333, 1, 0
        %v1590 = vsel %vm1334, 1, 0
        %v1591 = vsel %vm1335, 1, 0
        %v1592 = vsel %vm1336, 1, 0
        %v1593 = vsel %vm1337, 1, 0
        %v1594 = vsel %vm1338, 1, 0
        %v1595 = vsel %vm1339, 1, 0
        %v1596 = vsel %vm1340, 1, 0
        %v1597 = vsel %vm1341, 1, 0
        %v1598 = vsel %vm1342, 1, 0
        %v1599 = vsel %vm1343, 1, 0
        %v1600 = vsel %vm1344, 1, 0
        %v1601 = vsel %vm1345, 1, 0
        %v1602 = vsel %vm1346, 1, 0
        %v1603 = vsel %vm1347, 1, 0
        %v1604 = vsel %vm1348, 1, 0
        %v1605 = vsel %vm1349, 1, 0
        %v1606 = vsel %vm1350, 1, 0
        %v1607 = vsel %vm1351, 1, 0
        %v1608 = vsel %vm1352, 1, 0
        %v1609 = vsel %vm1353, 1, 0
        %v1610 = vsel %vm1354, 1, 0
        %v1611 = vsel %vm1355, 1, 0
        %v1612 = vsel %vm1356, 1, 0
        %v1613 = vsel %vm1357, 1, 0
        %v1614 = vsel %vm1358, 1, 0
        %v1615 = vsel %vm1359, 1, 0
        %v1616 = vsel %vm1360, 1, 0
        %v1617 = vsel %vm1361, 1, 0
        %v1618 = vsel %vm1362, 1, 0
        %v1619 = vsel %vm1363, 1, 0
        %v1620 = vsel %vm1364, 1, 0
        %v1621 = vsel %vm1365, 1, 0
        %v1622 = vsel %vm1366, 1, 0
        %v1623 = vsel %vm1367, 1, 0
        %v1624 = vsel %vm1368, 1, 0
        %v1625 = vsel %vm1369, 1, 0
        %v1626 = vsel %vm1370, 1, 0
        %v1627 = vsel %vm1371, 1, 0
        %v1628 = vsel %vm1372, 1, 0
        %v1629 = vsel %vm1373, 1, 0
        %v1630 = vsel %vm1374, 1, 0
        %v1631 = vsel %vm1375, 1, 0
        %v1632 = vsel %vm1376, 1, 0
        %v1633 = vsel %vm1377, 1, 0
        %v1634 = vsel %vm1378, 1, 0
        %v1635 = vsel %vm1379, 1, 0
        %v1636 = vsel %vm1380, 1, 0
        %v1637 = vsel %vm1381, 1, 0
        %v1638 = vsel %vm1382, 1, 0
        %v1639 = vsel %vm1383, 1, 0
        %v1640 = vsel %vm1384, 1, 0
        %v1641 = vsel %vm1385, 1, 0
        %v1642 = vsel %vm1386, 1, 0
        %v1643 = vsel %vm1387, 1, 0
        %v1644 = vsel %vm1388, 1, 0
        %v1645 = vsel %vm1389, 1, 0
        %v1646 = vsel %vm1390, 1, 0
        %v1647 = vsel %vm1391, 1, 0
        %v1648 = vsel %vm1392, 1, 0
        %v1649 = vsel %vm1393, 1, 0
        %v1650 = vsel %vm1394, 1, 0
        %v1651 = vsel %vm1395, 1, 0
        %v1652 = vsel %vm1396, 1, 0
        %v1653 = vsel %vm1397, 1, 0
        %v1654 = vsel %vm1398, 1, 0
        %v1655 = vsel %vm1399, 1, 0
        %v1656 = vsel %vm1400, 1, 0
        %v1657 = vsel %vm1401, 1, 0
        %v1658 = vsel %vm1402, 1, 0
        %v1659 = vsel %vm1403, 1, 0
        %v1660 = vsel %vm1404, 1, 0
        %v1661 = vsel %vm1405, 1, 0
        %v1662 = vsel %vm1406, 1, 0
        %v1663 = vsel %vm1407, 1, 0
        %v1664 = vsel %vm1408, 1, 0
        %v1665 = vsel %vm1409, 1, 0
        %v1666 = vsel %vm1410, 1, 0
        %v1667 = vsel %vm1411, 1, 0
        %v1668 = vsel %vm1412, 1, 0
        %v1669 = vsel %vm1413, 1, 0
        %v1670 = vsel %vm1414, 1, 0
        %v1671 = vsel %vm1415, 1, 0
        %v1672 = vsel %vm1416, 1, 0
        %v1673 = vsel %vm1417, 1, 0
        %v1674 = vsel %vm1418, 1, 0
        %v1675 = vsel %vm1419, 1, 0
        %v1676 = vsel %vm1420, 1, 0
        %v1677 = vsel %vm1421, 1, 0
        %v1678 = vsel %vm1422, 1, 0
        %v1679 = vsel %vm1423, 1, 0
        %v1680 = vsel %vm1424, 1, 0
        %v1681 = vsel %vm1425, 1, 0
        %v1682 = vsel %vm1426, 1, 0
        %v1683 = vsel %vm1427, 1, 0
        %v1684 = vsel %vm1428, 1, 0
        %v1685 = vsel %vm1429, 1, 0
        %v1686 = vsel %vm1430, 1, 0
        %v1687 = vsel %vm1431, 1, 0
        %v1688 = vsel %vm1432, 1, 0
        %v1689 = vsel %vm1433, 1, 0
        %v1690 = vsel %vm1434, 1, 0
        %v1691 = vsel %vm1435, 1, 0
        %v1692 = vsel %vm1436, 1, 0
        %v1693 = vsel %vm1437, 1, 0
        %v1694 = vsel %vm1438, 1, 0
        %v1695 = vsel %vm1439, 1, 0
        %v1696 = vsel %vm1440, 1, 0
        %v1697 = vsel %vm1441, 1, 0
        %v1698 = vsel %vm1442, 1, 0
        %v1699 = vsel %vm1443, 1, 0
        %v1700 = vsel %vm1444, 1, 0
        %v1701 = vsel %vm1445, 1, 0
        %v1702 = vsel %vm1446, 1, 0
        %v1703 = vsel %vm1447, 1, 0
        %v1704 = vsel %vm1448, 1, 0
        %v1705 = vcvt.s32.f32 %v1449
        %v1706 = vcvt.s32.f32 %v1450
        %v1707 = vcvt.s32.f32 %v1451
        %v1708 = vcvt.s32.f32 %v1452
        %v1709 = vcvt.s32.f32 %v1453
        %v1710 = vcvt.s32.f32 %v1454
        %v1711 = vcvt.s32.f32 %v1455
        %v1712 = vcvt.s32.f32 %v1456
        %v1713 = vcvt.s32.f32 %v1457
        %v1714 = vcvt.s32.f32 %v1458
        %v1715 = vcvt.s32.f32 %v1459
        %v1716 = vcvt.s32.f32 %v1460
        %v1717 = vcvt.s32.f32 %v1461
        %v1718 = vcvt.s32.f32 %v1462
        %v1719 = vcvt.s32.f32 %v1463
        %v1720 = vcvt.s32.f32 %v1464
        %v1721 = vcvt.s32.f32 %v1465
        %v1722 = vcvt.s32.f32 %v1466
        %v1723 = vcvt.s32.f32 %v1467
        %v1724 = vcvt.s32.f32 %v1468
        %v1725 = vcvt.s32.f32 %v1469
        %v1726 = vcvt.s32.f32 %v1470
        %v1727 = vcvt.s32.f32 %v1471
        %v1728 = vcvt.s32.f32 %v1472
        %v1729 = vcvt.s32.f32 %v1473
        %v1730 = vcvt.s32.f32 %v1474
        %v1731 = vcvt.s32.f32 %v1475
        %v1732 = vcvt.s32.f32 %v1476
        %v1733 = vcvt.s32.f32 %v1477
        %v1734 = vcvt.s32.f32 %v1478
        %v1735 = vcvt.s32.f32 %v1479
        %v1736 = vcvt.s32.f32 %v1480
        %v1737 = vcvt.s32.f32 %v1481
        %v1738 = vcvt.s32.f32 %v1482
        %v1739 = vcvt.s32.f32 %v1483
        %v1740 = vcvt.s32.f32 %v1484
        %v1741 = vcvt.s32.f32 %v1485
        %v1742 = vcvt.s32.f32 %v1486
        %v1743 = vcvt.s32.f32 %v1487
        %v1744 = vcvt.s32.f32 %v1488
        %v1745 = vcvt.s32.f32 %v1489
        %v1746 = vcvt.s32.f32 %v1490
        %v1747 = vcvt.s32.f32 %v1491
        %v1748 = vcvt.s32.f32 %v1492
        %v1749 = vcvt.s32.f32 %v1493
        %v1750 = vcvt.s32.f32 %v1494
        %v1751 = vcvt.s32.f32 %v1495
        %v1752 = vcvt.s32.f32 %v1496
        %v1753 = vcvt.s32.f32 %v1497
        %v1754 = vcvt.s32.f32 %v1498
        %v1755 = vcvt.s32.f32 %v1499
        %v1756 = vcvt.s32.f32 %v1500
        %v1757 = vcvt.s32.f32 %v1501
        %v1758 = vcvt.s32.f32 %v1502
        %v1759 = vcvt.s32.f32 %v1503
        %v1760 = vcvt.s32.f32 %v1504
        %v1761 = vcvt.s32.f32 %v1505
        %v1762 = vcvt.s32.f32 %v1506
        %v1763 = vcvt.s32.f32 %v1507
        %v1764 = vcvt.s32.f32 %v1508
        %v1765 = vcvt.s32.f32 %v1509
        %v1766 = vcvt.s32.f32 %v1510
        %v1767 = vcvt.s32.f32 %v1511
        %v1768 = vcvt.s32.f32 %v1512
        %v1769 = vcvt.s32.f32 %v1513
        %v1770 = vcvt.s32.f32 %v1514
        %v1771 = vcvt.s32.f32 %v1515
        %v1772 = vcvt.s32.f32 %v1516
        %v1773 = vcvt.s32.f32 %v1517
        %v1774 = vcvt.s32.f32 %v1518
        %v1775 = vcvt.s32.f32 %v1519
        %v1776 = vcvt.s32.f32 %v1520
        %v1777 = vcvt.s32.f32 %v1521
        %v1778 = vcvt.s32.f32 %v1522
        %v1779 = vcvt.s32.f32 %v1523
        %v1780 = vcvt.s32.f32 %v1524
        %v1781 = vcvt.s32.f32 %v1525
        %v1782 = vcvt.s32.f32 %v1526
        %v1783 = vcvt.s32.f32 %v1527
        %v1784 = vcvt.s32.f32 %v1528
        %v1785 = vcvt.s32.f32 %v1529
        %v1786 = vcvt.s32.f32 %v1530
        %v1787 = vcvt.s32.f32 %v1531
        %v1788 = vcvt.s32.f32 %v1532
        %v1789 = vcvt.s32.f32 %v1533
        %v1790 = vcvt.s32.f32 %v1534
        %v1791 = vcvt.s32.f32 %v1535
        %v1792 = vcvt.s32.f32 %v1536
        %v1793 = vcvt.s32.f32 %v1537
        %v1794 = vcvt.s32.f32 %v1538
        %v1795 = vcvt.s32.f32 %v1539
        %v1796 = vcvt.s32.f32 %v1540
        %v1797 = vcvt.s32.f32 %v1541
        %v1798 = vcvt.s32.f32 %v1542
        %v1799 = vcvt.s32.f32 %v1543
        %v1800 = vcvt.s32.f32 %v1544
        %v1801 = vcvt.s32.f32 %v1545
        %v1802 = vcvt.s32.f32 %v1546
        %v1803 = vcvt.s32.f32 %v1547
        %v1804 = vcvt.s32.f32 %v1548
        %v1805 = vcvt.s32.f32 %v1549
        %v1806 = vcvt.s32.f32 %v1550
        %v1807 = vcvt.s32.f32 %v1551
        %v1808 = vcvt.s32.f32 %v1552
        %v1809 = vcvt.s32.f32 %v1553
        %v1810 = vcvt.s32.f32 %v1554
        %v1811 = vcvt.s32.f32 %v1555
        %v1812 = vcvt.s32.f32 %v1556
        %v1813 = vcvt.s32.f32 %v1557
        %v1814 = vcvt.s32.f32 %v1558
        %v1815 = vcvt.s32.f32 %v1559
        %v1816 = vcvt.s32.f32 %v1560
        %v1817 = vcvt.s32.f32 %v1561
        %v1818 = vcvt.s32.f32 %v1562
        %v1819 = vcvt.s32.f32 %v1563
        %v1820 = vcvt.s32.f32 %v1564
        %v1821 = vcvt.s32.f32 %v1565
        %v1822 = vcvt.s32.f32 %v1566
        %v1823 = vcvt.s32.f32 %v1567
        %v1824 = vcvt.s32.f32 %v1568
        %v1825 = vcvt.s32.f32 %v1569
        %v1826 = vcvt.s32.f32 %v1570
        %v1827 = vcvt.s32.f32 %v1571
        %v1828 = vcvt.s32.f32 %v1572
        %v1829 = vcvt.s32.f32 %v1573
        %v1830 = vcvt.s32.f32 %v1574
        %v1831 = vcvt.s32.f32 %v1575
        %v1832 = vcvt.s32.f32 %v1576
        %v1833 = vcvt.s32.f32 %v1577
        %v1834 = vcvt.s32.f32 %v1578
        %v1835 = vcvt.s32.f32 %v1579
        %v1836 = vcvt.s32.f32 %v1580
        %v1837 = vcvt.s32.f32 %v1581
        %v1838 = vcvt.s32.f32 %v1582
        %v1839 = vcvt.s32.f32 %v1583
        %v1840 = vcvt.s32.f32 %v1584
        %v1841 = vcvt.s32.f32 %v1585
        %v1842 = vcvt.s32.f32 %v1586
        %v1843 = vcvt.s32.f32 %v1587
        %v1844 = vcvt.s32.f32 %v1588
        %v1845 = vcvt.s32.f32 %v1589
        %v1846 = vcvt.s32.f32 %v1590
        %v1847 = vcvt.s32.f32 %v1591
        %v1848 = vcvt.s32.f32 %v1592
        %v1849 = vcvt.s32.f32 %v1593
        %v1850 = vcvt.s32.f32 %v1594
        %v1851 = vcvt.s32.f32 %v1595
        %v1852 = vcvt.s32.f32 %v1596
        %v1853 = vcvt.s32.f32 %v1597
        %v1854 = vcvt.s32.f32 %v1598
        %v1855 = vcvt.s32.f32 %v1599
        %v1856 = vcvt.s32.f32 %v1600
        %v1857 = vcvt.s32.f32 %v1601
        %v1858 = vcvt.s32.f32 %v1602
        %v1859 = vcvt.s32.f32 %v1603
        %v1860 = vcvt.s32.f32 %v1604
        %v1861 = vcvt.s32.f32 %v1605
        %v1862 = vcvt.s32.f32 %v1606
        %v1863 = vcvt.s32.f32 %v1607
        %v1864 = vcvt.s32.f32 %v1608
        %v1865 = vcvt.s32.f32 %v1609
        %v1866 = vcvt.s32.f32 %v1610
        %v1867 = vcvt.s32.f32 %v1611
        %v1868 = vcvt.s32.f32 %v1612
        %v1869 = vcvt.s32.f32 %v1613
        %v1870 = vcvt.s32.f32 %v1614
        %v1871 = vcvt.s32.f32 %v1615
        %v1872 = vcvt.s32.f32 %v1616
        %v1873 = vcvt.s32.f32 %v1617
        %v1874 = vcvt.s32.f32 %v1618
        %v1875 = vcvt.s32.f32 %v1619
        %v1876 = vcvt.s32.f32 %v1620
        %v1877 = vcvt.s32.f32 %v1621
        %v1878 = vcvt.s32.f32 %v1622
        %v1879 = vcvt.s32.f32 %v1623
        %v1880 = vcvt.s32.f32 %v1624
        %v1881 = vcvt.s32.f32 %v1625
        %v1882 = vcvt.s32.f32 %v1626
        %v1883 = vcvt.s32.f32 %v1627
        %v1884 = vcvt.s32.f32 %v1628
        %v1885 = vcvt.s32.f32 %v1629
        %v1886 = vcvt.s32.f32 %v1630
        %v1887 = vcvt.s32.f32 %v1631
        %v1888 = vcvt.s32.f32 %v1632
        %v1889 = vcvt.s32.f32 %v1633
        %v1890 = vcvt.s32.f32 %v1634
        %v1891 = vcvt.s32.f32 %v1635
        %v1892 = vcvt.s32.f32 %v1636
        %v1893 = vcvt.s32.f32 %v1637
        %v1894 = vcvt.s32.f32 %v1638
        %v1895 = vcvt.s32.f32 %v1639
        %v1896 = vcvt.s32.f32 %v1640
        %v1897 = vcvt.s32.f32 %v1641
        %v1898 = vcvt.s32.f32 %v1642
        %v1899 = vcvt.s32.f32 %v1643
        %v1900 = vcvt.s32.f32 %v1644
        %v1901 = vcvt.s32.f32 %v1645
        %v1902 = vcvt.s32.f32 %v1646
        %v1903 = vcvt.s32.f32 %v1647
        %v1904 = vcvt.s32.f32 %v1648
        %v1905 = vcvt.s32.f32 %v1649
        %v1906 = vcvt.s32.f32 %v1650
        %v1907 = vcvt.s32.f32 %v1651
        %v1908 = vcvt.s32.f32 %v1652
        %v1909 = vcvt.s32.f32 %v1653
        %v1910 = vcvt.s32.f32 %v1654
        %v1911 = vcvt.s32.f32 %v1655
        %v1912 = vcvt.s32.f32 %v1656
        %v1913 = vcvt.s32.f32 %v1657
        %v1914 = vcvt.s32.f32 %v1658
        %v1915 = vcvt.s32.f32 %v1659
        %v1916 = vcvt.s32.f32 %v1660
        %v1917 = vcvt.s32.f32 %v1661
        %v1918 = vcvt.s32.f32 %v1662
        %v1919 = vcvt.s32.f32 %v1663
        %v1920 = vcvt.s32.f32 %v1664
        %v1921 = vcvt.s32.f32 %v1665
        %v1922 = vcvt.s32.f32 %v1666
        %v1923 = vcvt.s32.f32 %v1667
        %v1924 = vcvt.s32.f32 %v1668
        %v1925 = vcvt.s32.f32 %v1669
        %v1926 = vcvt.s32.f32 %v1670
        %v1927 = vcvt.s32.f32 %v1671
        %v1928 = vcvt.s32.f32 %v1672
        %v1929 = vcvt.s32.f32 %v1673
        %v1930 = vcvt.s32.f32 %v1674
        %v1931 = vcvt.s32.f32 %v1675
        %v1932 = vcvt.s32.f32 %v1676
        %v1933 = vcvt.s32.f32 %v1677
        %v1934 = vcvt.s32.f32 %v1678
        %v1935 = vcvt.s32.f32 %v1679
        %v1936 = vcvt.s32.f32 %v1680
        %v1937 = vcvt.s32.f32 %v1681
        %v1938 = vcvt.s32.f32 %v1682
        %v1939 = vcvt.s32.f32 %v1683
        %v1940 = vcvt.s32.f32 %v1684
        %v1941 = vcvt.s32.f32 %v1685
        %v1942 = vcvt.s32.f32 %v1686
        %v1943 = vcvt.s32.f32 %v1687
        %v1944 = vcvt.s32.f32 %v1688
        %v1945 = vcvt.s32.f32 %v1689
        %v1946 = vcvt.s32.f32 %v1690
        %v1947 = vcvt.s32.f32 %v1691
        %v1948 = vcvt.s32.f32 %v1692
        %v1949 = vcvt.s32.f32 %v1693
        %v1950 = vcvt.s32.f32 %v1694
        %v1951 = vcvt.s32.f32 %v1695
        %v1952 = vcvt.s32.f32 %v1696
        %v1953 = vcvt.s32.f32 %v1697
        %v1954 = vcvt.s32.f32 %v1698
        %v1955 = vcvt.s32.f32 %v1699
        %v1956 = vcvt.s32.f32 %v1700
        %v1957 = vcvt.s32.f32 %v1701
        %v1958 = vcvt.s32.f32 %v1702
        %v1959 = vcvt.s32.f32 %v1703
        %v1960 = vcvt.s32.f32 %v1704
        %v1961 = vld [vmem:[#allocation2] sm:$0xff]
        %v1962 = vld [vmem:[#allocation2 + $0x8] sm:$0xff]
        %v1963 = vperm.slane %v413, 0
        %v1964 = vlaneseq
        %v1965 = vshrl.u32 %v1964, 7
        %1967 = vset.pattern.permute.xlu0 %v1965
        %1968 = vperm.xlu0 %1967, %v1963
        %v1969 = vpop.permute.xlu0 %1968
        %v1970 = vlaneseq
        %v1971 = vshrl.u32 %v1970, 7
        %v1972 = vadd.s32 %v1971, 8
        %1973 = vset.pattern.permute.xlu0 %v1972
        %1974 = vperm.xlu0 %1973, %v1963
        %v1975 = vpop.permute.xlu0 %1974
        %v1976 = vlaneseq
        %v1977 = vshrl.u32 %v1976, 7
        %v1978 = vadd.s32 %v1977, 16
        %1979 = vset.pattern.permute.xlu0 %v1978
        %1980 = vperm.xlu0 %1979, %v1963
        %v1981 = vpop.permute.xlu0 %1980
        %v1982 = vlaneseq
        %v1983 = vshrl.u32 %v1982, 7
        %v1984 = vadd.s32 %v1983, 24
        %1985 = vset.pattern.permute.xlu0 %v1984
        %1986 = vperm.xlu0 %1985, %v1963
        %v1987 = vpop.permute.xlu0 %1986
        %v1988 = vlaneseq
        %v1989 = vshrl.u32 %v1988, 7
        %v1990 = vadd.s32 %v1989, 32
        %1991 = vset.pattern.permute.xlu0 %v1990
        %1992 = vperm.xlu0 %1991, %v1963
        %v1993 = vpop.permute.xlu0 %1992
        %v1994 = vlaneseq
        %v1995 = vshrl.u32 %v1994, 7
        %v1996 = vadd.s32 %v1995, 40
        %1997 = vset.pattern.permute.xlu0 %v1996
        %1998 = vperm.xlu0 %1997, %v1963
        %v1999 = vpop.permute.xlu0 %1998
        %v2000 = vlaneseq
        %v2001 = vshrl.u32 %v2000, 7
        %v2002 = vadd.s32 %v2001, 48
        %2003 = vset.pattern.permute.xlu0 %v2002
        %2004 = vperm.xlu0 %2003, %v1963
        %v2005 = vpop.permute.xlu0 %2004
        %v2006 = vlaneseq
        %v2007 = vshrl.u32 %v2006, 7
        %v2008 = vadd.s32 %v2007, 56
        %2009 = vset.pattern.permute.xlu0 %v2008
        %2010 = vperm.xlu0 %2009, %v1963
        %v2011 = vpop.permute.xlu0 %2010
        %v2012 = vlaneseq
        %v2013 = vshrl.u32 %v2012, 7
        %v2014 = vadd.s32 %v2013, 64
        %2015 = vset.pattern.permute.xlu0 %v2014
        %2016 = vperm.xlu0 %2015, %v1963
        %v2017 = vpop.permute.xlu0 %2016
        %v2018 = vlaneseq
        %v2019 = vshrl.u32 %v2018, 7
        %v2020 = vadd.s32 %v2019, 72
        %2021 = vset.pattern.permute.xlu0 %v2020
        %2022 = vperm.xlu0 %2021, %v1963
        %v2023 = vpop.permute.xlu0 %2022
        %v2024 = vlaneseq
        %v2025 = vshrl.u32 %v2024, 7
        %v2026 = vadd.s32 %v2025, 80
        %2027 = vset.pattern.permute.xlu0 %v2026
        %2028 = vperm.xlu0 %2027, %v1963
        %v2029 = vpop.permute.xlu0 %2028
        %v2030 = vlaneseq
        %v2031 = vshrl.u32 %v2030, 7
        %v2032 = vadd.s32 %v2031, 88
        %2033 = vset.pattern.permute.xlu0 %v2032
        %2034 = vperm.xlu0 %2033, %v1963
        %v2035 = vpop.permute.xlu0 %2034
        %v2036 = vlaneseq
        %v2037 = vshrl.u32 %v2036, 7
        %v2038 = vadd.s32 %v2037, 96
        %2039 = vset.pattern.permute.xlu0 %v2038
        %2040 = vperm.xlu0 %2039, %v1963
        %v2041 = vpop.permute.xlu0 %2040
        %v2042 = vlaneseq
        %v2043 = vshrl.u32 %v2042, 7
        %v2044 = vadd.s32 %v2043, 104
        %2045 = vset.pattern.permute.xlu0 %v2044
        %2046 = vperm.xlu0 %2045, %v1963
        %v2047 = vpop.permute.xlu0 %2046
        %v2048 = vlaneseq
        %v2049 = vshrl.u32 %v2048, 7
        %v2050 = vadd.s32 %v2049, 112
        %2051 = vset.pattern.permute.xlu0 %v2050
        %2052 = vperm.xlu0 %2051, %v1963
        %v2053 = vpop.permute.xlu0 %2052
        %v2054 = vlaneseq
        %v2055 = vshrl.u32 %v2054, 7
        %v2056 = vadd.s32 %v2055, 120
        %2057 = vset.pattern.permute.xlu0 %v2056
        %2058 = vperm.xlu0 %2057, %v1963
        %v2059 = vpop.permute.xlu0 %2058
        %v2060 = vperm.slane %v413, 1
        %v2061 = vlaneseq
        %v2062 = vshrl.u32 %v2061, 7
        %2064 = vset.pattern.permute.xlu0 %v2062
        %2065 = vperm.xlu0 %2064, %v2060
        %v2066 = vpop.permute.xlu0 %2065
        %v2067 = vlaneseq
        %v2068 = vshrl.u32 %v2067, 7
        %v2069 = vadd.s32 %v2068, 8
        %2070 = vset.pattern.permute.xlu0 %v2069
        %2071 = vperm.xlu0 %2070, %v2060
        %v2072 = vpop.permute.xlu0 %2071
        %v2073 = vlaneseq
        %v2074 = vshrl.u32 %v2073, 7
        %v2075 = vadd.s32 %v2074, 16
        %2076 = vset.pattern.permute.xlu0 %v2075
        %2077 = vperm.xlu0 %2076, %v2060
        %v2078 = vpop.permute.xlu0 %2077
        %v2079 = vlaneseq
        %v2080 = vshrl.u32 %v2079, 7
        %v2081 = vadd.s32 %v2080, 24
        %2082 = vset.pattern.permute.xlu0 %v2081
        %2083 = vperm.xlu0 %2082, %v2060
        %v2084 = vpop.permute.xlu0 %2083
        %v2085 = vlaneseq
        %v2086 = vshrl.u32 %v2085, 7
        %v2087 = vadd.s32 %v2086, 32
        %2088 = vset.pattern.permute.xlu0 %v2087
        %2089 = vperm.xlu0 %2088, %v2060
        %v2090 = vpop.permute.xlu0 %2089
        %v2091 = vlaneseq
        %v2092 = vshrl.u32 %v2091, 7
        %v2093 = vadd.s32 %v2092, 40
        %2094 = vset.pattern.permute.xlu0 %v2093
        %2095 = vperm.xlu0 %2094, %v2060
        %v2096 = vpop.permute.xlu0 %2095
        %v2097 = vlaneseq
        %v2098 = vshrl.u32 %v2097, 7
        %v2099 = vadd.s32 %v2098, 48
        %2100 = vset.pattern.permute.xlu0 %v2099
        %2101 = vperm.xlu0 %2100, %v2060
        %v2102 = vpop.permute.xlu0 %2101
        %v2103 = vlaneseq
        %v2104 = vshrl.u32 %v2103, 7
        %v2105 = vadd.s32 %v2104, 56
        %2106 = vset.pattern.permute.xlu0 %v2105
        %2107 = vperm.xlu0 %2106, %v2060
        %v2108 = vpop.permute.xlu0 %2107
        %v2109 = vlaneseq
        %v2110 = vshrl.u32 %v2109, 7
        %v2111 = vadd.s32 %v2110, 64
        %2112 = vset.pattern.permute.xlu0 %v2111
        %2113 = vperm.xlu0 %2112, %v2060
        %v2114 = vpop.permute.xlu0 %2113
        %v2115 = vlaneseq
        %v2116 = vshrl.u32 %v2115, 7
        %v2117 = vadd.s32 %v2116, 72
        %2118 = vset.pattern.permute.xlu0 %v2117
        %2119 = vperm.xlu0 %2118, %v2060
        %v2120 = vpop.permute.xlu0 %2119
        %v2121 = vlaneseq
        %v2122 = vshrl.u32 %v2121, 7
        %v2123 = vadd.s32 %v2122, 80
        %2124 = vset.pattern.permute.xlu0 %v2123
        %2125 = vperm.xlu0 %2124, %v2060
        %v2126 = vpop.permute.xlu0 %2125
        %v2127 = vlaneseq
        %v2128 = vshrl.u32 %v2127, 7
        %v2129 = vadd.s32 %v2128, 88
        %2130 = vset.pattern.permute.xlu0 %v2129
        %2131 = vperm.xlu0 %2130, %v2060
        %v2132 = vpop.permute.xlu0 %2131
        %v2133 = vlaneseq
        %v2134 = vshrl.u32 %v2133, 7
        %v2135 = vadd.s32 %v2134, 96
        %2136 = vset.pattern.permute.xlu0 %v2135
        %2137 = vperm.xlu0 %2136, %v2060
        %v2138 = vpop.permute.xlu0 %2137
        %v2139 = vlaneseq
        %v2140 = vshrl.u32 %v2139, 7
        %v2141 = vadd.s32 %v2140, 104
        %2142 = vset.pattern.permute.xlu0 %v2141
        %2143 = vperm.xlu0 %2142, %v2060
        %v2144 = vpop.permute.xlu0 %2143
        %v2145 = vlaneseq
        %v2146 = vshrl.u32 %v2145, 7
        %v2147 = vadd.s32 %v2146, 112
        %2148 = vset.pattern.permute.xlu0 %v2147
        %2149 = vperm.xlu0 %2148, %v2060
        %v2150 = vpop.permute.xlu0 %2149
        %v2151 = vlaneseq
        %v2152 = vshrl.u32 %v2151, 7
        %v2153 = vadd.s32 %v2152, 120
        %2154 = vset.pattern.permute.xlu0 %v2153
        %2155 = vperm.xlu0 %2154, %v2060
        %v2156 = vpop.permute.xlu0 %2155
        %v2157 = vperm.slane %v413, 2
        %v2158 = vlaneseq
        %v2159 = vshrl.u32 %v2158, 7
        %2161 = vset.pattern.permute.xlu0 %v2159
        %2162 = vperm.xlu0 %2161, %v2157
        %v2163 = vpop.permute.xlu0 %2162
        %v2164 = vlaneseq
        %v2165 = vshrl.u32 %v2164, 7
        %v2166 = vadd.s32 %v2165, 8
        %2167 = vset.pattern.permute.xlu0 %v2166
        %2168 = vperm.xlu0 %2167, %v2157
        %v2169 = vpop.permute.xlu0 %2168
        %v2170 = vlaneseq
        %v2171 = vshrl.u32 %v2170, 7
        %v2172 = vadd.s32 %v2171, 16
        %2173 = vset.pattern.permute.xlu0 %v2172
        %2174 = vperm.xlu0 %2173, %v2157
        %v2175 = vpop.permute.xlu0 %2174
        %v2176 = vlaneseq
        %v2177 = vshrl.u32 %v2176, 7
        %v2178 = vadd.s32 %v2177, 24
        %2179 = vset.pattern.permute.xlu0 %v2178
        %2180 = vperm.xlu0 %2179, %v2157
        %v2181 = vpop.permute.xlu0 %2180
        %v2182 = vlaneseq
        %v2183 = vshrl.u32 %v2182, 7
        %v2184 = vadd.s32 %v2183, 32
        %2185 = vset.pattern.permute.xlu0 %v2184
        %2186 = vperm.xlu0 %2185, %v2157
        %v2187 = vpop.permute.xlu0 %2186
        %v2188 = vlaneseq
        %v2189 = vshrl.u32 %v2188, 7
        %v2190 = vadd.s32 %v2189, 40
        %2191 = vset.pattern.permute.xlu0 %v2190
        %2192 = vperm.xlu0 %2191, %v2157
        %v2193 = vpop.permute.xlu0 %2192
        %v2194 = vlaneseq
        %v2195 = vshrl.u32 %v2194, 7
        %v2196 = vadd.s32 %v2195, 48
        %2197 = vset.pattern.permute.xlu0 %v2196
        %2198 = vperm.xlu0 %2197, %v2157
        %v2199 = vpop.permute.xlu0 %2198
        %v2200 = vlaneseq
        %v2201 = vshrl.u32 %v2200, 7
        %v2202 = vadd.s32 %v2201, 56
        %2203 = vset.pattern.permute.xlu0 %v2202
        %2204 = vperm.xlu0 %2203, %v2157
        %v2205 = vpop.permute.xlu0 %2204
        %v2206 = vlaneseq
        %v2207 = vshrl.u32 %v2206, 7
        %v2208 = vadd.s32 %v2207, 64
        %2209 = vset.pattern.permute.xlu0 %v2208
        %2210 = vperm.xlu0 %2209, %v2157
        %v2211 = vpop.permute.xlu0 %2210
        %v2212 = vlaneseq
        %v2213 = vshrl.u32 %v2212, 7
        %v2214 = vadd.s32 %v2213, 72
        %2215 = vset.pattern.permute.xlu0 %v2214
        %2216 = vperm.xlu0 %2215, %v2157
        %v2217 = vpop.permute.xlu0 %2216
        %v2218 = vlaneseq
        %v2219 = vshrl.u32 %v2218, 7
        %v2220 = vadd.s32 %v2219, 80
        %2221 = vset.pattern.permute.xlu0 %v2220
        %2222 = vperm.xlu0 %2221, %v2157
        %v2223 = vpop.permute.xlu0 %2222
        %v2224 = vlaneseq
        %v2225 = vshrl.u32 %v2224, 7
        %v2226 = vadd.s32 %v2225, 88
        %2227 = vset.pattern.permute.xlu0 %v2226
        %2228 = vperm.xlu0 %2227, %v2157
        %v2229 = vpop.permute.xlu0 %2228
        %v2230 = vlaneseq
        %v2231 = vshrl.u32 %v2230, 7
        %v2232 = vadd.s32 %v2231, 96
        %2233 = vset.pattern.permute.xlu0 %v2232
        %2234 = vperm.xlu0 %2233, %v2157
        %v2235 = vpop.permute.xlu0 %2234
        %v2236 = vlaneseq
        %v2237 = vshrl.u32 %v2236, 7
        %v2238 = vadd.s32 %v2237, 104
        %2239 = vset.pattern.permute.xlu0 %v2238
        %2240 = vperm.xlu0 %2239, %v2157
        %v2241 = vpop.permute.xlu0 %2240
        %v2242 = vlaneseq
        %v2243 = vshrl.u32 %v2242, 7
        %v2244 = vadd.s32 %v2243, 112
        %2245 = vset.pattern.permute.xlu0 %v2244
        %2246 = vperm.xlu0 %2245, %v2157
        %v2247 = vpop.permute.xlu0 %2246
        %v2248 = vlaneseq
        %v2249 = vshrl.u32 %v2248, 7
        %v2250 = vadd.s32 %v2249, 120
        %2251 = vset.pattern.permute.xlu0 %v2250
        %2252 = vperm.xlu0 %2251, %v2157
        %v2253 = vpop.permute.xlu0 %2252
        %v2254 = vperm.slane %v413, 3
        %v2255 = vlaneseq
        %v2256 = vshrl.u32 %v2255, 7
        %2258 = vset.pattern.permute.xlu0 %v2256
        %2259 = vperm.xlu0 %2258, %v2254
        %v2260 = vpop.permute.xlu0 %2259
        %v2261 = vlaneseq
        %v2262 = vshrl.u32 %v2261, 7
        %v2263 = vadd.s32 %v2262, 8
        %2264 = vset.pattern.permute.xlu0 %v2263
        %2265 = vperm.xlu0 %2264, %v2254
        %v2266 = vpop.permute.xlu0 %2265
        %v2267 = vlaneseq
        %v2268 = vshrl.u32 %v2267, 7
        %v2269 = vadd.s32 %v2268, 16
        %2270 = vset.pattern.permute.xlu0 %v2269
        %2271 = vperm.xlu0 %2270, %v2254
        %v2272 = vpop.permute.xlu0 %2271
        %v2273 = vlaneseq
        %v2274 = vshrl.u32 %v2273, 7
        %v2275 = vadd.s32 %v2274, 24
        %2276 = vset.pattern.permute.xlu0 %v2275
        %2277 = vperm.xlu0 %2276, %v2254
        %v2278 = vpop.permute.xlu0 %2277
        %v2279 = vlaneseq
        %v2280 = vshrl.u32 %v2279, 7
        %v2281 = vadd.s32 %v2280, 32
        %2282 = vset.pattern.permute.xlu0 %v2281
        %2283 = vperm.xlu0 %2282, %v2254
        %v2284 = vpop.permute.xlu0 %2283
        %v2285 = vlaneseq
        %v2286 = vshrl.u32 %v2285, 7
        %v2287 = vadd.s32 %v2286, 40
        %2288 = vset.pattern.permute.xlu0 %v2287
        %2289 = vperm.xlu0 %2288, %v2254
        %v2290 = vpop.permute.xlu0 %2289
        %v2291 = vlaneseq
        %v2292 = vshrl.u32 %v2291, 7
        %v2293 = vadd.s32 %v2292, 48
        %2294 = vset.pattern.permute.xlu0 %v2293
        %2295 = vperm.xlu0 %2294, %v2254
        %v2296 = vpop.permute.xlu0 %2295
        %v2297 = vlaneseq
        %v2298 = vshrl.u32 %v2297, 7
        %v2299 = vadd.s32 %v2298, 56
        %2300 = vset.pattern.permute.xlu0 %v2299
        %2301 = vperm.xlu0 %2300, %v2254
        %v2302 = vpop.permute.xlu0 %2301
        %v2303 = vlaneseq
        %v2304 = vshrl.u32 %v2303, 7
        %v2305 = vadd.s32 %v2304, 64
        %2306 = vset.pattern.permute.xlu0 %v2305
        %2307 = vperm.xlu0 %2306, %v2254
        %v2308 = vpop.permute.xlu0 %2307
        %v2309 = vlaneseq
        %v2310 = vshrl.u32 %v2309, 7
        %v2311 = vadd.s32 %v2310, 72
        %2312 = vset.pattern.permute.xlu0 %v2311
        %2313 = vperm.xlu0 %2312, %v2254
        %v2314 = vpop.permute.xlu0 %2313
        %v2315 = vlaneseq
        %v2316 = vshrl.u32 %v2315, 7
        %v2317 = vadd.s32 %v2316, 80
        %2318 = vset.pattern.permute.xlu0 %v2317
        %2319 = vperm.xlu0 %2318, %v2254
        %v2320 = vpop.permute.xlu0 %2319
        %v2321 = vlaneseq
        %v2322 = vshrl.u32 %v2321, 7
        %v2323 = vadd.s32 %v2322, 88
        %2324 = vset.pattern.permute.xlu0 %v2323
        %2325 = vperm.xlu0 %2324, %v2254
        %v2326 = vpop.permute.xlu0 %2325
        %v2327 = vlaneseq
        %v2328 = vshrl.u32 %v2327, 7
        %v2329 = vadd.s32 %v2328, 96
        %2330 = vset.pattern.permute.xlu0 %v2329
        %2331 = vperm.xlu0 %2330, %v2254
        %v2332 = vpop.permute.xlu0 %2331
        %v2333 = vlaneseq
        %v2334 = vshrl.u32 %v2333, 7
        %v2335 = vadd.s32 %v2334, 104
        %2336 = vset.pattern.permute.xlu0 %v2335
        %2337 = vperm.xlu0 %2336, %v2254
        %v2338 = vpop.permute.xlu0 %2337
        %v2339 = vlaneseq
        %v2340 = vshrl.u32 %v2339, 7
        %v2341 = vadd.s32 %v2340, 112
        %2342 = vset.pattern.permute.xlu0 %v2341
        %2343 = vperm.xlu0 %2342, %v2254
        %v2344 = vpop.permute.xlu0 %2343
        %v2345 = vlaneseq
        %v2346 = vshrl.u32 %v2345, 7
        %v2347 = vadd.s32 %v2346, 120
        %2348 = vset.pattern.permute.xlu0 %v2347
        %2349 = vperm.xlu0 %2348, %v2254
        %v2350 = vpop.permute.xlu0 %2349
        %v2351 = vperm.slane %v413, 4
        %v2352 = vlaneseq
        %v2353 = vshrl.u32 %v2352, 7
        %2355 = vset.pattern.permute.xlu0 %v2353
        %2356 = vperm.xlu0 %2355, %v2351
        %v2357 = vpop.permute.xlu0 %2356
        %v2358 = vlaneseq
        %v2359 = vshrl.u32 %v2358, 7
        %v2360 = vadd.s32 %v2359, 8
        %2361 = vset.pattern.permute.xlu0 %v2360
        %2362 = vperm.xlu0 %2361, %v2351
        %v2363 = vpop.permute.xlu0 %2362
        %v2364 = vlaneseq
        %v2365 = vshrl.u32 %v2364, 7
        %v2366 = vadd.s32 %v2365, 16
        %2367 = vset.pattern.permute.xlu0 %v2366
        %2368 = vperm.xlu0 %2367, %v2351
        %v2369 = vpop.permute.xlu0 %2368
        %v2370 = vlaneseq
        %v2371 = vshrl.u32 %v2370, 7
        %v2372 = vadd.s32 %v2371, 24
        %2373 = vset.pattern.permute.xlu0 %v2372
        %2374 = vperm.xlu0 %2373, %v2351
        %v2375 = vpop.permute.xlu0 %2374
        %v2376 = vlaneseq
        %v2377 = vshrl.u32 %v2376, 7
        %v2378 = vadd.s32 %v2377, 32
        %2379 = vset.pattern.permute.xlu0 %v2378
        %2380 = vperm.xlu0 %2379, %v2351
        %v2381 = vpop.permute.xlu0 %2380
        %v2382 = vlaneseq
        %v2383 = vshrl.u32 %v2382, 7
        %v2384 = vadd.s32 %v2383, 40
        %2385 = vset.pattern.permute.xlu0 %v2384
        %2386 = vperm.xlu0 %2385, %v2351
        %v2387 = vpop.permute.xlu0 %2386
        %v2388 = vlaneseq
        %v2389 = vshrl.u32 %v2388, 7
        %v2390 = vadd.s32 %v2389, 48
        %2391 = vset.pattern.permute.xlu0 %v2390
        %2392 = vperm.xlu0 %2391, %v2351
        %v2393 = vpop.permute.xlu0 %2392
        %v2394 = vlaneseq
        %v2395 = vshrl.u32 %v2394, 7
        %v2396 = vadd.s32 %v2395, 56
        %2397 = vset.pattern.permute.xlu0 %v2396
        %2398 = vperm.xlu0 %2397, %v2351
        %v2399 = vpop.permute.xlu0 %2398
        %v2400 = vlaneseq
        %v2401 = vshrl.u32 %v2400, 7
        %v2402 = vadd.s32 %v2401, 64
        %2403 = vset.pattern.permute.xlu0 %v2402
        %2404 = vperm.xlu0 %2403, %v2351
        %v2405 = vpop.permute.xlu0 %2404
        %v2406 = vlaneseq
        %v2407 = vshrl.u32 %v2406, 7
        %v2408 = vadd.s32 %v2407, 72
        %2409 = vset.pattern.permute.xlu0 %v2408
        %2410 = vperm.xlu0 %2409, %v2351
        %v2411 = vpop.permute.xlu0 %2410
        %v2412 = vlaneseq
        %v2413 = vshrl.u32 %v2412, 7
        %v2414 = vadd.s32 %v2413, 80
        %2415 = vset.pattern.permute.xlu0 %v2414
        %2416 = vperm.xlu0 %2415, %v2351
        %v2417 = vpop.permute.xlu0 %2416
        %v2418 = vlaneseq
        %v2419 = vshrl.u32 %v2418, 7
        %v2420 = vadd.s32 %v2419, 88
        %2421 = vset.pattern.permute.xlu0 %v2420
        %2422 = vperm.xlu0 %2421, %v2351
        %v2423 = vpop.permute.xlu0 %2422
        %v2424 = vlaneseq
        %v2425 = vshrl.u32 %v2424, 7
        %v2426 = vadd.s32 %v2425, 96
        %2427 = vset.pattern.permute.xlu0 %v2426
        %2428 = vperm.xlu0 %2427, %v2351
        %v2429 = vpop.permute.xlu0 %2428
        %v2430 = vlaneseq
        %v2431 = vshrl.u32 %v2430, 7
        %v2432 = vadd.s32 %v2431, 104
        %2433 = vset.pattern.permute.xlu0 %v2432
        %2434 = vperm.xlu0 %2433, %v2351
        %v2435 = vpop.permute.xlu0 %2434
        %v2436 = vlaneseq
        %v2437 = vshrl.u32 %v2436, 7
        %v2438 = vadd.s32 %v2437, 112
        %2439 = vset.pattern.permute.xlu0 %v2438
        %2440 = vperm.xlu0 %2439, %v2351
        %v2441 = vpop.permute.xlu0 %2440
        %v2442 = vlaneseq
        %v2443 = vshrl.u32 %v2442, 7
        %v2444 = vadd.s32 %v2443, 120
        %2445 = vset.pattern.permute.xlu0 %v2444
        %2446 = vperm.xlu0 %2445, %v2351
        %v2447 = vpop.permute.xlu0 %2446
        %v2448 = vperm.slane %v413, 5
        %v2449 = vlaneseq
        %v2450 = vshrl.u32 %v2449, 7
        %2452 = vset.pattern.permute.xlu0 %v2450
        %2453 = vperm.xlu0 %2452, %v2448
        %v2454 = vpop.permute.xlu0 %2453
        %v2455 = vlaneseq
        %v2456 = vshrl.u32 %v2455, 7
        %v2457 = vadd.s32 %v2456, 8
        %2458 = vset.pattern.permute.xlu0 %v2457
        %2459 = vperm.xlu0 %2458, %v2448
        %v2460 = vpop.permute.xlu0 %2459
        %v2461 = vlaneseq
        %v2462 = vshrl.u32 %v2461, 7
        %v2463 = vadd.s32 %v2462, 16
        %2464 = vset.pattern.permute.xlu0 %v2463
        %2465 = vperm.xlu0 %2464, %v2448
        %v2466 = vpop.permute.xlu0 %2465
        %v2467 = vlaneseq
        %v2468 = vshrl.u32 %v2467, 7
        %v2469 = vadd.s32 %v2468, 24
        %2470 = vset.pattern.permute.xlu0 %v2469
        %2471 = vperm.xlu0 %2470, %v2448
        %v2472 = vpop.permute.xlu0 %2471
        %v2473 = vlaneseq
        %v2474 = vshrl.u32 %v2473, 7
        %v2475 = vadd.s32 %v2474, 32
        %2476 = vset.pattern.permute.xlu0 %v2475
        %2477 = vperm.xlu0 %2476, %v2448
        %v2478 = vpop.permute.xlu0 %2477
        %v2479 = vlaneseq
        %v2480 = vshrl.u32 %v2479, 7
        %v2481 = vadd.s32 %v2480, 40
        %2482 = vset.pattern.permute.xlu0 %v2481
        %2483 = vperm.xlu0 %2482, %v2448
        %v2484 = vpop.permute.xlu0 %2483
        %v2485 = vlaneseq
        %v2486 = vshrl.u32 %v2485, 7
        %v2487 = vadd.s32 %v2486, 48
        %2488 = vset.pattern.permute.xlu0 %v2487
        %2489 = vperm.xlu0 %2488, %v2448
        %v2490 = vpop.permute.xlu0 %2489
        %v2491 = vlaneseq
        %v2492 = vshrl.u32 %v2491, 7
        %v2493 = vadd.s32 %v2492, 56
        %2494 = vset.pattern.permute.xlu0 %v2493
        %2495 = vperm.xlu0 %2494, %v2448
        %v2496 = vpop.permute.xlu0 %2495
        %v2497 = vlaneseq
        %v2498 = vshrl.u32 %v2497, 7
        %v2499 = vadd.s32 %v2498, 64
        %2500 = vset.pattern.permute.xlu0 %v2499
        %2501 = vperm.xlu0 %2500, %v2448
        %v2502 = vpop.permute.xlu0 %2501
        %v2503 = vlaneseq
        %v2504 = vshrl.u32 %v2503, 7
        %v2505 = vadd.s32 %v2504, 72
        %2506 = vset.pattern.permute.xlu0 %v2505
        %2507 = vperm.xlu0 %2506, %v2448
        %v2508 = vpop.permute.xlu0 %2507
        %v2509 = vlaneseq
        %v2510 = vshrl.u32 %v2509, 7
        %v2511 = vadd.s32 %v2510, 80
        %2512 = vset.pattern.permute.xlu0 %v2511
        %2513 = vperm.xlu0 %2512, %v2448
        %v2514 = vpop.permute.xlu0 %2513
        %v2515 = vlaneseq
        %v2516 = vshrl.u32 %v2515, 7
        %v2517 = vadd.s32 %v2516, 88
        %2518 = vset.pattern.permute.xlu0 %v2517
        %2519 = vperm.xlu0 %2518, %v2448
        %v2520 = vpop.permute.xlu0 %2519
        %v2521 = vlaneseq
        %v2522 = vshrl.u32 %v2521, 7
        %v2523 = vadd.s32 %v2522, 96
        %2524 = vset.pattern.permute.xlu0 %v2523
        %2525 = vperm.xlu0 %2524, %v2448
        %v2526 = vpop.permute.xlu0 %2525
        %v2527 = vlaneseq
        %v2528 = vshrl.u32 %v2527, 7
        %v2529 = vadd.s32 %v2528, 104
        %2530 = vset.pattern.permute.xlu0 %v2529
        %2531 = vperm.xlu0 %2530, %v2448
        %v2532 = vpop.permute.xlu0 %2531
        %v2533 = vlaneseq
        %v2534 = vshrl.u32 %v2533, 7
        %v2535 = vadd.s32 %v2534, 112
        %2536 = vset.pattern.permute.xlu0 %v2535
        %2537 = vperm.xlu0 %2536, %v2448
        %v2538 = vpop.permute.xlu0 %2537
        %v2539 = vlaneseq
        %v2540 = vshrl.u32 %v2539, 7
        %v2541 = vadd.s32 %v2540, 120
        %2542 = vset.pattern.permute.xlu0 %v2541
        %2543 = vperm.xlu0 %2542, %v2448
        %v2544 = vpop.permute.xlu0 %2543
        %v2545 = vperm.slane %v413, 6
        %v2546 = vlaneseq
        %v2547 = vshrl.u32 %v2546, 7
        %2549 = vset.pattern.permute.xlu0 %v2547
        %2550 = vperm.xlu0 %2549, %v2545
        %v2551 = vpop.permute.xlu0 %2550
        %v2552 = vlaneseq
        %v2553 = vshrl.u32 %v2552, 7
        %v2554 = vadd.s32 %v2553, 8
        %2555 = vset.pattern.permute.xlu0 %v2554
        %2556 = vperm.xlu0 %2555, %v2545
        %v2557 = vpop.permute.xlu0 %2556
        %v2558 = vlaneseq
        %v2559 = vshrl.u32 %v2558, 7
        %v2560 = vadd.s32 %v2559, 16
        %2561 = vset.pattern.permute.xlu0 %v2560
        %2562 = vperm.xlu0 %2561, %v2545
        %v2563 = vpop.permute.xlu0 %2562
        %v2564 = vlaneseq
        %v2565 = vshrl.u32 %v2564, 7
        %v2566 = vadd.s32 %v2565, 24
        %2567 = vset.pattern.permute.xlu0 %v2566
        %2568 = vperm.xlu0 %2567, %v2545
        %v2569 = vpop.permute.xlu0 %2568
        %v2570 = vlaneseq
        %v2571 = vshrl.u32 %v2570, 7
        %v2572 = vadd.s32 %v2571, 32
        %2573 = vset.pattern.permute.xlu0 %v2572
        %2574 = vperm.xlu0 %2573, %v2545
        %v2575 = vpop.permute.xlu0 %2574
        %v2576 = vlaneseq
        %v2577 = vshrl.u32 %v2576, 7
        %v2578 = vadd.s32 %v2577, 40
        %2579 = vset.pattern.permute.xlu0 %v2578
        %2580 = vperm.xlu0 %2579, %v2545
        %v2581 = vpop.permute.xlu0 %2580
        %v2582 = vlaneseq
        %v2583 = vshrl.u32 %v2582, 7
        %v2584 = vadd.s32 %v2583, 48
        %2585 = vset.pattern.permute.xlu0 %v2584
        %2586 = vperm.xlu0 %2585, %v2545
        %v2587 = vpop.permute.xlu0 %2586
        %v2588 = vlaneseq
        %v2589 = vshrl.u32 %v2588, 7
        %v2590 = vadd.s32 %v2589, 56
        %2591 = vset.pattern.permute.xlu0 %v2590
        %2592 = vperm.xlu0 %2591, %v2545
        %v2593 = vpop.permute.xlu0 %2592
        %v2594 = vlaneseq
        %v2595 = vshrl.u32 %v2594, 7
        %v2596 = vadd.s32 %v2595, 64
        %2597 = vset.pattern.permute.xlu0 %v2596
        %2598 = vperm.xlu0 %2597, %v2545
        %v2599 = vpop.permute.xlu0 %2598
        %v2600 = vlaneseq
        %v2601 = vshrl.u32 %v2600, 7
        %v2602 = vadd.s32 %v2601, 72
        %2603 = vset.pattern.permute.xlu0 %v2602
        %2604 = vperm.xlu0 %2603, %v2545
        %v2605 = vpop.permute.xlu0 %2604
        %v2606 = vlaneseq
        %v2607 = vshrl.u32 %v2606, 7
        %v2608 = vadd.s32 %v2607, 80
        %2609 = vset.pattern.permute.xlu0 %v2608
        %2610 = vperm.xlu0 %2609, %v2545
        %v2611 = vpop.permute.xlu0 %2610
        %v2612 = vlaneseq
        %v2613 = vshrl.u32 %v2612, 7
        %v2614 = vadd.s32 %v2613, 88
        %2615 = vset.pattern.permute.xlu0 %v2614
        %2616 = vperm.xlu0 %2615, %v2545
        %v2617 = vpop.permute.xlu0 %2616
        %v2618 = vlaneseq
        %v2619 = vshrl.u32 %v2618, 7
        %v2620 = vadd.s32 %v2619, 96
        %2621 = vset.pattern.permute.xlu0 %v2620
        %2622 = vperm.xlu0 %2621, %v2545
        %v2623 = vpop.permute.xlu0 %2622
        %v2624 = vlaneseq
        %v2625 = vshrl.u32 %v2624, 7
        %v2626 = vadd.s32 %v2625, 104
        %2627 = vset.pattern.permute.xlu0 %v2626
        %2628 = vperm.xlu0 %2627, %v2545
        %v2629 = vpop.permute.xlu0 %2628
        %v2630 = vlaneseq
        %v2631 = vshrl.u32 %v2630, 7
        %v2632 = vadd.s32 %v2631, 112
        %2633 = vset.pattern.permute.xlu0 %v2632
        %2634 = vperm.xlu0 %2633, %v2545
        %v2635 = vpop.permute.xlu0 %2634
        %v2636 = vlaneseq
        %v2637 = vshrl.u32 %v2636, 7
        %v2638 = vadd.s32 %v2637, 120
        %2639 = vset.pattern.permute.xlu0 %v2638
        %2640 = vperm.xlu0 %2639, %v2545
        %v2641 = vpop.permute.xlu0 %2640
        %v2642 = vperm.slane %v413, 7
        %v2643 = vlaneseq
        %v2644 = vshrl.u32 %v2643, 7
        %2646 = vset.pattern.permute.xlu0 %v2644
        %2647 = vperm.xlu0 %2646, %v2642
        %v2648 = vpop.permute.xlu0 %2647
        %v2649 = vlaneseq
        %v2650 = vshrl.u32 %v2649, 7
        %v2651 = vadd.s32 %v2650, 8
        %2652 = vset.pattern.permute.xlu0 %v2651
        %2653 = vperm.xlu0 %2652, %v2642
        %v2654 = vpop.permute.xlu0 %2653
        %v2655 = vlaneseq
        %v2656 = vshrl.u32 %v2655, 7
        %v2657 = vadd.s32 %v2656, 16
        %2658 = vset.pattern.permute.xlu0 %v2657
        %2659 = vperm.xlu0 %2658, %v2642
        %v2660 = vpop.permute.xlu0 %2659
        %v2661 = vlaneseq
        %v2662 = vshrl.u32 %v2661, 7
        %v2663 = vadd.s32 %v2662, 24
        %2664 = vset.pattern.permute.xlu0 %v2663
        %2665 = vperm.xlu0 %2664, %v2642
        %v2666 = vpop.permute.xlu0 %2665
        %v2667 = vlaneseq
        %v2668 = vshrl.u32 %v2667, 7
        %v2669 = vadd.s32 %v2668, 32
        %2670 = vset.pattern.permute.xlu0 %v2669
        %2671 = vperm.xlu0 %2670, %v2642
        %v2672 = vpop.permute.xlu0 %2671
        %v2673 = vlaneseq
        %v2674 = vshrl.u32 %v2673, 7
        %v2675 = vadd.s32 %v2674, 40
        %2676 = vset.pattern.permute.xlu0 %v2675
        %2677 = vperm.xlu0 %2676, %v2642
        %v2678 = vpop.permute.xlu0 %2677
        %v2679 = vlaneseq
        %v2680 = vshrl.u32 %v2679, 7
        %v2681 = vadd.s32 %v2680, 48
        %2682 = vset.pattern.permute.xlu0 %v2681
        %2683 = vperm.xlu0 %2682, %v2642
        %v2684 = vpop.permute.xlu0 %2683
        %v2685 = vlaneseq
        %v2686 = vshrl.u32 %v2685, 7
        %v2687 = vadd.s32 %v2686, 56
        %2688 = vset.pattern.permute.xlu0 %v2687
        %2689 = vperm.xlu0 %2688, %v2642
        %v2690 = vpop.permute.xlu0 %2689
        %v2691 = vlaneseq
        %v2692 = vshrl.u32 %v2691, 7
        %v2693 = vadd.s32 %v2692, 64
        %2694 = vset.pattern.permute.xlu0 %v2693
        %2695 = vperm.xlu0 %2694, %v2642
        %v2696 = vpop.permute.xlu0 %2695
        %v2697 = vlaneseq
        %v2698 = vshrl.u32 %v2697, 7
        %v2699 = vadd.s32 %v2698, 72
        %2700 = vset.pattern.permute.xlu0 %v2699
        %2701 = vperm.xlu0 %2700, %v2642
        %v2702 = vpop.permute.xlu0 %2701
        %v2703 = vlaneseq
        %v2704 = vshrl.u32 %v2703, 7
        %v2705 = vadd.s32 %v2704, 80
        %2706 = vset.pattern.permute.xlu0 %v2705
        %2707 = vperm.xlu0 %2706, %v2642
        %v2708 = vpop.permute.xlu0 %2707
        %v2709 = vlaneseq
        %v2710 = vshrl.u32 %v2709, 7
        %v2711 = vadd.s32 %v2710, 88
        %2712 = vset.pattern.permute.xlu0 %v2711
        %2713 = vperm.xlu0 %2712, %v2642
        %v2714 = vpop.permute.xlu0 %2713
        %v2715 = vlaneseq
        %v2716 = vshrl.u32 %v2715, 7
        %v2717 = vadd.s32 %v2716, 96
        %2718 = vset.pattern.permute.xlu0 %v2717
        %2719 = vperm.xlu0 %2718, %v2642
        %v2720 = vpop.permute.xlu0 %2719
        %v2721 = vlaneseq
        %v2722 = vshrl.u32 %v2721, 7
        %v2723 = vadd.s32 %v2722, 104
        %2724 = vset.pattern.permute.xlu0 %v2723
        %2725 = vperm.xlu0 %2724, %v2642
        %v2726 = vpop.permute.xlu0 %2725
        %v2727 = vlaneseq
        %v2728 = vshrl.u32 %v2727, 7
        %v2729 = vadd.s32 %v2728, 112
        %2730 = vset.pattern.permute.xlu0 %v2729
        %2731 = vperm.xlu0 %2730, %v2642
        %v2732 = vpop.permute.xlu0 %2731
        %v2733 = vlaneseq
        %v2734 = vshrl.u32 %v2733, 7
        %v2735 = vadd.s32 %v2734, 120
        %2736 = vset.pattern.permute.xlu0 %v2735
        %2737 = vperm.xlu0 %2736, %v2642
        %v2738 = vpop.permute.xlu0 %2737
        %v2739 = vmul.f32 %v1705, %v1969
        %v2740 = vmul.f32 %v1706, %v1969
        %v2741 = vmul.f32 %v1707, %v1975
        %v2742 = vmul.f32 %v1708, %v1975
        %v2743 = vmul.f32 %v1709, %v1981
        %v2744 = vmul.f32 %v1710, %v1981
        %v2745 = vmul.f32 %v1711, %v1987
        %v2746 = vmul.f32 %v1712, %v1987
        %v2747 = vmul.f32 %v1713, %v1993
        %v2748 = vmul.f32 %v1714, %v1993
        %v2749 = vmul.f32 %v1715, %v1999
        %v2750 = vmul.f32 %v1716, %v1999
        %v2751 = vmul.f32 %v1717, %v2005
        %v2752 = vmul.f32 %v1718, %v2005
        %v2753 = vmul.f32 %v1719, %v2011
        %v2754 = vmul.f32 %v1720, %v2011
        %v2755 = vmul.f32 %v1721, %v2017
        %v2756 = vmul.f32 %v1722, %v2017
        %v2757 = vmul.f32 %v1723, %v2023
        %v2758 = vmul.f32 %v1724, %v2023
        %v2759 = vmul.f32 %v1725, %v2029
        %v2760 = vmul.f32 %v1726, %v2029
        %v2761 = vmul.f32 %v1727, %v2035
        %v2762 = vmul.f32 %v1728, %v2035
        %v2763 = vmul.f32 %v1729, %v2041
        %v2764 = vmul.f32 %v1730, %v2041
        %v2765 = vmul.f32 %v1731, %v2047
        %v2766 = vmul.f32 %v1732, %v2047
        %v2767 = vmul.f32 %v1733, %v2053
        %v2768 = vmul.f32 %v1734, %v2053
        %v2769 = vmul.f32 %v1735, %v2059
        %v2770 = vmul.f32 %v1736, %v2059
        %v2771 = vmul.f32 %v1737, %v2066
        %v2772 = vmul.f32 %v1738, %v2066
        %v2773 = vmul.f32 %v1739, %v2072
        %v2774 = vmul.f32 %v1740, %v2072
        %v2775 = vmul.f32 %v1741, %v2078
        %v2776 = vmul.f32 %v1742, %v2078
        %v2777 = vmul.f32 %v1743, %v2084
        %v2778 = vmul.f32 %v1744, %v2084
        %v2779 = vmul.f32 %v1745, %v2090
        %v2780 = vmul.f32 %v1746, %v2090
        %v2781 = vmul.f32 %v1747, %v2096
        %v2782 = vmul.f32 %v1748, %v2096
        %v2783 = vmul.f32 %v1749, %v2102
        %v2784 = vmul.f32 %v1750, %v2102
        %v2785 = vmul.f32 %v1751, %v2108
        %v2786 = vmul.f32 %v1752, %v2108
        %v2787 = vmul.f32 %v1753, %v2114
        %v2788 = vmul.f32 %v1754, %v2114
        %v2789 = vmul.f32 %v1755, %v2120
        %v2790 = vmul.f32 %v1756, %v2120
        %v2791 = vmul.f32 %v1757, %v2126
        %v2792 = vmul.f32 %v1758, %v2126
        %v2793 = vmul.f32 %v1759, %v2132
        %v2794 = vmul.f32 %v1760, %v2132
        %v2795 = vmul.f32 %v1761, %v2138
        %v2796 = vmul.f32 %v1762, %v2138
        %v2797 = vmul.f32 %v1763, %v2144
        %v2798 = vmul.f32 %v1764, %v2144
        %v2799 = vmul.f32 %v1765, %v2150
        %v2800 = vmul.f32 %v1766, %v2150
        %v2801 = vmul.f32 %v1767, %v2156
        %v2802 = vmul.f32 %v1768, %v2156
        %v2803 = vmul.f32 %v1769, %v2163
        %v2804 = vmul.f32 %v1770, %v2163
        %v2805 = vmul.f32 %v1771, %v2169
        %v2806 = vmul.f32 %v1772, %v2169
        %v2807 = vmul.f32 %v1773, %v2175
        %v2808 = vmul.f32 %v1774, %v2175
        %v2809 = vmul.f32 %v1775, %v2181
        %v2810 = vmul.f32 %v1776, %v2181
        %v2811 = vmul.f32 %v1777, %v2187
        %v2812 = vmul.f32 %v1778, %v2187
        %v2813 = vmul.f32 %v1779, %v2193
        %v2814 = vmul.f32 %v1780, %v2193
        %v2815 = vmul.f32 %v1781, %v2199
        %v2816 = vmul.f32 %v1782, %v2199
        %v2817 = vmul.f32 %v1783, %v2205
        %v2818 = vmul.f32 %v1784, %v2205
        %v2819 = vmul.f32 %v1785, %v2211
        %v2820 = vmul.f32 %v1786, %v2211
        %v2821 = vmul.f32 %v1787, %v2217
        %v2822 = vmul.f32 %v1788, %v2217
        %v2823 = vmul.f32 %v1789, %v2223
        %v2824 = vmul.f32 %v1790, %v2223
        %v2825 = vmul.f32 %v1791, %v2229
        %v2826 = vmul.f32 %v1792, %v2229
        %v2827 = vmul.f32 %v1793, %v2235
        %v2828 = vmul.f32 %v1794, %v2235
        %v2829 = vmul.f32 %v1795, %v2241
        %v2830 = vmul.f32 %v1796, %v2241
        %v2831 = vmul.f32 %v1797, %v2247
        %v2832 = vmul.f32 %v1798, %v2247
        %v2833 = vmul.f32 %v1799, %v2253
        %v2834 = vmul.f32 %v1800, %v2253
        %v2835 = vmul.f32 %v1801, %v2260
        %v2836 = vmul.f32 %v1802, %v2260
        %v2837 = vmul.f32 %v1803, %v2266
        %v2838 = vmul.f32 %v1804, %v2266
        %v2839 = vmul.f32 %v1805, %v2272
        %v2840 = vmul.f32 %v1806, %v2272
        %v2841 = vmul.f32 %v1807, %v2278
        %v2842 = vmul.f32 %v1808, %v2278
        %v2843 = vmul.f32 %v1809, %v2284
        %v2844 = vmul.f32 %v1810, %v2284
        %v2845 = vmul.f32 %v1811, %v2290
        %v2846 = vmul.f32 %v1812, %v2290
        %v2847 = vmul.f32 %v1813, %v2296
        %v2848 = vmul.f32 %v1814, %v2296
        %v2849 = vmul.f32 %v1815, %v2302
        %v2850 = vmul.f32 %v1816, %v2302
        %v2851 = vmul.f32 %v1817, %v2308
        %v2852 = vmul.f32 %v1818, %v2308
        %v2853 = vmul.f32 %v1819, %v2314
        %v2854 = vmul.f32 %v1820, %v2314
        %v2855 = vmul.f32 %v1821, %v2320
        %v2856 = vmul.f32 %v1822, %v2320
        %v2857 = vmul.f32 %v1823, %v2326
        %v2858 = vmul.f32 %v1824, %v2326
        %v2859 = vmul.f32 %v1825, %v2332
        %v2860 = vmul.f32 %v1826, %v2332
        %v2861 = vmul.f32 %v1827, %v2338
        %v2862 = vmul.f32 %v1828, %v2338
        %v2863 = vmul.f32 %v1829, %v2344
        %v2864 = vmul.f32 %v1830, %v2344
        %v2865 = vmul.f32 %v1831, %v2350
        %v2866 = vmul.f32 %v1832, %v2350
        %v2867 = vmul.f32 %v1833, %v2357
        %v2868 = vmul.f32 %v1834, %v2357
        %v2869 = vmul.f32 %v1835, %v2363
        %v2870 = vmul.f32 %v1836, %v2363
        %v2871 = vmul.f32 %v1837, %v2369
        %v2872 = vmul.f32 %v1838, %v2369
        %v2873 = vmul.f32 %v1839, %v2375
        %v2874 = vmul.f32 %v1840, %v2375
        %v2875 = vmul.f32 %v1841, %v2381
        %v2876 = vmul.f32 %v1842, %v2381
        %v2877 = vmul.f32 %v1843, %v2387
        %v2878 = vmul.f32 %v1844, %v2387
        %v2879 = vmul.f32 %v1845, %v2393
        %v2880 = vmul.f32 %v1846, %v2393
        %v2881 = vmul.f32 %v1847, %v2399
        %v2882 = vmul.f32 %v1848, %v2399
        %v2883 = vmul.f32 %v1849, %v2405
        %v2884 = vmul.f32 %v1850, %v2405
        %v2885 = vmul.f32 %v1851, %v2411
        %v2886 = vmul.f32 %v1852, %v2411
        %v2887 = vmul.f32 %v1853, %v2417
        %v2888 = vmul.f32 %v1854, %v2417
        %v2889 = vmul.f32 %v1855, %v2423
        %v2890 = vmul.f32 %v1856, %v2423
        %v2891 = vmul.f32 %v1857, %v2429
        %v2892 = vmul.f32 %v1858, %v2429
        %v2893 = vmul.f32 %v1859, %v2435
        %v2894 = vmul.f32 %v1860, %v2435
        %v2895 = vmul.f32 %v1861, %v2441
        %v2896 = vmul.f32 %v1862, %v2441
        %v2897 = vmul.f32 %v1863, %v2447
        %v2898 = vmul.f32 %v1864, %v2447
        %v2899 = vmul.f32 %v1865, %v2454
        %v2900 = vmul.f32 %v1866, %v2454
        %v2901 = vmul.f32 %v1867, %v2460
        %v2902 = vmul.f32 %v1868, %v2460
        %v2903 = vmul.f32 %v1869, %v2466
        %v2904 = vmul.f32 %v1870, %v2466
        %v2905 = vmul.f32 %v1871, %v2472
        %v2906 = vmul.f32 %v1872, %v2472
        %v2907 = vmul.f32 %v1873, %v2478
        %v2908 = vmul.f32 %v1874, %v2478
        %v2909 = vmul.f32 %v1875, %v2484
        %v2910 = vmul.f32 %v1876, %v2484
        %v2911 = vmul.f32 %v1877, %v2490
        %v2912 = vmul.f32 %v1878, %v2490
        %v2913 = vmul.f32 %v1879, %v2496
        %v2914 = vmul.f32 %v1880, %v2496
        %v2915 = vmul.f32 %v1881, %v2502
        %v2916 = vmul.f32 %v1882, %v2502
        %v2917 = vmul.f32 %v1883, %v2508
        %v2918 = vmul.f32 %v1884, %v2508
        %v2919 = vmul.f32 %v1885, %v2514
        %v2920 = vmul.f32 %v1886, %v2514
        %v2921 = vmul.f32 %v1887, %v2520
        %v2922 = vmul.f32 %v1888, %v2520
        %v2923 = vmul.f32 %v1889, %v2526
        %v2924 = vmul.f32 %v1890, %v2526
        %v2925 = vmul.f32 %v1891, %v2532
        %v2926 = vmul.f32 %v1892, %v2532
        %v2927 = vmul.f32 %v1893, %v2538
        %v2928 = vmul.f32 %v1894, %v2538
        %v2929 = vmul.f32 %v1895, %v2544
        %v2930 = vmul.f32 %v1896, %v2544
        %v2931 = vmul.f32 %v1897, %v2551
        %v2932 = vmul.f32 %v1898, %v2551
        %v2933 = vmul.f32 %v1899, %v2557
        %v2934 = vmul.f32 %v1900, %v2557
        %v2935 = vmul.f32 %v1901, %v2563
        %v2936 = vmul.f32 %v1902, %v2563
        %v2937 = vmul.f32 %v1903, %v2569
        %v2938 = vmul.f32 %v1904, %v2569
        %v2939 = vmul.f32 %v1905, %v2575
        %v2940 = vmul.f32 %v1906, %v2575
        %v2941 = vmul.f32 %v1907, %v2581
        %v2942 = vmul.f32 %v1908, %v2581
        %v2943 = vmul.f32 %v1909, %v2587
        %v2944 = vmul.f32 %v1910, %v2587
        %v2945 = vmul.f32 %v1911, %v2593
        %v2946 = vmul.f32 %v1912, %v2593
        %v2947 = vmul.f32 %v1913, %v2599
        %v2948 = vmul.f32 %v1914, %v2599
        %v2949 = vmul.f32 %v1915, %v2605
        %v2950 = vmul.f32 %v1916, %v2605
        %v2951 = vmul.f32 %v1917, %v2611
        %v2952 = vmul.f32 %v1918, %v2611
        %v2953 = vmul.f32 %v1919, %v2617
        %v2954 = vmul.f32 %v1920, %v2617
        %v2955 = vmul.f32 %v1921, %v2623
        %v2956 = vmul.f32 %v1922, %v2623
        %v2957 = vmul.f32 %v1923, %v2629
        %v2958 = vmul.f32 %v1924, %v2629
        %v2959 = vmul.f32 %v1925, %v2635
        %v2960 = vmul.f32 %v1926, %v2635
        %v2961 = vmul.f32 %v1927, %v2641
        %v2962 = vmul.f32 %v1928, %v2641
        %v2963 = vmul.f32 %v1929, %v2648
        %v2964 = vmul.f32 %v1930, %v2648
        %v2965 = vmul.f32 %v1931, %v2654
        %v2966 = vmul.f32 %v1932, %v2654
        %v2967 = vmul.f32 %v1933, %v2660
        %v2968 = vmul.f32 %v1934, %v2660
        %v2969 = vmul.f32 %v1935, %v2666
        %v2970 = vmul.f32 %v1936, %v2666
        %v2971 = vmul.f32 %v1937, %v2672
        %v2972 = vmul.f32 %v1938, %v2672
        %v2973 = vmul.f32 %v1939, %v2678
        %v2974 = vmul.f32 %v1940, %v2678
        %v2975 = vmul.f32 %v1941, %v2684
        %v2976 = vmul.f32 %v1942, %v2684
        %v2977 = vmul.f32 %v1943, %v2690
        %v2978 = vmul.f32 %v1944, %v2690
        %v2979 = vmul.f32 %v1945, %v2696
        %v2980 = vmul.f32 %v1946, %v2696
        %v2981 = vmul.f32 %v1947, %v2702
        %v2982 = vmul.f32 %v1948, %v2702
        %v2983 = vmul.f32 %v1949, %v2708
        %v2984 = vmul.f32 %v1950, %v2708
        %v2985 = vmul.f32 %v1951, %v2714
        %v2986 = vmul.f32 %v1952, %v2714
        %v2987 = vmul.f32 %v1953, %v2720
        %v2988 = vmul.f32 %v1954, %v2720
        %v2989 = vmul.f32 %v1955, %v2726
        %v2990 = vmul.f32 %v1956, %v2726
        %v2991 = vmul.f32 %v1957, %v2732
        %v2992 = vmul.f32 %v1958, %v2732
        %v2993 = vmul.f32 %v1959, %v2738
        %v2994 = vmul.f32 %v1960, %v2738
        %v2995 = vadd.f32 %v2739, %v2741
        %v2996 = vadd.f32 %v2995, %v2743
        %v2997 = vadd.f32 %v2996, %v2745
        %v2998 = vadd.f32 %v2997, %v2747
        %v2999 = vadd.f32 %v2998, %v2749
        %v3000 = vadd.f32 %v2999, %v2751
        %v3001 = vadd.f32 %v3000, %v2753
        %v3002 = vadd.f32 %v3001, %v2755
        %v3003 = vadd.f32 %v3002, %v2757
        %v3004 = vadd.f32 %v3003, %v2759
        %v3005 = vadd.f32 %v3004, %v2761
        %v3006 = vadd.f32 %v3005, %v2763
        %v3007 = vadd.f32 %v3006, %v2765
        %v3008 = vadd.f32 %v3007, %v2767
        %v3009 = vadd.f32 %v3008, %v2769
        %v3010 = vrot.slane %v3009, 4
        %v3011 = vadd.f32 %v3009, %v3010
        %v3012 = vrot.slane %v3011, 2
        %v3013 = vadd.f32 %v3011, %v3012
        %v3014 = vrot.slane %v3013, 1
        %v3015 = vadd.f32 %v3013, %v3014
        %v3016 = vadd.f32 %v2740, %v2742
        %v3017 = vadd.f32 %v3016, %v2744
        %v3018 = vadd.f32 %v3017, %v2746
        %v3019 = vadd.f32 %v3018, %v2748
        %v3020 = vadd.f32 %v3019, %v2750
        %v3021 = vadd.f32 %v3020, %v2752
        %v3022 = vadd.f32 %v3021, %v2754
        %v3023 = vadd.f32 %v3022, %v2756
        %v3024 = vadd.f32 %v3023, %v2758
        %v3025 = vadd.f32 %v3024, %v2760
        %v3026 = vadd.f32 %v3025, %v2762
        %v3027 = vadd.f32 %v3026, %v2764
        %v3028 = vadd.f32 %v3027, %v2766
        %v3029 = vadd.f32 %v3028, %v2768
        %v3030 = vadd.f32 %v3029, %v2770
        %v3031 = vrot.slane %v3030, 4
        %v3032 = vadd.f32 %v3030, %v3031
        %v3033 = vrot.slane %v3032, 2
        %v3034 = vadd.f32 %v3032, %v3033
        %v3035 = vrot.slane %v3034, 1
        %v3036 = vadd.f32 %v3034, %v3035
        %v3037 = vadd.f32 %v2771, %v2773
        %v3038 = vadd.f32 %v3037, %v2775
        %v3039 = vadd.f32 %v3038, %v2777
        %v3040 = vadd.f32 %v3039, %v2779
        %v3041 = vadd.f32 %v3040, %v2781
        %v3042 = vadd.f32 %v3041, %v2783
        %v3043 = vadd.f32 %v3042, %v2785
        %v3044 = vadd.f32 %v3043, %v2787
        %v3045 = vadd.f32 %v3044, %v2789
        %v3046 = vadd.f32 %v3045, %v2791
        %v3047 = vadd.f32 %v3046, %v2793
        %v3048 = vadd.f32 %v3047, %v2795
        %v3049 = vadd.f32 %v3048, %v2797
        %v3050 = vadd.f32 %v3049, %v2799
        %v3051 = vadd.f32 %v3050, %v2801
        %v3052 = vrot.slane %v3051, 4
        %v3053 = vadd.f32 %v3051, %v3052
        %v3054 = vrot.slane %v3053, 2
        %v3055 = vadd.f32 %v3053, %v3054
        %v3056 = vrot.slane %v3055, 1
        %v3057 = vadd.f32 %v3055, %v3056
        %v3058 = vadd.f32 %v2772, %v2774
        %v3059 = vadd.f32 %v3058, %v2776
        %v3060 = vadd.f32 %v3059, %v2778
        %v3061 = vadd.f32 %v3060, %v2780
        %v3062 = vadd.f32 %v3061, %v2782
        %v3063 = vadd.f32 %v3062, %v2784
        %v3064 = vadd.f32 %v3063, %v2786
        %v3065 = vadd.f32 %v3064, %v2788
        %v3066 = vadd.f32 %v3065, %v2790
        %v3067 = vadd.f32 %v3066, %v2792
        %v3068 = vadd.f32 %v3067, %v2794
        %v3069 = vadd.f32 %v3068, %v2796
        %v3070 = vadd.f32 %v3069, %v2798
        %v3071 = vadd.f32 %v3070, %v2800
        %v3072 = vadd.f32 %v3071, %v2802
        %v3073 = vrot.slane %v3072, 4
        %v3074 = vadd.f32 %v3072, %v3073
        %v3075 = vrot.slane %v3074, 2
        %v3076 = vadd.f32 %v3074, %v3075
        %v3077 = vrot.slane %v3076, 1
        %v3078 = vadd.f32 %v3076, %v3077
        %v3079 = vadd.f32 %v2803, %v2805
        %v3080 = vadd.f32 %v3079, %v2807
        %v3081 = vadd.f32 %v3080, %v2809
        %v3082 = vadd.f32 %v3081, %v2811
        %v3083 = vadd.f32 %v3082, %v2813
        %v3084 = vadd.f32 %v3083, %v2815
        %v3085 = vadd.f32 %v3084, %v2817
        %v3086 = vadd.f32 %v3085, %v2819
        %v3087 = vadd.f32 %v3086, %v2821
        %v3088 = vadd.f32 %v3087, %v2823
        %v3089 = vadd.f32 %v3088, %v2825
        %v3090 = vadd.f32 %v3089, %v2827
        %v3091 = vadd.f32 %v3090, %v2829
        %v3092 = vadd.f32 %v3091, %v2831
        %v3093 = vadd.f32 %v3092, %v2833
        %v3094 = vrot.slane %v3093, 4
        %v3095 = vadd.f32 %v3093, %v3094
        %v3096 = vrot.slane %v3095, 2
        %v3097 = vadd.f32 %v3095, %v3096
        %v3098 = vrot.slane %v3097, 1
        %v3099 = vadd.f32 %v3097, %v3098
        %v3100 = vadd.f32 %v2804, %v2806
        %v3101 = vadd.f32 %v3100, %v2808
        %v3102 = vadd.f32 %v3101, %v2810
        %v3103 = vadd.f32 %v3102, %v2812
        %v3104 = vadd.f32 %v3103, %v2814
        %v3105 = vadd.f32 %v3104, %v2816
        %v3106 = vadd.f32 %v3105, %v2818
        %v3107 = vadd.f32 %v3106, %v2820
        %v3108 = vadd.f32 %v3107, %v2822
        %v3109 = vadd.f32 %v3108, %v2824
        %v3110 = vadd.f32 %v3109, %v2826
        %v3111 = vadd.f32 %v3110, %v2828
        %v3112 = vadd.f32 %v3111, %v2830
        %v3113 = vadd.f32 %v3112, %v2832
        %v3114 = vadd.f32 %v3113, %v2834
        %v3115 = vrot.slane %v3114, 4
        %v3116 = vadd.f32 %v3114, %v3115
        %v3117 = vrot.slane %v3116, 2
        %v3118 = vadd.f32 %v3116, %v3117
        %v3119 = vrot.slane %v3118, 1
        %v3120 = vadd.f32 %v3118, %v3119
        %v3121 = vadd.f32 %v2835, %v2837
        %v3122 = vadd.f32 %v3121, %v2839
        %v3123 = vadd.f32 %v3122, %v2841
        %v3124 = vadd.f32 %v3123, %v2843
        %v3125 = vadd.f32 %v3124, %v2845
        %v3126 = vadd.f32 %v3125, %v2847
        %v3127 = vadd.f32 %v3126, %v2849
        %v3128 = vadd.f32 %v3127, %v2851
        %v3129 = vadd.f32 %v3128, %v2853
        %v3130 = vadd.f32 %v3129, %v2855
        %v3131 = vadd.f32 %v3130, %v2857
        %v3132 = vadd.f32 %v3131, %v2859
        %v3133 = vadd.f32 %v3132, %v2861
        %v3134 = vadd.f32 %v3133, %v2863
        %v3135 = vadd.f32 %v3134, %v2865
        %v3136 = vrot.slane %v3135, 4
        %v3137 = vadd.f32 %v3135, %v3136
        %v3138 = vrot.slane %v3137, 2
        %v3139 = vadd.f32 %v3137, %v3138
        %v3140 = vrot.slane %v3139, 1
        %v3141 = vadd.f32 %v3139, %v3140
        %v3142 = vadd.f32 %v2836, %v2838
        %v3143 = vadd.f32 %v3142, %v2840
        %v3144 = vadd.f32 %v3143, %v2842
        %v3145 = vadd.f32 %v3144, %v2844
        %v3146 = vadd.f32 %v3145, %v2846
        %v3147 = vadd.f32 %v3146, %v2848
        %v3148 = vadd.f32 %v3147, %v2850
        %v3149 = vadd.f32 %v3148, %v2852
        %v3150 = vadd.f32 %v3149, %v2854
        %v3151 = vadd.f32 %v3150, %v2856
        %v3152 = vadd.f32 %v3151, %v2858
        %v3153 = vadd.f32 %v3152, %v2860
        %v3154 = vadd.f32 %v3153, %v2862
        %v3155 = vadd.f32 %v3154, %v2864
        %v3156 = vadd.f32 %v3155, %v2866
        %v3157 = vrot.slane %v3156, 4
        %v3158 = vadd.f32 %v3156, %v3157
        %v3159 = vrot.slane %v3158, 2
        %v3160 = vadd.f32 %v3158, %v3159
        %v3161 = vrot.slane %v3160, 1
        %v3162 = vadd.f32 %v3160, %v3161
        %v3163 = vadd.f32 %v2867, %v2869
        %v3164 = vadd.f32 %v3163, %v2871
        %v3165 = vadd.f32 %v3164, %v2873
        %v3166 = vadd.f32 %v3165, %v2875
        %v3167 = vadd.f32 %v3166, %v2877
        %v3168 = vadd.f32 %v3167, %v2879
        %v3169 = vadd.f32 %v3168, %v2881
        %v3170 = vadd.f32 %v3169, %v2883
        %v3171 = vadd.f32 %v3170, %v2885
        %v3172 = vadd.f32 %v3171, %v2887
        %v3173 = vadd.f32 %v3172, %v2889
        %v3174 = vadd.f32 %v3173, %v2891
        %v3175 = vadd.f32 %v3174, %v2893
        %v3176 = vadd.f32 %v3175, %v2895
        %v3177 = vadd.f32 %v3176, %v2897
        %v3178 = vrot.slane %v3177, 4
        %v3179 = vadd.f32 %v3177, %v3178
        %v3180 = vrot.slane %v3179, 2
        %v3181 = vadd.f32 %v3179, %v3180
        %v3182 = vrot.slane %v3181, 1
        %v3183 = vadd.f32 %v3181, %v3182
        %v3184 = vadd.f32 %v2868, %v2870
        %v3185 = vadd.f32 %v3184, %v2872
        %v3186 = vadd.f32 %v3185, %v2874
        %v3187 = vadd.f32 %v3186, %v2876
        %v3188 = vadd.f32 %v3187, %v2878
        %v3189 = vadd.f32 %v3188, %v2880
        %v3190 = vadd.f32 %v3189, %v2882
        %v3191 = vadd.f32 %v3190, %v2884
        %v3192 = vadd.f32 %v3191, %v2886
        %v3193 = vadd.f32 %v3192, %v2888
        %v3194 = vadd.f32 %v3193, %v2890
        %v3195 = vadd.f32 %v3194, %v2892
        %v3196 = vadd.f32 %v3195, %v2894
        %v3197 = vadd.f32 %v3196, %v2896
        %v3198 = vadd.f32 %v3197, %v2898
        %v3199 = vrot.slane %v3198, 4
        %v3200 = vadd.f32 %v3198, %v3199
        %v3201 = vrot.slane %v3200, 2
        %v3202 = vadd.f32 %v3200, %v3201
        %v3203 = vrot.slane %v3202, 1
        %v3204 = vadd.f32 %v3202, %v3203
        %v3205 = vadd.f32 %v2899, %v2901
        %v3206 = vadd.f32 %v3205, %v2903
        %v3207 = vadd.f32 %v3206, %v2905
        %v3208 = vadd.f32 %v3207, %v2907
        %v3209 = vadd.f32 %v3208, %v2909
        %v3210 = vadd.f32 %v3209, %v2911
        %v3211 = vadd.f32 %v3210, %v2913
        %v3212 = vadd.f32 %v3211, %v2915
        %v3213 = vadd.f32 %v3212, %v2917
        %v3214 = vadd.f32 %v3213, %v2919
        %v3215 = vadd.f32 %v3214, %v2921
        %v3216 = vadd.f32 %v3215, %v2923
        %v3217 = vadd.f32 %v3216, %v2925
        %v3218 = vadd.f32 %v3217, %v2927
        %v3219 = vadd.f32 %v3218, %v2929
        %v3220 = vrot.slane %v3219, 4
        %v3221 = vadd.f32 %v3219, %v3220
        %v3222 = vrot.slane %v3221, 2
        %v3223 = vadd.f32 %v3221, %v3222
        %v3224 = vrot.slane %v3223, 1
        %v3225 = vadd.f32 %v3223, %v3224
        %v3226 = vadd.f32 %v2900, %v2902
        %v3227 = vadd.f32 %v3226, %v2904
        %v3228 = vadd.f32 %v3227, %v2906
        %v3229 = vadd.f32 %v3228, %v2908
        %v3230 = vadd.f32 %v3229, %v2910
        %v3231 = vadd.f32 %v3230, %v2912
        %v3232 = vadd.f32 %v3231, %v2914
        %v3233 = vadd.f32 %v3232, %v2916
        %v3234 = vadd.f32 %v3233, %v2918
        %v3235 = vadd.f32 %v3234, %v2920
        %v3236 = vadd.f32 %v3235, %v2922
        %v3237 = vadd.f32 %v3236, %v2924
        %v3238 = vadd.f32 %v3237, %v2926
        %v3239 = vadd.f32 %v3238, %v2928
        %v3240 = vadd.f32 %v3239, %v2930
        %v3241 = vrot.slane %v3240, 4
        %v3242 = vadd.f32 %v3240, %v3241
        %v3243 = vrot.slane %v3242, 2
        %v3244 = vadd.f32 %v3242, %v3243
        %v3245 = vrot.slane %v3244, 1
        %v3246 = vadd.f32 %v3244, %v3245
        %v3247 = vadd.f32 %v2931, %v2933
        %v3248 = vadd.f32 %v3247, %v2935
        %v3249 = vadd.f32 %v3248, %v2937
        %v3250 = vadd.f32 %v3249, %v2939
        %v3251 = vadd.f32 %v3250, %v2941
        %v3252 = vadd.f32 %v3251, %v2943
        %v3253 = vadd.f32 %v3252, %v2945
        %v3254 = vadd.f32 %v3253, %v2947
        %v3255 = vadd.f32 %v3254, %v2949
        %v3256 = vadd.f32 %v3255, %v2951
        %v3257 = vadd.f32 %v3256, %v2953
        %v3258 = vadd.f32 %v3257, %v2955
        %v3259 = vadd.f32 %v3258, %v2957
        %v3260 = vadd.f32 %v3259, %v2959
        %v3261 = vadd.f32 %v3260, %v2961
        %v3262 = vrot.slane %v3261, 4
        %v3263 = vadd.f32 %v3261, %v3262
        %v3264 = vrot.slane %v3263, 2
        %v3265 = vadd.f32 %v3263, %v3264
        %v3266 = vrot.slane %v3265, 1
        %v3267 = vadd.f32 %v3265, %v3266
        %v3268 = vadd.f32 %v2932, %v2934
        %v3269 = vadd.f32 %v3268, %v2936
        %v3270 = vadd.f32 %v3269, %v2938
        %v3271 = vadd.f32 %v3270, %v2940
        %v3272 = vadd.f32 %v3271, %v2942
        %v3273 = vadd.f32 %v3272, %v2944
        %v3274 = vadd.f32 %v3273, %v2946
        %v3275 = vadd.f32 %v3274, %v2948
        %v3276 = vadd.f32 %v3275, %v2950
        %v3277 = vadd.f32 %v3276, %v2952
        %v3278 = vadd.f32 %v3277, %v2954
        %v3279 = vadd.f32 %v3278, %v2956
        %v3280 = vadd.f32 %v3279, %v2958
        %v3281 = vadd.f32 %v3280, %v2960
        %v3282 = vadd.f32 %v3281, %v2962
        %v3283 = vrot.slane %v3282, 4
        %v3284 = vadd.f32 %v3282, %v3283
        %v3285 = vrot.slane %v3284, 2
        %v3286 = vadd.f32 %v3284, %v3285
        %v3287 = vrot.slane %v3286, 1
        %v3288 = vadd.f32 %v3286, %v3287
        %v3289 = vadd.f32 %v2963, %v2965
        %v3290 = vadd.f32 %v3289, %v2967
        %v3291 = vadd.f32 %v3290, %v2969
        %v3292 = vadd.f32 %v3291, %v2971
        %v3293 = vadd.f32 %v3292, %v2973
        %v3294 = vadd.f32 %v3293, %v2975
        %v3295 = vadd.f32 %v3294, %v2977
        %v3296 = vadd.f32 %v3295, %v2979
        %v3297 = vadd.f32 %v3296, %v2981
        %v3298 = vadd.f32 %v3297, %v2983
        %v3299 = vadd.f32 %v3298, %v2985
        %v3300 = vadd.f32 %v3299, %v2987
        %v3301 = vadd.f32 %v3300, %v2989
        %v3302 = vadd.f32 %v3301, %v2991
        %v3303 = vadd.f32 %v3302, %v2993
        %v3304 = vrot.slane %v3303, 4
        %v3305 = vadd.f32 %v3303, %v3304
        %v3306 = vrot.slane %v3305, 2
        %v3307 = vadd.f32 %v3305, %v3306
        %v3308 = vrot.slane %v3307, 1
        %v3309 = vadd.f32 %v3307, %v3308
        %v3310 = vadd.f32 %v2964, %v2966
        %v3311 = vadd.f32 %v3310, %v2968
        %v3312 = vadd.f32 %v3311, %v2970
        %v3313 = vadd.f32 %v3312, %v2972
        %v3314 = vadd.f32 %v3313, %v2974
        %v3315 = vadd.f32 %v3314, %v2976
        %v3316 = vadd.f32 %v3315, %v2978
        %v3317 = vadd.f32 %v3316, %v2980
        %v3318 = vadd.f32 %v3317, %v2982
        %v3319 = vadd.f32 %v3318, %v2984
        %v3320 = vadd.f32 %v3319, %v2986
        %v3321 = vadd.f32 %v3320, %v2988
        %v3322 = vadd.f32 %v3321, %v2990
        %v3323 = vadd.f32 %v3322, %v2992
        %v3324 = vadd.f32 %v3323, %v2994
        %v3325 = vrot.slane %v3324, 4
        %v3326 = vadd.f32 %v3324, %v3325
        %v3327 = vrot.slane %v3326, 2
        %v3328 = vadd.f32 %v3326, %v3327
        %v3329 = vrot.slane %v3328, 1
        %v3330 = vadd.f32 %v3328, %v3329
        %vm3347 = vcmask 1041409
        %v3348 = vsel %vm3347, %v3057, %v3015
        %vm3349 = vcmask 1042434
        %v3350 = vsel %vm3349, %v3099, %v3348
        %vm3351 = vcmask 1043459
        %v3352 = vsel %vm3351, %v3141, %v3350
        %vm3353 = vcmask 1044484
        %v3354 = vsel %vm3353, %v3183, %v3352
        %vm3355 = vcmask 1045509
        %v3356 = vsel %vm3355, %v3225, %v3354
        %vm3357 = vcmask 1046534
        %v3358 = vsel %vm3357, %v3267, %v3356
        %vm3359 = vcmask 1047559
        %v3360 = vsel %vm3359, %v3309, %v3358
        %v3361 = vsel %vm3347, %v3078, %v3036
        %v3362 = vsel %vm3349, %v3120, %v3361
        %v3363 = vsel %vm3351, %v3162, %v3362
        %v3364 = vsel %vm3353, %v3204, %v3363
        %v3365 = vsel %vm3355, %v3246, %v3364
        %v3366 = vsel %vm3357, %v3288, %v3365
        %v3367 = vsel %vm3359, %v3330, %v3366
        %v3370 = vadd.f32 %v1961, %v3360
        %v3371 = vadd.f32 %v1962, %v3367
        %3372 = vst [vmem:[#allocation2] sm:$0xff] %v3370
        %3373 = vst [vmem:[#allocation2 + $0x8] sm:$0xff] %v3371
        %v3374 = vld [vmem:[#allocation3] sm:$0xff]
        %3375 = vadd.xlane.f32.xlu0 %v413
        %v3376 = vpop.xlane.xlu0 %3375
        %v3377 = vadd.f32 %v3374, %v3376
        %vm3378 = vcmask 7168
        %3379 = vst.msk [vmem:[#allocation3] sm:$0xff] %vm3378, %v3377
        %p3380 = scmp.eq.s32.totalorder %s33, 3
        // Predicated region
        $region73: #{tpu_custom_call.1} parent=47 // pred_check
          %p3381 = pneg %p3380
        $region74: #{tpu_custom_call.1} parent=47 // pred_check_branch
          %3383 = sbr.rel (%p3381) target = $region76
        $region75: #{tpu_custom_call.1} parent=47 // pred_region
          %v3384 = vld [vmem:[#allocation2] sm:$0xff]
          %v3385 = vld [vmem:[#allocation2 + $0x8] sm:$0xff]
          %v3386 = vpack.c.bf16 %v3384, %v3384
          %v3387 = vpack.c.bf16 %v3385, %v3385
          %v3388 = vld [vmem:[#allocation9] sm:$0xf]
          %v3389 = vld [vmem:[#allocation9 + $0x4] sm:$0xf]
          %v3390 = vld [vmem:[#allocation9 + $0x8] sm:$0xf]
          %v3391 = vld [vmem:[#allocation9 + $0xc] sm:$0xf]
          %v3392 = vld [vmem:[#allocation9 + $0x10] sm:$0xf]
          %v3393 = vld [vmem:[#allocation9 + $0x14] sm:$0xf]
          %v3394 = vld [vmem:[#allocation9 + $0x18] sm:$0xf]
          %v3395 = vld [vmem:[#allocation9 + $0x1c] sm:$0xf]
          %v3396 = vld [vmem:[#allocation9 + $0x20] sm:$0xf]
          %v3397 = vld [vmem:[#allocation9 + $0x24] sm:$0xf]
          %v3398 = vld [vmem:[#allocation9 + $0x28] sm:$0xf]
          %v3399 = vld [vmem:[#allocation9 + $0x2c] sm:$0xf]
          %v3400 = vld [vmem:[#allocation9 + $0x30] sm:$0xf]
          %v3401 = vld [vmem:[#allocation9 + $0x34] sm:$0xf]
          %v3402 = vld [vmem:[#allocation9 + $0x38] sm:$0xf]
          %v3403 = vld [vmem:[#allocation9 + $0x3c] sm:$0xf]
          %v3404 = vld [vmem:[#allocation9 + $0x40] sm:$0xf]
          %v3405 = vld [vmem:[#allocation9 + $0x44] sm:$0xf]
          %v3406 = vld [vmem:[#allocation9 + $0x48] sm:$0xf]
          %v3407 = vld [vmem:[#allocation9 + $0x4c] sm:$0xf]
          %v3408 = vld [vmem:[#allocation9 + $0x50] sm:$0xf]
          %v3409 = vld [vmem:[#allocation9 + $0x54] sm:$0xf]
          %v3410 = vld [vmem:[#allocation9 + $0x58] sm:$0xf]
          %v3411 = vld [vmem:[#allocation9 + $0x5c] sm:$0xf]
          %v3412 = vld [vmem:[#allocation9 + $0x60] sm:$0xf]
          %v3413 = vld [vmem:[#allocation9 + $0x64] sm:$0xf]
          %v3414 = vld [vmem:[#allocation9 + $0x68] sm:$0xf]
          %v3415 = vld [vmem:[#allocation9 + $0x6c] sm:$0xf]
          %v3416 = vld [vmem:[#allocation9 + $0x70] sm:$0xf]
          %v3417 = vld [vmem:[#allocation9 + $0x74] sm:$0xf]
          %v3418 = vld [vmem:[#allocation9 + $0x78] sm:$0xf]
          %v3419 = vld [vmem:[#allocation9 + $0x7c] sm:$0xf]
          %v3452 = vunpack.c.l.b16 %v3388
          %v3453 = vunpack.c.l.b16 %v3389
          %v3454 = vunpack.c.l.b16 %v3390
          %v3455 = vunpack.c.l.b16 %v3391
          %v3456 = vunpack.c.l.b16 %v3392
          %v3457 = vunpack.c.l.b16 %v3393
          %v3458 = vunpack.c.l.b16 %v3394
          %v3459 = vunpack.c.l.b16 %v3395
          %v3460 = vunpack.c.l.b16 %v3396
          %v3461 = vunpack.c.l.b16 %v3397
          %v3462 = vunpack.c.l.b16 %v3398
          %v3463 = vunpack.c.l.b16 %v3399
          %v3464 = vunpack.c.l.b16 %v3400
          %v3465 = vunpack.c.l.b16 %v3401
          %v3466 = vunpack.c.l.b16 %v3402
          %v3467 = vunpack.c.l.b16 %v3403
          %v3468 = vunpack.c.l.b16 %v3404
          %v3469 = vunpack.c.l.b16 %v3405
          %v3470 = vunpack.c.l.b16 %v3406
          %v3471 = vunpack.c.l.b16 %v3407
          %v3472 = vunpack.c.l.b16 %v3408
          %v3473 = vunpack.c.l.b16 %v3409
          %v3474 = vunpack.c.l.b16 %v3410
          %v3475 = vunpack.c.l.b16 %v3411
          %v3476 = vunpack.c.l.b16 %v3412
          %v3477 = vunpack.c.l.b16 %v3413
          %v3478 = vunpack.c.l.b16 %v3414
          %v3479 = vunpack.c.l.b16 %v3415
          %v3480 = vunpack.c.l.b16 %v3416
          %v3481 = vunpack.c.l.b16 %v3417
          %v3482 = vunpack.c.l.b16 %v3418
          %v3483 = vunpack.c.l.b16 %v3419
          %v3484 = vpack.c.b16 %v3453, %v3452
          %v3485 = vpack.c.b16 %v3455, %v3454
          %v3486 = vpack.c.b16 %v3457, %v3456
          %v3487 = vpack.c.b16 %v3459, %v3458
          %v3488 = vpack.c.b16 %v3461, %v3460
          %v3489 = vpack.c.b16 %v3463, %v3462
          %v3490 = vpack.c.b16 %v3465, %v3464
          %v3491 = vpack.c.b16 %v3467, %v3466
          %v3492 = vpack.c.b16 %v3469, %v3468
          %v3493 = vpack.c.b16 %v3471, %v3470
          %v3494 = vpack.c.b16 %v3473, %v3472
          %v3495 = vpack.c.b16 %v3475, %v3474
          %v3496 = vpack.c.b16 %v3477, %v3476
          %v3497 = vpack.c.b16 %v3479, %v3478
          %v3498 = vpack.c.b16 %v3481, %v3480
          %v3499 = vpack.c.b16 %v3483, %v3482
          %3516 = vmatpush.bf16.msra.mxu0 %v3491
          %3517 = vmatpush.bf16.msra.mxu0 %v3490
          %3518 = vmatpush.bf16.msra.mxu0 %v3489
          %3519 = vmatpush.bf16.msra.mxu0 %v3488
          %3520 = vmatpush.bf16.msra.mxu0 %v3487
          %3521 = vmatpush.bf16.msra.mxu0 %v3486
          %3522 = vmatpush.bf16.msra.mxu0 %v3485
          %3523 = vmatpush.bf16.msra.mxu0 %v3484
          %3524 = vmatmul.bf16.gmra.mxu0 %v3386
          %v3525 = vpop.f32.mrf.mxu0
          %v3526 = vadd.f32 0.0, %v3525
          %v3527 = vpop.f32.mrf.mxu0
          %3528 = vdwg.mxu0
          %3529 = vmatpush.bf16.msra.mxu0 %v3499
          %3530 = vmatpush.bf16.msra.mxu0 %v3498
          %3531 = vmatpush.bf16.msra.mxu0 %v3497
          %3532 = vmatpush.bf16.msra.mxu0 %v3496
          %3533 = vmatpush.bf16.msra.mxu0 %v3495
          %3534 = vmatpush.bf16.msra.mxu0 %v3494
          %3535 = vmatpush.bf16.msra.mxu0 %v3493
          %3536 = vmatpush.bf16.msra.mxu0 %v3492
          %3537 = vmatmul.bf16.gmra.mxu0 %v3387
          %v3538 = vpop.f32.mrf.mxu0
          %v3539 = vadd.f32 %v3526, %v3538
          %v3540 = vpop.f32.mrf.mxu0
          %3541 = vdwg.mxu0
          %v3542 = vld [vmem:[#allocation3] sm:$0xff]
          %v3543 = vmax.f32 %v3542, 1.0
          %3545 = vset.pattern.permute.xlu0 0
          %3546 = vperm.xlu0 %3545, %v3543
          %v3547 = vpop.permute.xlu0 %3546
          %v3549 = vrcp.pop %v3547
          %v3550 = vmul.f32 %v3547, %v3549
          %v3551 = vsub.f32 1.0, %v3550
          %v3552 = vmul.f32 %v3549, %v3551
          %v3553 = vadd.f32 %v3549, %v3552
          %vm3554 = vweird.f32 %v3547
          %vm3555 = vweird.f32 %v3549
          %vm3556 = vmor %vm3554, %vm3555
          %v3557 = vsel %vm3556, %v3549, %v3553
          %v3558 = vand.u32 2147483647, %v3547
          %vm3559 = vcmp.eq.f32.partialorder %v3558, 8.507059e+37
          %v3560 = vand.u32 %v3547, 2147483648
          %v3561 = vor.u32 1.1754944e-38, %v3560
          %v3562 = vsel %vm3559, %v3561, %v3557
          %v3563 = vmul.f32 %v3539, %v3562
          %v3564 = vpack.c.bf16 %v3563, %v3563
          %v3565 = vld [vmem:[#allocation10] sm:$0xf]
          %v3566 = vld [vmem:[#allocation10 + $0x4] sm:$0xf]
          %v3567 = vld [vmem:[#allocation10 + $0x8] sm:$0xf]
          %v3568 = vld [vmem:[#allocation10 + $0xc] sm:$0xf]
          %v3569 = vld [vmem:[#allocation10 + $0x10] sm:$0xf]
          %v3570 = vld [vmem:[#allocation10 + $0x14] sm:$0xf]
          %v3571 = vld [vmem:[#allocation10 + $0x18] sm:$0xf]
          %v3572 = vld [vmem:[#allocation10 + $0x1c] sm:$0xf]
          %v3573 = vld [vmem:[#allocation10 + $0x20] sm:$0xf]
          %v3574 = vld [vmem:[#allocation10 + $0x24] sm:$0xf]
          %v3575 = vld [vmem:[#allocation10 + $0x28] sm:$0xf]
          %v3576 = vld [vmem:[#allocation10 + $0x2c] sm:$0xf]
          %v3577 = vld [vmem:[#allocation10 + $0x30] sm:$0xf]
          %v3578 = vld [vmem:[#allocation10 + $0x34] sm:$0xf]
          %v3579 = vld [vmem:[#allocation10 + $0x38] sm:$0xf]
          %v3580 = vld [vmem:[#allocation10 + $0x3c] sm:$0xf]
          %v3581 = vld [vmem:[%s4] sm:$0x1]
          %v3583 = vperm.slane %v3581, 0
          %v3601 = vunpack.c.l.b16 %v3565
          %v3602 = vunpack.c.l.b16 %v3566
          %v3603 = vunpack.c.l.b16 %v3567
          %v3604 = vunpack.c.l.b16 %v3568
          %v3605 = vunpack.c.l.b16 %v3569
          %v3606 = vunpack.c.l.b16 %v3570
          %v3607 = vunpack.c.l.b16 %v3571
          %v3608 = vunpack.c.l.b16 %v3572
          %v3609 = vunpack.c.l.b16 %v3573
          %v3610 = vunpack.c.l.b16 %v3574
          %v3611 = vunpack.c.l.b16 %v3575
          %v3612 = vunpack.c.l.b16 %v3576
          %v3613 = vunpack.c.l.b16 %v3577
          %v3614 = vunpack.c.l.b16 %v3578
          %v3615 = vunpack.c.l.b16 %v3579
          %v3616 = vunpack.c.l.b16 %v3580
          %v3617 = vpack.c.b16 %v3602, %v3601
          %v3618 = vpack.c.b16 %v3604, %v3603
          %v3619 = vpack.c.b16 %v3606, %v3605
          %v3620 = vpack.c.b16 %v3608, %v3607
          %v3621 = vpack.c.b16 %v3610, %v3609
          %v3622 = vpack.c.b16 %v3612, %v3611
          %v3623 = vpack.c.b16 %v3614, %v3613
          %v3624 = vpack.c.b16 %v3616, %v3615
          %3633 = vmatpush.bf16.msra.mxu0 %v3624
          %3634 = vmatpush.bf16.msra.mxu0 %v3623
          %3635 = vmatpush.bf16.msra.mxu0 %v3622
          %3636 = vmatpush.bf16.msra.mxu0 %v3621
          %3637 = vmatpush.bf16.msra.mxu0 %v3620
          %3638 = vmatpush.bf16.msra.mxu0 %v3619
          %3639 = vmatpush.bf16.msra.mxu0 %v3618
          %3640 = vmatpush.bf16.msra.mxu0 %v3617
          %3641 = vmatmul.bf16.gmra.mxu0 %v3564
          %v3642 = vpop.f32.mrf.mxu0
          %v3643 = vadd.f32 %v3583, %v3642
          %v3644 = vpop.f32.mrf.mxu0
          %3645 = vdwg.mxu0
          %v3646 = vtanh.pop %v3643
          %v3647 = vpack.c.bf16 %v3646, %v3646
          %v3648 = vld [vmem:[#allocation12] sm:$0xf]
          %v3649 = vld [vmem:[#allocation12 + $0x4] sm:$0xf]
          %v3650 = vld [vmem:[#allocation12 + $0x8] sm:$0xf]
          %v3651 = vld [vmem:[#allocation12 + $0xc] sm:$0xf]
          %v3652 = vld [vmem:[#allocation12 + $0x10] sm:$0xf]
          %v3653 = vld [vmem:[#allocation12 + $0x14] sm:$0xf]
          %v3654 = vld [vmem:[#allocation12 + $0x18] sm:$0xf]
          %v3655 = vld [vmem:[#allocation12 + $0x1c] sm:$0xf]
          %v3656 = vld [vmem:[#allocation12 + $0x20] sm:$0xf]
          %v3657 = vld [vmem:[#allocation12 + $0x24] sm:$0xf]
          %v3658 = vld [vmem:[#allocation12 + $0x28] sm:$0xf]
          %v3659 = vld [vmem:[#allocation12 + $0x2c] sm:$0xf]
          %v3660 = vld [vmem:[#allocation12 + $0x30] sm:$0xf]
          %v3661 = vld [vmem:[#allocation12 + $0x34] sm:$0xf]
          %v3662 = vld [vmem:[#allocation12 + $0x38] sm:$0xf]
          %v3663 = vld [vmem:[#allocation12 + $0x3c] sm:$0xf]
          %v3664 = vld [vmem:[%s6] sm:$0x1]
          %v3666 = vperm.slane %v3664, 0
          %v3684 = vunpack.c.l.b16 %v3648
          %v3685 = vunpack.c.l.b16 %v3649
          %v3686 = vunpack.c.l.b16 %v3650
          %v3687 = vunpack.c.l.b16 %v3651
          %v3688 = vunpack.c.l.b16 %v3652
          %v3689 = vunpack.c.l.b16 %v3653
          %v3690 = vunpack.c.l.b16 %v3654
          %v3691 = vunpack.c.l.b16 %v3655
          %v3692 = vunpack.c.l.b16 %v3656
          %v3693 = vunpack.c.l.b16 %v3657
          %v3694 = vunpack.c.l.b16 %v3658
          %v3695 = vunpack.c.l.b16 %v3659
          %v3696 = vunpack.c.l.b16 %v3660
          %v3697 = vunpack.c.l.b16 %v3661
          %v3698 = vunpack.c.l.b16 %v3662
          %v3699 = vunpack.c.l.b16 %v3663
          %v3700 = vpack.c.b16 %v3685, %v3684
          %v3701 = vpack.c.b16 %v3687, %v3686
          %v3702 = vpack.c.b16 %v3689, %v3688
          %v3703 = vpack.c.b16 %v3691, %v3690
          %v3704 = vpack.c.b16 %v3693, %v3692
          %v3705 = vpack.c.b16 %v3695, %v3694
          %v3706 = vpack.c.b16 %v3697, %v3696
          %v3707 = vpack.c.b16 %v3699, %v3698
          %3716 = vmatpush.bf16.msra.mxu0 %v3707
          %3717 = vmatpush.bf16.msra.mxu0 %v3706
          %3718 = vmatpush.bf16.msra.mxu0 %v3705
          %3719 = vmatpush.bf16.msra.mxu0 %v3704
          %3720 = vmatpush.bf16.msra.mxu0 %v3703
          %3721 = vmatpush.bf16.msra.mxu0 %v3702
          %3722 = vmatpush.bf16.msra.mxu0 %v3701
          %3723 = vmatpush.bf16.msra.mxu0 %v3700
          %3724 = vmatmul.bf16.gmra.mxu0 %v3647
          %v3725 = vpop.f32.mrf.mxu0
          %v3726 = vadd.f32 %v3666, %v3725
          %v3727 = vpop.f32.mrf.mxu0
          %3728 = vdwg.mxu0
          %3729 = vst [vmem:[%s403] sm:$0xff] %v3726
        $region76: #{tpu_custom_call.1} parent=47 // pred_fallthru
          _
        %s3730 = sand.u32 %s209, 1
        %s3731 = scalar_lea.sflag [#allocation6], %s3730
        %s3732 = sand.u32 %s209, 1
        %s3733 = smul.addr %s3732, 8
        %s3734 = scalar_lea.vmem [#allocation13], %s3733
        // Predicated region
        $region77: #{tpu_custom_call.1} parent=47 // pred_check
          %p3735 = pneg %p219
        $region78: #{tpu_custom_call.1} parent=47 // pred_check_branch
          %3737 = sbr.rel (%p3735) target = $region80
        $region79: #{tpu_custom_call.1} parent=47 // pred_region
          %3739 = vsyncadd %s3731, 0
          %s3740 = smul.addr %s32, 8
          %s3741 = scalar_lea.hbm %s7, %s3740
          %s3743 = sshll.u32 %s3734, 4
          %s3744 = int_to_ptr.vmem [resolvable:$true] %s3743
          %s3745 = sshll.u32 %s3741, 4
          %s3746 = int_to_ptr.hbm [resolvable:$true] %s3745
          %3748 = dma.vmem_to_hbm [thread:$0]  %s3744, 128, %s3746, %s3731
        $region80: #{tpu_custom_call.1} parent=47 // pred_fallthru
          _
      $region48: #{tpu_custom_call.1} parent=5 // pred_fallthru
        _
      %p3749 = scmp.le.s32.totalorder 2, %s23
      // Predicated region
      $region81: #{tpu_custom_call.1} parent=5 // pred_check
        %p3750 = pneg %p3749
      $region82: #{tpu_custom_call.1} parent=5 // pred_check_branch
        %3752 = sbr.rel (%p3750) target = $region84
      $region83: #{tpu_custom_call.1} parent=5 // pred_region
        %s3753 = ssub.s32 %s23, 2
        // Predicated region
        $region85: #{tpu_custom_call.1} parent=83 // pred_check
          %p3754 = pneg %p225
        $region86: #{tpu_custom_call.1} parent=83 // pred_check_branch
          %3756 = sbr.rel (%p3754) target = $region88
        $region87: #{tpu_custom_call.1} parent=83 // pred_region
          %s3757 = sand.u32 %s210, 1
          %s3758 = scalar_lea.sflag [#allocation6], %s3757
          %s3759 = sand.u32 %s210, 1
          %s3760 = smul.addr %s3759, 8
          %s3761 = scalar_lea.vmem [#allocation13], %s3760
          %3763 = dma.done %s3758, 128
        $region88: #{tpu_custom_call.1} parent=83 // pred_fallthru
          _
      $region84: #{tpu_custom_call.1} parent=5 // pred_fallthru
        _
    $region6: #{tpu_custom_call.1} parent=1 // loop_footer
      %s27 = sadd.s32 1, %s23
    $region7: #{tpu_custom_call.1} parent=1 // loop_footer_branch
      %22 = sbr.rel target = $region3
    $region8: #{tpu_custom_call.1} parent=1 // loop_exit
      _
    %3764 = vsyncpa [#allocation5], 1
    %s3765 = scalar_lea.sflag [#allocation5], 1
    %3766 = vsyncpa %s3765, 1
    %3767 = vsyncpa [#allocation8], 1
    %s3768 = scalar_lea.sflag [#allocation8], 1
    %3769 = vsyncpa %s3768, 1
    %3770 = vsyncpa [#allocation11], 1
    %3771 = vsyncpa [#allocation6], 1
    %s3772 = scalar_lea.sflag [#allocation6], 1
    %3773 = vsyncpa %s3772, 1

</llo_original>
